<compile_context>
chip_gen: v7x
topology: tpu7x:2x2x1
jax: 0.10.0
libtpu: 0.0.40
codegen_flags: <defaults>
</compile_context>

<pallas_src>
import functools

import jax
import jax.numpy as jnp
import numpy as np
from jax.experimental import pallas as pl
from jax.experimental.pallas import tpu as pltpu


def _resnet_block_kernel(x_ref, t1_ref, s1_ref, b1_ref, t2_ref, s2_ref, b2_ref,
                         o_ref, *, Bt, H, WC):
    """Fused ResNet basic block for a tile of Bt images (lane-dense layout).

    x_ref  : (Bt, H, WC)      input tile, WC = W*C (lane-dense, multiple of 128)
    t?_ref : (3, WC, WC)      per-ky block-Toeplitz conv weights, bf16
    s?_ref : (1, WC)          folded BN scale, tiled over W
    b?_ref : (1, WC)          folded BN shift, tiled over W
    o_ref  : (Bt, H, WC)      output tile
    """
    M = Bt * H
    x = x_ref[...]                                        # (Bt, H, WC) f32

    zero_row = jnp.zeros((Bt, 1, WC), jnp.bfloat16)

    def conv3x3(inp, t_ref):
        # inp: (Bt, H, WC) any float dtype -> (M, WC) f32 pre-BN conv output.
        # H-border zero padding is done in-register; W-border padding and the
        # kx taps live inside the block-Toeplitz matrices t_ref[ky].
        inp_b = inp.astype(jnp.bfloat16)
        padded = jnp.concatenate([zero_row, inp_b, zero_row], axis=1)  # (Bt,H+2,WC)
        acc = None
        for ky in range(3):                               # static unroll
            a = padded[:, ky:ky + H, :].reshape(M, WC)    # rows h + ky - 1
            d = jnp.dot(a, t_ref[ky], preferred_element_type=jnp.float32)
            acc = d if acc is None else acc + d
        return acc                                        # (M, WC) f32

    # ---- conv1 -> BN1 (folded) -> ReLU ----
    y1 = jnp.maximum(conv3x3(x, t1_ref) * s1_ref[...] + b1_ref[...], 0.0)

    # ---- conv2 -> BN2 (folded) ----
    y2 = conv3x3(y1.reshape(Bt, H, WC), t2_ref) * s2_ref[...] + b2_ref[...]

    # ---- identity residual + ReLU ----
    out = jnp.maximum(y2 + x.reshape(M, WC), 0.0)
    o_ref[...] = out.reshape(Bt, H, WC).astype(o_ref.dtype)


def _conv_toeplitz(w, W, C, dtype=jnp.bfloat16):
    """HWIO (3,3,C,C) weights -> (3, W*C, W*C) per-ky block-Toeplitz matrices.

    T[ky, w_in*C + ci, w_out*C + co] = w[ky, kx, ci, co] where
    kx = w_in - w_out + 1 in {0,1,2} and 0 <= w_in < W (zero padding along W).
    """
    mats = []
    for ky in range(3):
        t = jnp.zeros((W * C, W * C), jnp.float32)
        for kx in range(3):
            s = np.zeros((W, W), np.float32)
            for wo in range(W):
                wi = wo + kx - 1
                if 0 <= wi < W:
                    s[wi, wo] = 1.0
            t = t + jnp.kron(jnp.asarray(s), w[ky, kx].astype(jnp.float32))
        mats.append(t)
    return jnp.stack(mats).astype(dtype)


def resnet_block(x, w1, gamma1, beta1, mean1, var1,
                 w2, gamma2, beta2, mean2, var2, eps=1e-5, batch_tile=None):
    """x: (N, H, W, C) float32.  Weights: (3, 3, C, C) HWIO.  BN params: (C,)."""
    N, H, W, C = x.shape
    assert w1.shape == (3, 3, C, C) and w2.shape == (3, 3, C, C)
    WC = W * C
    assert WC % 128 == 0, "W*C must be a multiple of 128 for lane-dense blocks"

    # Batch tile: amortize per-grid-step overhead but keep >= 2 grid steps so
    # both v7x TensorCores get work on the parallel batch axis.
    if batch_tile is None:
        batch_tile = 1
        for cand in (8, 4, 2):
            if N % cand == 0 and N // cand >= 2:
                batch_tile = cand
                break
    Bt = batch_tile
    assert N % Bt == 0 and (N // Bt) >= 1

    # Fold BatchNorm (inference mode) into per-channel scale/shift, then tile
    # over W so it broadcasts over the lane-dense (.., W*C) activations.
    s1 = (gamma1 / jnp.sqrt(var1 + eps)).astype(jnp.float32)
    b1 = (beta1 - mean1 * s1).astype(jnp.float32)
    s2 = (gamma2 / jnp.sqrt(var2 + eps)).astype(jnp.float32)
    b2 = (beta2 - mean2 * s2).astype(jnp.float32)
    s1t = jnp.tile(s1, W).reshape(1, WC)
    b1t = jnp.tile(b1, W).reshape(1, WC)
    s2t = jnp.tile(s2, W).reshape(1, WC)
    b2t = jnp.tile(b2, W).reshape(1, WC)

    # Block-Toeplitz conv weights in bf16 (f32 accumulation happens on the MXU).
    t1 = _conv_toeplitz(w1, W, C)
    t2 = _conv_toeplitz(w2, W, C)

    # Lane-dense view of the activations: (N, H, W*C).
    x2 = x.reshape(N, H, WC)

    kernel = functools.partial(_resnet_block_kernel, Bt=Bt, H=H, WC=WC)

    out2 = pl.pallas_call(
        kernel,
        out_shape=jax.ShapeDtypeStruct((N, H, WC), x.dtype),
        grid_spec=pltpu.PrefetchScalarGridSpec(
            num_scalar_prefetch=0,
            grid=(N // Bt,),
            in_specs=[
                pl.BlockSpec((Bt, H, WC), lambda n: (n, 0, 0)),
                pl.BlockSpec((3, WC, WC), lambda n: (0, 0, 0)),
                pl.BlockSpec((1, WC), lambda n: (0, 0)),
                pl.BlockSpec((1, WC), lambda n: (0, 0)),
                pl.BlockSpec((3, WC, WC), lambda n: (0, 0, 0)),
                pl.BlockSpec((1, WC), lambda n: (0, 0)),
                pl.BlockSpec((1, WC), lambda n: (0, 0)),
            ],
            out_specs=pl.BlockSpec((Bt, H, WC), lambda n: (n, 0, 0)),
        ),
        compiler_params=pltpu.CompilerParams(
            dimension_semantics=("parallel",),
            vmem_limit_bytes=32 * 1024 * 1024,
        ),
    )(x2, t1, s1t, b1t, t2, s2t, b2t)

    return out2.reshape(N, H, W, C)


def _ref_forward(x, w1, gamma1, beta1, mean1, var1,
                 w2, gamma2, beta2, mean2, var2, eps=1e-5):
    """Plain-JAX f32 reference (same semantics as the kernel)."""
    def conv(h, w):
        return jax.lax.conv_general_dilated(
            h, w, window_strides=(1, 1), padding=((1, 1), (1, 1)),
            dimension_numbers=("NHWC", "HWIO", "NHWC"),
            precision=jax.lax.Precision.HIGHEST)

    s1 = gamma1 / jnp.sqrt(var1 + eps)
    b1 = beta1 - mean1 * s1
    s2 = gamma2 / jnp.sqrt(var2 + eps)
    b2 = beta2 - mean2 * s2

    y = jnp.maximum(conv(x, w1) * s1 + b1, 0.0)
    y = conv(y, w2) * s2 + b2
    return jnp.maximum(y + x, 0.0)


if __name__ == "__main__":
    # in_channels == out_channels == C (stride 1, identity residual)
    N, H, W, C = 4, 16, 16, 32

    key = jax.random.PRNGKey(0)
    ks = jax.random.split(key, 11)

    x = jax.random.normal(ks[0], (N, H, W, C), jnp.float32)

    w1 = 0.1 * jax.random.normal(ks[1], (3, 3, C, C), jnp.float32)
    w2 = 0.1 * jax.random.normal(ks[2], (3, 3, C, C), jnp.float32)

    gamma1 = 1.0 + 0.1 * jax.random.normal(ks[3], (C,), jnp.float32)
    beta1 = 0.1 * jax.random.normal(ks[4], (C,), jnp.float32)
    mean1 = 0.1 * jax.random.normal(ks[5], (C,), jnp.float32)
    var1 = jnp.abs(jax.random.normal(ks[6], (C,), jnp.float32)) + 0.5

    gamma2 = 1.0 + 0.1 * jax.random.normal(ks[7], (C,), jnp.float32)
    beta2 = 0.1 * jax.random.normal(ks[8], (C,), jnp.float32)
    mean2 = 0.1 * jax.random.normal(ks[9], (C,), jnp.float32)
    var2 = jnp.abs(jax.random.normal(ks[10], (C,), jnp.float32)) + 0.5

    out = resnet_block(x, w1, gamma1, beta1, mean1, var1,
                       w2, gamma2, beta2, mean2, var2)
    out = jax.block_until_ready(out)

    ref = _ref_forward(x, w1, gamma1, beta1, mean1, var1,
                       w2, gamma2, beta2, mean2, var2)
    ref = jax.block_until_ready(ref)

    assert out.shape == (N, H, W, C)
    # Tolerance relaxed vs the pure-f32 version: MXU operands are bf16 (with
    # f32 accumulation), so two stacked 3x3 convs carry ~1e-2 abs error.
    if not np.allclose(np.asarray(out), np.asarray(ref), atol=1e-1, rtol=1e-2):
        err = np.max(np.abs(np.asarray(out) - np.asarray(ref)))
        raise AssertionError(f"Pallas kernel output mismatch vs JAX reference "
                             f"(max abs err = {err})")

    print("KERNEL_OK")
</pallas_src>

<mosaic_0001>
module attributes {stable_mosaic.version = 11 : i64} {
  func.func @_resnet_block_kernel(%arg0: i32, %arg1: memref<2x16x512xf32, #tpu.memory_space<vmem>>, %arg2: memref<3x512x512xbf16, #tpu.memory_space<vmem>>, %arg3: memref<1x512xf32, #tpu.memory_space<vmem>>, %arg4: memref<1x512xf32, #tpu.memory_space<vmem>>, %arg5: memref<3x512x512xbf16, #tpu.memory_space<vmem>>, %arg6: memref<1x512xf32, #tpu.memory_space<vmem>>, %arg7: memref<1x512xf32, #tpu.memory_space<vmem>>, %arg8: memref<2x16x512xf32, #tpu.memory_space<vmem>>) attributes {dimension_semantics = [#tpu.dimension_semantics<parallel>], iteration_bounds = array<i64: 2>, scalar_prefetch = 0 : i64, scratch_operands = 0 : i64, tpu.core_type = #tpu.core_type<tc>, window_params = [{transform_indices = @transform_0, window_bounds = array<i64: 2, 16, 512>}, {pipeline_mode = #tpu.pipeline_mode<synchronous>, transform_indices = @transform_1, window_bounds = array<i64: 3, 512, 512>}, {pipeline_mode = #tpu.pipeline_mode<synchronous>, transform_indices = @transform_2, window_bounds = array<i64: 1, 512>}, {pipeline_mode = #tpu.pipeline_mode<synchronous>, transform_indices = @transform_3, window_bounds = array<i64: 1, 512>}, {pipeline_mode = #tpu.pipeline_mode<synchronous>, transform_indices = @transform_4, window_bounds = array<i64: 3, 512, 512>}, {pipeline_mode = #tpu.pipeline_mode<synchronous>, transform_indices = @transform_5, window_bounds = array<i64: 1, 512>}, {pipeline_mode = #tpu.pipeline_mode<synchronous>, transform_indices = @transform_6, window_bounds = array<i64: 1, 512>}, {transform_indices = @transform_7, window_bounds = array<i64: 2, 16, 512>}]} {
    %c0 = arith.constant 0 : index
    %c0_0 = arith.constant 0 : index
    %c0_1 = arith.constant 0 : index
    %0 = vector.load %arg1[%c0, %c0_0, %c0_1] : memref<2x16x512xf32, #tpu.memory_space<vmem>>, vector<2x16x512xf32>
    %cst = arith.constant 0.000000e+00 : bf16
    %1 = vector.broadcast %cst : bf16 to vector<2x1x512xbf16>
    %2 = arith.truncf %0 : vector<2x16x512xf32> to vector<2x16x512xbf16>
    %3 = tpu.concatenate %1, %2, %1 in 1 : vector<2x1x512xbf16>, vector<2x16x512xbf16>, vector<2x1x512xbf16> -> vector<2x18x512xbf16>
    %4 = vector.extract_strided_slice %3 {offsets = [0, 0, 0], sizes = [2, 16, 512], strides = [1, 1, 1]} : vector<2x18x512xbf16> to vector<2x16x512xbf16>
    %5 = vector.shape_cast %4 : vector<2x16x512xbf16> to vector<32x512xbf16>
    %c0_2 = arith.constant 0 : index
    %c0_3 = arith.constant 0 : index
    %c0_4 = arith.constant 0 : index
    %6 = vector.load %arg2[%c0_2, %c0_3, %c0_4] : memref<3x512x512xbf16, #tpu.memory_space<vmem>>, vector<1x512x512xbf16>
    %7 = vector.shape_cast %6 : vector<1x512x512xbf16> to vector<512x512xbf16>
    %cst_5 = arith.constant dense<0.000000e+00> : vector<32x512xf32>
    %8 = tpu.matmul %5, %7, %cst_5 {dimension_numbers = #tpu.dot_dimension_numbers<[1], [0], [0], [1], [0, 0, 1, 1], [], []>} : vector<32x512xbf16>, vector<512x512xbf16>, vector<32x512xf32> -> vector<32x512xf32>
    %9 = vector.extract_strided_slice %3 {offsets = [0, 1, 0], sizes = [2, 16, 512], strides = [1, 1, 1]} : vector<2x18x512xbf16> to vector<2x16x512xbf16>
    %10 = vector.shape_cast %9 : vector<2x16x512xbf16> to vector<32x512xbf16>
    %c1 = arith.constant 1 : index
    %c0_6 = arith.constant 0 : index
    %c0_7 = arith.constant 0 : index
    %11 = vector.load %arg2[%c1, %c0_6, %c0_7] : memref<3x512x512xbf16, #tpu.memory_space<vmem>>, vector<1x512x512xbf16>
    %12 = vector.shape_cast %11 : vector<1x512x512xbf16> to vector<512x512xbf16>
    %cst_8 = arith.constant dense<0.000000e+00> : vector<32x512xf32>
    %13 = tpu.matmul %10, %12, %cst_8 {dimension_numbers = #tpu.dot_dimension_numbers<[1], [0], [0], [1], [0, 0, 1, 1], [], []>} : vector<32x512xbf16>, vector<512x512xbf16>, vector<32x512xf32> -> vector<32x512xf32>
    %14 = arith.addf %8, %13 : vector<32x512xf32>
    %15 = vector.extract_strided_slice %3 {offsets = [0, 2, 0], sizes = [2, 16, 512], strides = [1, 1, 1]} : vector<2x18x512xbf16> to vector<2x16x512xbf16>
    %16 = vector.shape_cast %15 : vector<2x16x512xbf16> to vector<32x512xbf16>
    %c2 = arith.constant 2 : index
    %c0_9 = arith.constant 0 : index
    %c0_10 = arith.constant 0 : index
    %17 = vector.load %arg2[%c2, %c0_9, %c0_10] : memref<3x512x512xbf16, #tpu.memory_space<vmem>>, vector<1x512x512xbf16>
    %18 = vector.shape_cast %17 : vector<1x512x512xbf16> to vector<512x512xbf16>
    %cst_11 = arith.constant dense<0.000000e+00> : vector<32x512xf32>
    %19 = tpu.matmul %16, %18, %cst_11 {dimension_numbers = #tpu.dot_dimension_numbers<[1], [0], [0], [1], [0, 0, 1, 1], [], []>} : vector<32x512xbf16>, vector<512x512xbf16>, vector<32x512xf32> -> vector<32x512xf32>
    %20 = arith.addf %14, %19 : vector<32x512xf32>
    %c0_12 = arith.constant 0 : index
    %c0_13 = arith.constant 0 : index
    %21 = vector.load %arg3[%c0_12, %c0_13] : memref<1x512xf32, #tpu.memory_space<vmem>>, vector<1x512xf32>
    %22 = vector.broadcast %21 : vector<1x512xf32> to vector<32x512xf32>
    %23 = arith.mulf %20, %22 : vector<32x512xf32>
    %c0_14 = arith.constant 0 : index
    %c0_15 = arith.constant 0 : index
    %24 = vector.load %arg4[%c0_14, %c0_15] : memref<1x512xf32, #tpu.memory_space<vmem>>, vector<1x512xf32>
    %25 = vector.broadcast %24 : vector<1x512xf32> to vector<32x512xf32>
    %26 = arith.addf %23, %25 : vector<32x512xf32>
    %cst_16 = arith.constant 0.000000e+00 : f32
    %27 = vector.broadcast %cst_16 : f32 to vector<32x512xf32>
    %28 = arith.maximumf %26, %27 : vector<32x512xf32>
    %29 = vector.shape_cast %28 : vector<32x512xf32> to vector<2x16x512xf32>
    %30 = arith.truncf %29 : vector<2x16x512xf32> to vector<2x16x512xbf16>
    %31 = tpu.concatenate %1, %30, %1 in 1 : vector<2x1x512xbf16>, vector<2x16x512xbf16>, vector<2x1x512xbf16> -> vector<2x18x512xbf16>
    %32 = vector.extract_strided_slice %31 {offsets = [0, 0, 0], sizes = [2, 16, 512], strides = [1, 1, 1]} : vector<2x18x512xbf16> to vector<2x16x512xbf16>
    %33 = vector.shape_cast %32 : vector<2x16x512xbf16> to vector<32x512xbf16>
    %c0_17 = arith.constant 0 : index
    %c0_18 = arith.constant 0 : index
    %c0_19 = arith.constant 0 : index
    %34 = vector.load %arg5[%c0_17, %c0_18, %c0_19] : memref<3x512x512xbf16, #tpu.memory_space<vmem>>, vector<1x512x512xbf16>
    %35 = vector.shape_cast %34 : vector<1x512x512xbf16> to vector<512x512xbf16>
    %cst_20 = arith.constant dense<0.000000e+00> : vector<32x512xf32>
    %36 = tpu.matmul %33, %35, %cst_20 {dimension_numbers = #tpu.dot_dimension_numbers<[1], [0], [0], [1], [0, 0, 1, 1], [], []>} : vector<32x512xbf16>, vector<512x512xbf16>, vector<32x512xf32> -> vector<32x512xf32>
    %37 = vector.extract_strided_slice %31 {offsets = [0, 1, 0], sizes = [2, 16, 512], strides = [1, 1, 1]} : vector<2x18x512xbf16> to vector<2x16x512xbf16>
    %38 = vector.shape_cast %37 : vector<2x16x512xbf16> to vector<32x512xbf16>
    %c1_21 = arith.constant 1 : index
    %c0_22 = arith.constant 0 : index
    %c0_23 = arith.constant 0 : index
    %39 = vector.load %arg5[%c1_21, %c0_22, %c0_23] : memref<3x512x512xbf16, #tpu.memory_space<vmem>>, vector<1x512x512xbf16>
    %40 = vector.shape_cast %39 : vector<1x512x512xbf16> to vector<512x512xbf16>
    %cst_24 = arith.constant dense<0.000000e+00> : vector<32x512xf32>
    %41 = tpu.matmul %38, %40, %cst_24 {dimension_numbers = #tpu.dot_dimension_numbers<[1], [0], [0], [1], [0, 0, 1, 1], [], []>} : vector<32x512xbf16>, vector<512x512xbf16>, vector<32x512xf32> -> vector<32x512xf32>
    %42 = arith.addf %36, %41 : vector<32x512xf32>
    %43 = vector.extract_strided_slice %31 {offsets = [0, 2, 0], sizes = [2, 16, 512], strides = [1, 1, 1]} : vector<2x18x512xbf16> to vector<2x16x512xbf16>
    %44 = vector.shape_cast %43 : vector<2x16x512xbf16> to vector<32x512xbf16>
    %c2_25 = arith.constant 2 : index
    %c0_26 = arith.constant 0 : index
    %c0_27 = arith.constant 0 : index
    %45 = vector.load %arg5[%c2_25, %c0_26, %c0_27] : memref<3x512x512xbf16, #tpu.memory_space<vmem>>, vector<1x512x512xbf16>
    %46 = vector.shape_cast %45 : vector<1x512x512xbf16> to vector<512x512xbf16>
    %cst_28 = arith.constant dense<0.000000e+00> : vector<32x512xf32>
    %47 = tpu.matmul %44, %46, %cst_28 {dimension_numbers = #tpu.dot_dimension_numbers<[1], [0], [0], [1], [0, 0, 1, 1], [], []>} : vector<32x512xbf16>, vector<512x512xbf16>, vector<32x512xf32> -> vector<32x512xf32>
    %48 = arith.addf %42, %47 : vector<32x512xf32>
    %c0_29 = arith.constant 0 : index
    %c0_30 = arith.constant 0 : index
    %49 = vector.load %arg6[%c0_29, %c0_30] : memref<1x512xf32, #tpu.memory_space<vmem>>, vector<1x512xf32>
    %50 = vector.broadcast %49 : vector<1x512xf32> to vector<32x512xf32>
    %51 = arith.mulf %48, %50 : vector<32x512xf32>
    %c0_31 = arith.constant 0 : index
    %c0_32 = arith.constant 0 : index
    %52 = vector.load %arg7[%c0_31, %c0_32] : memref<1x512xf32, #tpu.memory_space<vmem>>, vector<1x512xf32>
    %53 = vector.broadcast %52 : vector<1x512xf32> to vector<32x512xf32>
    %54 = arith.addf %51, %53 : vector<32x512xf32>
    %55 = vector.shape_cast %0 : vector<2x16x512xf32> to vector<32x512xf32>
    %56 = arith.addf %54, %55 : vector<32x512xf32>
    %cst_33 = arith.constant 0.000000e+00 : f32
    %57 = vector.broadcast %cst_33 : f32 to vector<32x512xf32>
    %58 = arith.maximumf %56, %57 : vector<32x512xf32>
    %59 = vector.shape_cast %58 : vector<32x512xf32> to vector<2x16x512xf32>
    %c0_34 = arith.constant 0 : index
    %c0_35 = arith.constant 0 : index
    %c0_36 = arith.constant 0 : index
    %60 = vector.load %arg8[%c0_34, %c0_35, %c0_36] : memref<2x16x512xf32, #tpu.memory_space<vmem>>, vector<2x16x512xf32>
    tpu.vector_store %arg8[%c0_34, %c0_35, %c0_36], %59 {strides = array<i32>} : memref<2x16x512xf32, #tpu.memory_space<vmem>>, vector<2x16x512xf32>,
    return
  }
  func.func @transform_0(%arg0: i32) -> (i32, i32, i32) {
    %c0_i32 = arith.constant 0 : i32
    %c0_i32_0 = arith.constant 0 : i32
    %c0_i32_1 = arith.constant 0 : i32
    return %arg0, %c0_i32, %c0_i32_0 : i32, i32, i32
  }
  func.func @transform_1(%arg0: i32) -> (i32, i32, i32) {
    %c0_i32 = arith.constant 0 : i32
    %c0_i32_0 = arith.constant 0 : i32
    %c0_i32_1 = arith.constant 0 : i32
    %c0_i32_2 = arith.constant 0 : i32
    return %c0_i32, %c0_i32_0, %c0_i32_1 : i32, i32, i32
  }
  func.func @transform_2(%arg0: i32) -> (i32, i32) {
    %c0_i32 = arith.constant 0 : i32
    %c0_i32_0 = arith.constant 0 : i32
    %c0_i32_1 = arith.constant 0 : i32
    return %c0_i32, %c0_i32_0 : i32, i32
  }
  func.func @transform_3(%arg0: i32) -> (i32, i32) {
    %c0_i32 = arith.constant 0 : i32
    %c0_i32_0 = arith.constant 0 : i32
    %c0_i32_1 = arith.constant 0 : i32
    return %c0_i32, %c0_i32_0 : i32, i32
  }
  func.func @transform_4(%arg0: i32) -> (i32, i32, i32) {
    %c0_i32 = arith.constant 0 : i32
    %c0_i32_0 = arith.constant 0 : i32
    %c0_i32_1 = arith.constant 0 : i32
    %c0_i32_2 = arith.constant 0 : i32
    return %c0_i32, %c0_i32_0, %c0_i32_1 : i32, i32, i32
  }
  func.func @transform_5(%arg0: i32) -> (i32, i32) {
    %c0_i32 = arith.constant 0 : i32
    %c0_i32_0 = arith.constant 0 : i32
    %c0_i32_1 = arith.constant 0 : i32
    return %c0_i32, %c0_i32_0 : i32, i32
  }
  func.func @transform_6(%arg0: i32) -> (i32, i32) {
    %c0_i32 = arith.constant 0 : i32
    %c0_i32_0 = arith.constant 0 : i32
    %c0_i32_1 = arith.constant 0 : i32
    return %c0_i32, %c0_i32_0 : i32, i32
  }
  func.func @transform_7(%arg0: i32) -> (i32, i32, i32) {
    %c0_i32 = arith.constant 0 : i32
    %c0_i32_0 = arith.constant 0 : i32
    %c0_i32_1 = arith.constant 0 : i32
    return %arg0, %c0_i32, %c0_i32_0 : i32, i32, i32
  }
}

</mosaic_0001>

<llo_original>
// kernel: tpu_custom_call.1
$region0: #{tpu_custom_call.1}
  #allocation0 [shape = 'u32[]', space=smem, size = 0x4, offset = 0x4, fixed_abs, tag = 'smem constant byte address 0x4 - core index']
  #allocation1 [shape = 'u32[144,128]{1,0:T(1,128)}', space=vmem, size = 0x12000, scoped, tag = 'internal scratch']
  %s0 = inlined_call_operand.hbm [shape: f32[4,16,512], index: 0, kind: input, shape index: {}]
  %s1 = inlined_call_operand.hbm [shape: bf16[3,512,512], index: 1, kind: input, shape index: {}]
  %s2 = inlined_call_operand.hbm [shape: f32[1,512], index: 2, kind: input, shape index: {}]
  %s3 = inlined_call_operand.hbm [shape: f32[1,512], index: 3, kind: input, shape index: {}]
  %s4 = inlined_call_operand.hbm [shape: bf16[3,512,512], index: 4, kind: input, shape index: {}]
  %s5 = inlined_call_operand.hbm [shape: f32[1,512], index: 5, kind: input, shape index: {}]
  %s6 = inlined_call_operand.hbm [shape: f32[1,512], index: 6, kind: input, shape index: {}]
  %s7 = inlined_call_operand.hbm [shape: f32[4,16,512], index: 7, kind: output, shape index: {}]
  %s8 = sld [smem:[#allocation0]]
  $region89: #{tpu_custom_call.1} parent=0
    _
  %s10 = ssub.s32 1, %s8
  %s11 = scalar_select 0, %s10, %s8
  $region1: #{tpu_custom_call.1} parent=0
    #allocation2 [shape = 'u8[131072]{0}', space=vmem, size = 0x20000, scoped, tag = 'input window, operand 0']
    #allocation3 [shape = 's32[2]{0}', space=sflag, size = 0x8, scoped, tag = 'scoped memory for tpu_custom_call.1']
    #allocation4 [shape = 's32[2]{0}', space=sflag, size = 0x8, scoped, tag = 'scoped memory for tpu_custom_call.1']
    #allocation5 [shape = 'u8[1572864]{0}', space=vmem, size = 0x180000, scoped, tag = 'input window, operand 1, single buffered']
    #allocation6 [shape = 's32[1]{0}', space=sflag, size = 0x4, scoped, tag = 'scoped memory for tpu_custom_call.1']
    #allocation7 [shape = 'u8[2048]{0}', space=vmem, size = 0x800, scoped, tag = 'input window, operand 2, single buffered']
    #allocation8 [shape = 'u8[2048]{0}', space=vmem, size = 0x800, scoped, tag = 'input window, operand 3, single buffered']
    #allocation9 [shape = 's32[1]{0}', space=sflag, size = 0x4, scoped, tag = 'scoped memory for tpu_custom_call.1']
    #allocation10 [shape = 'u8[1572864]{0}', space=vmem, size = 0x180000, scoped, tag = 'input window, operand 4, single buffered']
    #allocation11 [shape = 'u8[2048]{0}', space=vmem, size = 0x800, scoped, tag = 'input window, operand 5, single buffered']
    #allocation12 [shape = 's32[1]{0}', space=sflag, size = 0x4, scoped, tag = 'scoped memory for tpu_custom_call.1']
    #allocation13 [shape = 'u8[2048]{0}', space=vmem, size = 0x800, scoped, tag = 'input window, operand 6, single buffered']
    #allocation14 [shape = 'u8[131072]{0}', space=vmem, size = 0x20000, scoped, tag = 'output window, operand 0']
    %12 = vsyncpa [#allocation3], 0
    %s13 = scalar_lea.sflag [#allocation3], 1
    %14 = vsyncpa %s13, 0
    %15 = vsyncpa [#allocation6], 0
    %16 = vsyncpa [#allocation9], 0
    %17 = vsyncpa [#allocation12], 0
    %18 = vsyncpa [#allocation4], 0
    %s19 = scalar_lea.sflag [#allocation4], 1
    %20 = vsyncpa %s19, 0
    loop: start=0, step=1, limit=4
    $region2: #{tpu_custom_call.1} parent=1 // loop_pre_header
      _
    $region3: #{tpu_custom_call.1} parent=1 // loop_header
      %s22 = sphi 0, %s26
      %p23 = scmp.ge.s32.totalorder %s22, 4
      %s32 = sphi 0, %s34
      %s35 = sphi 0, %s32
      %s36 = sphi 0, %s35
      %s52 = sphi 0, %s36
      %s56 = sphi 0, %s56
      %s58 = sphi 0, %s56
      %s59 = sphi 0, %s58
      %s73 = sphi 0, %s59
      %s77 = sphi 0, %s77
      %s79 = sphi 0, %s77
      %s80 = sphi 0, %s79
      %s94 = sphi 0, %s80
      %s98 = sphi 0, %s98
      %s100 = sphi 0, %s98
      %s101 = sphi 0, %s100
      %s115 = sphi 0, %s101
      %s119 = sphi 0, %s119
      %s121 = sphi 0, %s119
      %s122 = sphi 0, %s121
      %s136 = sphi 0, %s122
      %s140 = sphi 0, %s140
      %s142 = sphi 0, %s140
      %s143 = sphi 0, %s142
      %s157 = sphi 0, %s143
      %s161 = sphi 0, %s161
      %s163 = sphi 0, %s161
      %s164 = sphi 0, %s163
      %s178 = sphi 0, %s164
      %s184 = sphi 0, %s186
      %s187 = sphi 0, %s184
      %s188 = sphi 0, %s187
      %s204 = sphi 0, %s188
    $region4: #{tpu_custom_call.1} parent=1 // loop_header_branch
      %25 = sbr.rel (%p23) target = $region8
    $region5: #{tpu_custom_call.1} parent=1 // loop_body
      %s27 = ssub.s32 %s22, 1
      %s28 = ssub.s32 %s22, 2
      %s29 = sadd.s32 %s22, 1
      %s30 = ssub.s32 %s22, %s29
      %p31 = scmp.eq.s32.totalorder %s30, 0
      %s33 = sadd.s32 %s32, 1
      %s34 = scalar_select %p31, %s32, %s33
      %p37 = pneg %p31
      %p38 = scmp.eq.s32.totalorder %s22, 1
      %p39 = por %p37, %p38
      %p40 = scmp.ne.s32.totalorder %s32, %s35
      %p41 = scmp.eq.s32.totalorder %s22, 0
      %p42 = por %p40, %p41
      %p43 = scmp.ne.s32.totalorder %s32, %s35
      %p44 = scmp.eq.s32.totalorder %s27, 1
      %p45 = por %p43, %p44
      %p46 = scmp.ne.s32.totalorder %s35, %s36
      %p47 = scmp.eq.s32.totalorder %s27, 0
      %p48 = por %p46, %p47
      %p49 = scmp.ne.s32.totalorder %s35, %s36
      %p50 = scmp.eq.s32.totalorder %s28, 1
      %p51 = por %p49, %p50
      %p53 = scmp.ne.s32.totalorder %s36, %s52
      %p54 = scmp.eq.s32.totalorder %s28, 0
      %p55 = por %p53, %p54
      %s57 = sadd.s32 %s56, 1
      %p60 = scmp.eq.s32.totalorder %s22, 1
      %p61 = scmp.ne.s32.totalorder %s56, %s58
      %p62 = scmp.eq.s32.totalorder %s22, 0
      %p63 = por %p61, %p62
      %p64 = scmp.ne.s32.totalorder %s56, %s58
      %p65 = scmp.eq.s32.totalorder %s27, 1
      %p66 = por %p64, %p65
      %p67 = scmp.ne.s32.totalorder %s58, %s59
      %p68 = scmp.eq.s32.totalorder %s27, 0
      %p69 = por %p67, %p68
      %p70 = scmp.ne.s32.totalorder %s58, %s59
      %p71 = scmp.eq.s32.totalorder %s28, 1
      %p72 = por %p70, %p71
      %p74 = scmp.ne.s32.totalorder %s59, %s73
      %p75 = scmp.eq.s32.totalorder %s28, 0
      %p76 = por %p74, %p75
      %s78 = sadd.s32 %s77, 1
      %p81 = scmp.eq.s32.totalorder %s22, 1
      %p82 = scmp.ne.s32.totalorder %s77, %s79
      %p83 = scmp.eq.s32.totalorder %s22, 0
      %p84 = por %p82, %p83
      %p85 = scmp.ne.s32.totalorder %s77, %s79
      %p86 = scmp.eq.s32.totalorder %s27, 1
      %p87 = por %p85, %p86
      %p88 = scmp.ne.s32.totalorder %s79, %s80
      %p89 = scmp.eq.s32.totalorder %s27, 0
      %p90 = por %p88, %p89
      %p91 = scmp.ne.s32.totalorder %s79, %s80
      %p92 = scmp.eq.s32.totalorder %s28, 1
      %p93 = por %p91, %p92
      %p95 = scmp.ne.s32.totalorder %s80, %s94
      %p96 = scmp.eq.s32.totalorder %s28, 0
      %p97 = por %p95, %p96
      %s99 = sadd.s32 %s98, 1
      %p102 = scmp.eq.s32.totalorder %s22, 1
      %p103 = scmp.ne.s32.totalorder %s98, %s100
      %p104 = scmp.eq.s32.totalorder %s22, 0
      %p105 = por %p103, %p104
      %p106 = scmp.ne.s32.totalorder %s98, %s100
      %p107 = scmp.eq.s32.totalorder %s27, 1
      %p108 = por %p106, %p107
      %p109 = scmp.ne.s32.totalorder %s100, %s101
      %p110 = scmp.eq.s32.totalorder %s27, 0
      %p111 = por %p109, %p110
      %p112 = scmp.ne.s32.totalorder %s100, %s101
      %p113 = scmp.eq.s32.totalorder %s28, 1
      %p114 = por %p112, %p113
      %p116 = scmp.ne.s32.totalorder %s101, %s115
      %p117 = scmp.eq.s32.totalorder %s28, 0
      %p118 = por %p116, %p117
      %s120 = sadd.s32 %s119, 1
      %p123 = scmp.eq.s32.totalorder %s22, 1
      %p124 = scmp.ne.s32.totalorder %s119, %s121
      %p125 = scmp.eq.s32.totalorder %s22, 0
      %p126 = por %p124, %p125
      %p127 = scmp.ne.s32.totalorder %s119, %s121
      %p128 = scmp.eq.s32.totalorder %s27, 1
      %p129 = por %p127, %p128
      %p130 = scmp.ne.s32.totalorder %s121, %s122
      %p131 = scmp.eq.s32.totalorder %s27, 0
      %p132 = por %p130, %p131
      %p133 = scmp.ne.s32.totalorder %s121, %s122
      %p134 = scmp.eq.s32.totalorder %s28, 1
      %p135 = por %p133, %p134
      %p137 = scmp.ne.s32.totalorder %s122, %s136
      %p138 = scmp.eq.s32.totalorder %s28, 0
      %p139 = por %p137, %p138
      %s141 = sadd.s32 %s140, 1
      %p144 = scmp.eq.s32.totalorder %s22, 1
      %p145 = scmp.ne.s32.totalorder %s140, %s142
      %p146 = scmp.eq.s32.totalorder %s22, 0
      %p147 = por %p145, %p146
      %p148 = scmp.ne.s32.totalorder %s140, %s142
      %p149 = scmp.eq.s32.totalorder %s27, 1
      %p150 = por %p148, %p149
      %p151 = scmp.ne.s32.totalorder %s142, %s143
      %p152 = scmp.eq.s32.totalorder %s27, 0
      %p153 = por %p151, %p152
      %p154 = scmp.ne.s32.totalorder %s142, %s143
      %p155 = scmp.eq.s32.totalorder %s28, 1
      %p156 = por %p154, %p155
      %p158 = scmp.ne.s32.totalorder %s143, %s157
      %p159 = scmp.eq.s32.totalorder %s28, 0
      %p160 = por %p158, %p159
      %s162 = sadd.s32 %s161, 1
      %p165 = scmp.eq.s32.totalorder %s22, 1
      %p166 = scmp.ne.s32.totalorder %s161, %s163
      %p167 = scmp.eq.s32.totalorder %s22, 0
      %p168 = por %p166, %p167
      %p169 = scmp.ne.s32.totalorder %s161, %s163
      %p170 = scmp.eq.s32.totalorder %s27, 1
      %p171 = por %p169, %p170
      %p172 = scmp.ne.s32.totalorder %s163, %s164
      %p173 = scmp.eq.s32.totalorder %s27, 0
      %p174 = por %p172, %p173
      %p175 = scmp.ne.s32.totalorder %s163, %s164
      %p176 = scmp.eq.s32.totalorder %s28, 1
      %p177 = por %p175, %p176
      %p179 = scmp.ne.s32.totalorder %s164, %s178
      %p180 = scmp.eq.s32.totalorder %s28, 0
      %p181 = por %p179, %p180
      %s182 = ssub.s32 %s22, %s29
      %p183 = scmp.eq.s32.totalorder %s182, 0
      %s185 = sadd.s32 %s184, 1
      %s186 = scalar_select %p183, %s184, %s185
      %p189 = pneg %p183
      %p190 = scmp.eq.s32.totalorder %s22, 1
      %p191 = por %p189, %p190
      %p192 = scmp.ne.s32.totalorder %s184, %s187
      %p193 = scmp.eq.s32.totalorder %s22, 0
      %p194 = por %p192, %p193
      %p195 = scmp.ne.s32.totalorder %s184, %s187
      %p196 = scmp.eq.s32.totalorder %s27, 1
      %p197 = por %p195, %p196
      %p198 = scmp.ne.s32.totalorder %s187, %s188
      %p199 = scmp.eq.s32.totalorder %s27, 0
      %p200 = por %p198, %p199
      %p201 = scmp.ne.s32.totalorder %s187, %s188
      %p202 = scmp.eq.s32.totalorder %s28, 1
      %p203 = por %p201, %p202
      %p205 = scmp.ne.s32.totalorder %s188, %s204
      %p206 = scmp.eq.s32.totalorder %s28, 0
      %p207 = por %p205, %p206
      %p208 = scmp.le.s32.totalorder 1, %s22
      %p209 = scmp.lt.s32.totalorder %s22, 3
      %p210 = pnand %p208, %p209
      %p211 = pneg %p210
      // Predicated region
      $region9: #{tpu_custom_call.1} parent=5 // pred_check
        _
      $region10: #{tpu_custom_call.1} parent=5 // pred_check_branch
        %213 = sbr.rel (%p210) target = $region12
      $region11: #{tpu_custom_call.1} parent=5 // pred_region
        %s214 = ssub.s32 %s22, 1
        // Predicated region
        $region13: #{tpu_custom_call.1} parent=11 // pred_check
          %p215 = pneg %p69
        $region14: #{tpu_custom_call.1} parent=11 // pred_check_branch
          %217 = sbr.rel (%p215) target = $region16
        $region15: #{tpu_custom_call.1} parent=11 // pred_region
          %s219 = ssub.s32 49152, 49152
          %220 = vsyncadd [#allocation6], %s219
          %s221 = sshll.u32 [#allocation5], 4
          %s222 = int_to_ptr.vmem [resolvable:$true] %s221
          %227 = dma.hbm_to_vmem [thread:$0]  %s1, 49152, %s222, [#allocation6], 256, 256, 16
        $region16: #{tpu_custom_call.1} parent=11 // pred_fallthru
          _
        // Predicated region
        $region17: #{tpu_custom_call.1} parent=11 // pred_check
          %p228 = pneg %p90
        $region18: #{tpu_custom_call.1} parent=11 // pred_check_branch
          %230 = sbr.rel (%p228) target = $region20
        $region19: #{tpu_custom_call.1} parent=11 // pred_region
          %s232 = ssub.s32 64, 64
          %233 = vsyncadd [#allocation6], %s232
          %s235 = sshll.u32 [#allocation7], 4
          %s236 = int_to_ptr.vmem [resolvable:$true] %s235
          %238 = dma.hbm_to_vmem [thread:$0]  %s2, 64, %s236, [#allocation6]
        $region20: #{tpu_custom_call.1} parent=11 // pred_fallthru
          _
        // Predicated region
        $region21: #{tpu_custom_call.1} parent=11 // pred_check
          %p239 = pneg %p111
        $region22: #{tpu_custom_call.1} parent=11 // pred_check_branch
          %241 = sbr.rel (%p239) target = $region24
        $region23: #{tpu_custom_call.1} parent=11 // pred_region
          %s243 = ssub.s32 64, 64
          %244 = vsyncadd [#allocation9], %s243
          %s246 = sshll.u32 [#allocation8], 4
          %s247 = int_to_ptr.vmem [resolvable:$true] %s246
          %249 = dma.hbm_to_vmem [thread:$0]  %s3, 64, %s247, [#allocation9]
        $region24: #{tpu_custom_call.1} parent=11 // pred_fallthru
          _
        // Predicated region
        $region25: #{tpu_custom_call.1} parent=11 // pred_check
          %p250 = pneg %p132
        $region26: #{tpu_custom_call.1} parent=11 // pred_check_branch
          %252 = sbr.rel (%p250) target = $region28
        $region27: #{tpu_custom_call.1} parent=11 // pred_region
          %s254 = ssub.s32 49152, 49152
          %255 = vsyncadd [#allocation9], %s254
          %s256 = sshll.u32 [#allocation10], 4
          %s257 = int_to_ptr.vmem [resolvable:$true] %s256
          %262 = dma.hbm_to_vmem [thread:$0]  %s4, 49152, %s257, [#allocation9], 256, 256, 16
        $region28: #{tpu_custom_call.1} parent=11 // pred_fallthru
          _
        // Predicated region
        $region29: #{tpu_custom_call.1} parent=11 // pred_check
          %p263 = pneg %p153
        $region30: #{tpu_custom_call.1} parent=11 // pred_check_branch
          %265 = sbr.rel (%p263) target = $region32
        $region31: #{tpu_custom_call.1} parent=11 // pred_region
          %s267 = ssub.s32 64, 64
          %268 = vsyncadd [#allocation12], %s267
          %s270 = sshll.u32 [#allocation11], 4
          %s271 = int_to_ptr.vmem [resolvable:$true] %s270
          %273 = dma.hbm_to_vmem [thread:$0]  %s5, 64, %s271, [#allocation12]
        $region32: #{tpu_custom_call.1} parent=11 // pred_fallthru
          _
        // Predicated region
        $region33: #{tpu_custom_call.1} parent=11 // pred_check
          %p274 = pneg %p174
        $region34: #{tpu_custom_call.1} parent=11 // pred_check_branch
          %276 = sbr.rel (%p274) target = $region36
        $region35: #{tpu_custom_call.1} parent=11 // pred_region
          %s278 = ssub.s32 64, 64
          %279 = vsyncadd [#allocation12], %s278
          %s281 = sshll.u32 [#allocation13], 4
          %s282 = int_to_ptr.vmem [resolvable:$true] %s281
          %284 = dma.hbm_to_vmem [thread:$0]  %s6, 64, %s282, [#allocation12]
        $region36: #{tpu_custom_call.1} parent=11 // pred_fallthru
          _
      $region12: #{tpu_custom_call.1} parent=5 // pred_fallthru
        _
      %p285 = scmp.lt.s32.totalorder %s22, 2
      // Predicated region
      $region37: #{tpu_custom_call.1} parent=5 // pred_check
        %p286 = pneg %p285
      $region38: #{tpu_custom_call.1} parent=5 // pred_check_branch
        %288 = sbr.rel (%p286) target = $region40
      $region39: #{tpu_custom_call.1} parent=5 // pred_region
        // Predicated region
        $region41: #{tpu_custom_call.1} parent=39 // pred_check
          %p289 = pneg %p42
        $region42: #{tpu_custom_call.1} parent=39 // pred_check_branch
          %291 = sbr.rel (%p289) target = $region44
        $region43: #{tpu_custom_call.1} parent=39 // pred_region
          %s292 = sand.u32 %s32, 1
          %s293 = scalar_lea.sflag [#allocation3], %s292
          %s294 = sand.u32 %s32, 1
          %s295 = smul.addr %s294, 128
          %s296 = scalar_lea.vmem [#allocation2], %s295
          %s297 = smul.u32 2, %s22
          %s299 = ssub.s32 2048, 2048
          %300 = vsyncadd %s293, %s299
          %s301 = smul.addr %s297, 8
          %s302 = smul.addr %s301, 128
          %s303 = scalar_lea.hbm %s0, %s302
          %s304 = sshll.u32 %s296, 4
          %s305 = int_to_ptr.vmem [resolvable:$true] %s304
          %310 = dma.hbm_to_vmem [thread:$0]  %s303, 2048, %s305, %s293, 512, 512, 32
        $region44: #{tpu_custom_call.1} parent=39 // pred_fallthru
          _
      $region40: #{tpu_custom_call.1} parent=5 // pred_fallthru
        _
      %p311 = scmp.le.s32.totalorder 1, %s22
      %p312 = scmp.lt.s32.totalorder %s22, 3
      %p313 = pnand %p311, %p312
      %p314 = pneg %p313
      // Predicated region
      $region45: #{tpu_custom_call.1} parent=5 // pred_check
        _
      $region46: #{tpu_custom_call.1} parent=5 // pred_check_branch
        %316 = sbr.rel (%p313) target = $region48
      $region47: #{tpu_custom_call.1} parent=5 // pred_region
        %s317 = ssub.s32 %s22, 1
        %s318 = sand.u32 %s35, 1
        %s319 = scalar_lea.sflag [#allocation3], %s318
        %s320 = sand.u32 %s35, 1
        %s321 = smul.addr %s320, 128
        %s322 = scalar_lea.vmem [#allocation2], %s321
        // Predicated region
        $region49: #{tpu_custom_call.1} parent=47 // pred_check
          %p323 = pneg %p48
        $region50: #{tpu_custom_call.1} parent=47 // pred_check_branch
          %325 = sbr.rel (%p323) target = $region52
        $region51: #{tpu_custom_call.1} parent=47 // pred_region
          %326 = dma.done %s319, 2048
        $region52: #{tpu_custom_call.1} parent=47 // pred_fallthru
          _
        // Predicated region
        $region53: #{tpu_custom_call.1} parent=47 // pred_check
          %p327 = pneg %p69
        $region54: #{tpu_custom_call.1} parent=47 // pred_check_branch
          %329 = sbr.rel (%p327) target = $region56
        $region55: #{tpu_custom_call.1} parent=47 // pred_region
          %330 = dma.done [#allocation6], 49152
        $region56: #{tpu_custom_call.1} parent=47 // pred_fallthru
          _
        // Predicated region
        $region57: #{tpu_custom_call.1} parent=47 // pred_check
          %p331 = pneg %p90
        $region58: #{tpu_custom_call.1} parent=47 // pred_check_branch
          %333 = sbr.rel (%p331) target = $region60
        $region59: #{tpu_custom_call.1} parent=47 // pred_region
          %334 = dma.done [#allocation6], 64
        $region60: #{tpu_custom_call.1} parent=47 // pred_fallthru
          _
        // Predicated region
        $region61: #{tpu_custom_call.1} parent=47 // pred_check
          %p335 = pneg %p111
        $region62: #{tpu_custom_call.1} parent=47 // pred_check_branch
          %337 = sbr.rel (%p335) target = $region64
        $region63: #{tpu_custom_call.1} parent=47 // pred_region
          %338 = dma.done [#allocation9], 64
        $region64: #{tpu_custom_call.1} parent=47 // pred_fallthru
          _
        // Predicated region
        $region65: #{tpu_custom_call.1} parent=47 // pred_check
          %p339 = pneg %p132
        $region66: #{tpu_custom_call.1} parent=47 // pred_check_branch
          %341 = sbr.rel (%p339) target = $region68
        $region67: #{tpu_custom_call.1} parent=47 // pred_region
          %342 = dma.done [#allocation9], 49152
        $region68: #{tpu_custom_call.1} parent=47 // pred_fallthru
          _
        // Predicated region
        $region69: #{tpu_custom_call.1} parent=47 // pred_check
          %p343 = pneg %p153
        $region70: #{tpu_custom_call.1} parent=47 // pred_check_branch
          %345 = sbr.rel (%p343) target = $region72
        $region71: #{tpu_custom_call.1} parent=47 // pred_region
          %346 = dma.done [#allocation12], 64
        $region72: #{tpu_custom_call.1} parent=47 // pred_fallthru
          _
        // Predicated region
        $region73: #{tpu_custom_call.1} parent=47 // pred_check
          %p347 = pneg %p174
        $region74: #{tpu_custom_call.1} parent=47 // pred_check_branch
          %349 = sbr.rel (%p347) target = $region76
        $region75: #{tpu_custom_call.1} parent=47 // pred_region
          %350 = dma.done [#allocation12], 64
        $region76: #{tpu_custom_call.1} parent=47 // pred_fallthru
          _
        %s351 = sand.u32 %s35, 1
        %s352 = scalar_lea.sflag [#allocation3], %s351
        %s353 = sand.u32 %s35, 1
        %s354 = smul.addr %s353, 128
        %s355 = scalar_lea.vmem [#allocation2], %s354
        %p356 = pneg %p48
        %p357 = pneg %p45
        %p358 = pneg %p69
        %p359 = pneg %p66
        %p360 = pneg %p90
        %p361 = pneg %p87
        %p362 = pneg %p111
        %p363 = pneg %p108
        %p364 = pneg %p132
        %p365 = pneg %p129
        %p366 = pneg %p153
        %p367 = pneg %p150
        %p368 = pneg %p174
        %p369 = pneg %p171
        %p370 = pneg %p200
        %p371 = pneg %p197
        %s372 = sand.u32 %s187, 1
        %s373 = scalar_lea.sflag [#allocation4], %s372
        %s374 = sand.u32 %s187, 1
        %s375 = smul.addr %s374, 128
        %s376 = scalar_lea.vmem [#allocation14], %s375
        %s377 = smul.u32 2, %s27
        %s378 = smul.u32 2, %s27
        %v380 = vld [vmem:[%s322] sm:$0xff]
        %v381 = vld [vmem:[%s322 + $0x8] sm:$0xff]
        %v382 = vld [vmem:[%s322 + $0x10] sm:$0xff]
        %v383 = vld [vmem:[%s322 + $0x18] sm:$0xff]
        %v384 = vld [vmem:[%s322 + $0x20] sm:$0xff]
        %v385 = vld [vmem:[%s322 + $0x28] sm:$0xff]
        %v386 = vld [vmem:[%s322 + $0x30] sm:$0xff]
        %v387 = vld [vmem:[%s322 + $0x38] sm:$0xff]
        %v388 = vld [vmem:[%s322 + $0x40] sm:$0xff]
        %v389 = vld [vmem:[%s322 + $0x48] sm:$0xff]
        %v390 = vld [vmem:[%s322 + $0x50] sm:$0xff]
        %v391 = vld [vmem:[%s322 + $0x58] sm:$0xff]
        %v392 = vld [vmem:[%s322 + $0x60] sm:$0xff]
        %v393 = vld [vmem:[%s322 + $0x68] sm:$0xff]
        %v394 = vld [vmem:[%s322 + $0x70] sm:$0xff]
        %v395 = vld [vmem:[%s322 + $0x78] sm:$0xff]
        %v396 = vpack.c.bf16 %v384, %v380
        %v397 = vpack.c.bf16 %v385, %v381
        %v398 = vpack.c.bf16 %v386, %v382
        %v399 = vpack.c.bf16 %v387, %v383
        %v400 = vpack.c.bf16 %v392, %v388
        %v401 = vpack.c.bf16 %v393, %v389
        %v402 = vpack.c.bf16 %v394, %v390
        %v403 = vpack.c.bf16 %v395, %v391
        %v405 = vshrl.u32 %v396, 16
        %v407 = vrot.slane %v405, 7
        %v408 = vshll.u32 %v396, 16
        %v410 = vor.u32 %v407, %v408
        %v412 = vshrl.u32 %v397, 16
        %v414 = vrot.slane %v412, 7
        %v415 = vshll.u32 %v397, 16
        %v417 = vor.u32 %v414, %v415
        %v419 = vshrl.u32 %v398, 16
        %v421 = vrot.slane %v419, 7
        %v422 = vshll.u32 %v398, 16
        %v424 = vor.u32 %v421, %v422
        %v426 = vshrl.u32 %v399, 16
        %v428 = vrot.slane %v426, 7
        %v429 = vshll.u32 %v399, 16
        %v431 = vor.u32 %v428, %v429
        %v433 = vshrl.u32 %v400, 16
        %v435 = vrot.slane %v433, 7
        %v436 = vshll.u32 %v400, 16
        %v438 = vor.u32 %v435, %v436
        %v440 = vshrl.u32 %v401, 16
        %v442 = vrot.slane %v440, 7
        %v443 = vshll.u32 %v401, 16
        %v445 = vor.u32 %v442, %v443
        %v447 = vshrl.u32 %v402, 16
        %v449 = vrot.slane %v447, 7
        %v450 = vshll.u32 %v402, 16
        %v452 = vor.u32 %v449, %v450
        %v454 = vshrl.u32 %v403, 16
        %v456 = vrot.slane %v454, 7
        %v457 = vshll.u32 %v403, 16
        %v459 = vor.u32 %v456, %v457
        %vm476 = vcmask 1040384
        %vm477 = vsmask.f32 256
        %vm478 = vmand %vm476, %vm477
        %v479 = vsel %vm478, 0, %v410
        %v480 = vsel %vm478, 0, %v417
        %v481 = vsel %vm478, 0, %v424
        %v482 = vsel %vm478, 0, %v431
        %v483 = vsel %vm478, 0, %v438
        %v484 = vsel %vm478, 0, %v445
        %v485 = vsel %vm478, 0, %v452
        %v486 = vsel %vm478, 0, %v459
        %v487 = vsel %vm478, %v407, 0
        %v488 = vsel %vm478, %v414, 0
        %v489 = vsel %vm478, %v421, 0
        %v490 = vsel %vm478, %v428, 0
        %v491 = vsel %vm478, %v435, 0
        %v492 = vsel %vm478, %v442, 0
        %v493 = vsel %vm478, %v449, 0
        %v494 = vsel %vm478, %v456, 0
        %v495 = vld [vmem:[#allocation5] sm:$0xff]
        %v496 = vld [vmem:[#allocation5 + $0x8] sm:$0xff]
        %v497 = vld [vmem:[#allocation5 + $0x10] sm:$0xff]
        %v498 = vld [vmem:[#allocation5 + $0x18] sm:$0xff]
        %v499 = vld [vmem:[#allocation5 + $0x20] sm:$0xff]
        %v500 = vld [vmem:[#allocation5 + $0x28] sm:$0xff]
        %v501 = vld [vmem:[#allocation5 + $0x30] sm:$0xff]
        %v502 = vld [vmem:[#allocation5 + $0x38] sm:$0xff]
        %v503 = vld [vmem:[#allocation5 + $0x40] sm:$0xff]
        %v504 = vld [vmem:[#allocation5 + $0x48] sm:$0xff]
        %v505 = vld [vmem:[#allocation5 + $0x50] sm:$0xff]
        %v506 = vld [vmem:[#allocation5 + $0x58] sm:$0xff]
        %v507 = vld [vmem:[#allocation5 + $0x60] sm:$0xff]
        %v508 = vld [vmem:[#allocation5 + $0x68] sm:$0xff]
        %v509 = vld [vmem:[#allocation5 + $0x70] sm:$0xff]
        %v510 = vld [vmem:[#allocation5 + $0x78] sm:$0xff]
        %v511 = vld [vmem:[#allocation5 + $0x80] sm:$0xff]
        %v512 = vld [vmem:[#allocation5 + $0x88] sm:$0xff]
        %v513 = vld [vmem:[#allocation5 + $0x90] sm:$0xff]
        %v514 = vld [vmem:[#allocation5 + $0x98] sm:$0xff]
        %v515 = vld [vmem:[#allocation5 + $0xa0] sm:$0xff]
        %v516 = vld [vmem:[#allocation5 + $0xa8] sm:$0xff]
        %v517 = vld [vmem:[#allocation5 + $0xb0] sm:$0xff]
        %v518 = vld [vmem:[#allocation5 + $0xb8] sm:$0xff]
        %v519 = vld [vmem:[#allocation5 + $0xc0] sm:$0xff]
        %v520 = vld [vmem:[#allocation5 + $0xc8] sm:$0xff]
        %v521 = vld [vmem:[#allocation5 + $0xd0] sm:$0xff]
        %v522 = vld [vmem:[#allocation5 + $0xd8] sm:$0xff]
        %v523 = vld [vmem:[#allocation5 + $0xe0] sm:$0xff]
        %v524 = vld [vmem:[#allocation5 + $0xe8] sm:$0xff]
        %v525 = vld [vmem:[#allocation5 + $0xf0] sm:$0xff]
        %v526 = vld [vmem:[#allocation5 + $0xf8] sm:$0xff]
        %v527 = vld [vmem:[#allocation5 + $0x100] sm:$0xff]
        %v528 = vld [vmem:[#allocation5 + $0x108] sm:$0xff]
        %v529 = vld [vmem:[#allocation5 + $0x110] sm:$0xff]
        %v530 = vld [vmem:[#allocation5 + $0x118] sm:$0xff]
        %v531 = vld [vmem:[#allocation5 + $0x120] sm:$0xff]
        %v532 = vld [vmem:[#allocation5 + $0x128] sm:$0xff]
        %v533 = vld [vmem:[#allocation5 + $0x130] sm:$0xff]
        %v534 = vld [vmem:[#allocation5 + $0x138] sm:$0xff]
        %v535 = vld [vmem:[#allocation5 + $0x140] sm:$0xff]
        %v536 = vld [vmem:[#allocation5 + $0x148] sm:$0xff]
        %v537 = vld [vmem:[#allocation5 + $0x150] sm:$0xff]
        %v538 = vld [vmem:[#allocation5 + $0x158] sm:$0xff]
        %v539 = vld [vmem:[#allocation5 + $0x160] sm:$0xff]
        %v540 = vld [vmem:[#allocation5 + $0x168] sm:$0xff]
        %v541 = vld [vmem:[#allocation5 + $0x170] sm:$0xff]
        %v542 = vld [vmem:[#allocation5 + $0x178] sm:$0xff]
        %v543 = vld [vmem:[#allocation5 + $0x180] sm:$0xff]
        %v544 = vld [vmem:[#allocation5 + $0x188] sm:$0xff]
        %v545 = vld [vmem:[#allocation5 + $0x190] sm:$0xff]
        %v546 = vld [vmem:[#allocation5 + $0x198] sm:$0xff]
        %v547 = vld [vmem:[#allocation5 + $0x1a0] sm:$0xff]
        %v548 = vld [vmem:[#allocation5 + $0x1a8] sm:$0xff]
        %v549 = vld [vmem:[#allocation5 + $0x1b0] sm:$0xff]
        %v550 = vld [vmem:[#allocation5 + $0x1b8] sm:$0xff]
        %v551 = vld [vmem:[#allocation5 + $0x1c0] sm:$0xff]
        %v552 = vld [vmem:[#allocation5 + $0x1c8] sm:$0xff]
        %v553 = vld [vmem:[#allocation5 + $0x1d0] sm:$0xff]
        %v554 = vld [vmem:[#allocation5 + $0x1d8] sm:$0xff]
        %v555 = vld [vmem:[#allocation5 + $0x1e0] sm:$0xff]
        %v556 = vld [vmem:[#allocation5 + $0x1e8] sm:$0xff]
        %v557 = vld [vmem:[#allocation5 + $0x1f0] sm:$0xff]
        %v558 = vld [vmem:[#allocation5 + $0x1f8] sm:$0xff]
        %v559 = vld [vmem:[#allocation5 + $0x200] sm:$0xff]
        %v560 = vld [vmem:[#allocation5 + $0x208] sm:$0xff]
        %v561 = vld [vmem:[#allocation5 + $0x210] sm:$0xff]
        %v562 = vld [vmem:[#allocation5 + $0x218] sm:$0xff]
        %v563 = vld [vmem:[#allocation5 + $0x220] sm:$0xff]
        %v564 = vld [vmem:[#allocation5 + $0x228] sm:$0xff]
        %v565 = vld [vmem:[#allocation5 + $0x230] sm:$0xff]
        %v566 = vld [vmem:[#allocation5 + $0x238] sm:$0xff]
        %v567 = vld [vmem:[#allocation5 + $0x240] sm:$0xff]
        %v568 = vld [vmem:[#allocation5 + $0x248] sm:$0xff]
        %v569 = vld [vmem:[#allocation5 + $0x250] sm:$0xff]
        %v570 = vld [vmem:[#allocation5 + $0x258] sm:$0xff]
        %v571 = vld [vmem:[#allocation5 + $0x260] sm:$0xff]
        %v572 = vld [vmem:[#allocation5 + $0x268] sm:$0xff]
        %v573 = vld [vmem:[#allocation5 + $0x270] sm:$0xff]
        %v574 = vld [vmem:[#allocation5 + $0x278] sm:$0xff]
        %v575 = vld [vmem:[#allocation5 + $0x280] sm:$0xff]
        %v576 = vld [vmem:[#allocation5 + $0x288] sm:$0xff]
        %v577 = vld [vmem:[#allocation5 + $0x290] sm:$0xff]
        %v578 = vld [vmem:[#allocation5 + $0x298] sm:$0xff]
        %v579 = vld [vmem:[#allocation5 + $0x2a0] sm:$0xff]
        %v580 = vld [vmem:[#allocation5 + $0x2a8] sm:$0xff]
        %v581 = vld [vmem:[#allocation5 + $0x2b0] sm:$0xff]
        %v582 = vld [vmem:[#allocation5 + $0x2b8] sm:$0xff]
        %v583 = vld [vmem:[#allocation5 + $0x2c0] sm:$0xff]
        %v584 = vld [vmem:[#allocation5 + $0x2c8] sm:$0xff]
        %v585 = vld [vmem:[#allocation5 + $0x2d0] sm:$0xff]
        %v586 = vld [vmem:[#allocation5 + $0x2d8] sm:$0xff]
        %v587 = vld [vmem:[#allocation5 + $0x2e0] sm:$0xff]
        %v588 = vld [vmem:[#allocation5 + $0x2e8] sm:$0xff]
        %v589 = vld [vmem:[#allocation5 + $0x2f0] sm:$0xff]
        %v590 = vld [vmem:[#allocation5 + $0x2f8] sm:$0xff]
        %v591 = vld [vmem:[#allocation5 + $0x300] sm:$0xff]
        %v592 = vld [vmem:[#allocation5 + $0x308] sm:$0xff]
        %v593 = vld [vmem:[#allocation5 + $0x310] sm:$0xff]
        %v594 = vld [vmem:[#allocation5 + $0x318] sm:$0xff]
        %v595 = vld [vmem:[#allocation5 + $0x320] sm:$0xff]
        %v596 = vld [vmem:[#allocation5 + $0x328] sm:$0xff]
        %v597 = vld [vmem:[#allocation5 + $0x330] sm:$0xff]
        %v598 = vld [vmem:[#allocation5 + $0x338] sm:$0xff]
        %v599 = vld [vmem:[#allocation5 + $0x340] sm:$0xff]
        %v600 = vld [vmem:[#allocation5 + $0x348] sm:$0xff]
        %v601 = vld [vmem:[#allocation5 + $0x350] sm:$0xff]
        %v602 = vld [vmem:[#allocation5 + $0x358] sm:$0xff]
        %v603 = vld [vmem:[#allocation5 + $0x360] sm:$0xff]
        %v604 = vld [vmem:[#allocation5 + $0x368] sm:$0xff]
        %v605 = vld [vmem:[#allocation5 + $0x370] sm:$0xff]
        %v606 = vld [vmem:[#allocation5 + $0x378] sm:$0xff]
        %v607 = vld [vmem:[#allocation5 + $0x380] sm:$0xff]
        %v608 = vld [vmem:[#allocation5 + $0x388] sm:$0xff]
        %v609 = vld [vmem:[#allocation5 + $0x390] sm:$0xff]
        %v610 = vld [vmem:[#allocation5 + $0x398] sm:$0xff]
        %v611 = vld [vmem:[#allocation5 + $0x3a0] sm:$0xff]
        %v612 = vld [vmem:[#allocation5 + $0x3a8] sm:$0xff]
        %v613 = vld [vmem:[#allocation5 + $0x3b0] sm:$0xff]
        %v614 = vld [vmem:[#allocation5 + $0x3b8] sm:$0xff]
        %v615 = vld [vmem:[#allocation5 + $0x3c0] sm:$0xff]
        %v616 = vld [vmem:[#allocation5 + $0x3c8] sm:$0xff]
        %v617 = vld [vmem:[#allocation5 + $0x3d0] sm:$0xff]
        %v618 = vld [vmem:[#allocation5 + $0x3d8] sm:$0xff]
        %v619 = vld [vmem:[#allocation5 + $0x3e0] sm:$0xff]
        %v620 = vld [vmem:[#allocation5 + $0x3e8] sm:$0xff]
        %v621 = vld [vmem:[#allocation5 + $0x3f0] sm:$0xff]
        %v622 = vld [vmem:[#allocation5 + $0x3f8] sm:$0xff]
        %vm623 = vsmask.f32 7424
        %v625 = vshrl.u32 %v479, 16
        %v627 = vshll.u32 %v479, 16
        %v629 = vrot.slane %v627, 1
        %v630 = vor.u32 %v625, %v629
        %v632 = vshll.u32 %v487, 16
        %v634 = vrot.slane %v632, 1
        %v635 = vsel %vm623, %v630, %v634
        %v637 = vshrl.u32 %v480, 16
        %v639 = vshll.u32 %v480, 16
        %v641 = vrot.slane %v639, 1
        %v642 = vor.u32 %v637, %v641
        %v644 = vshll.u32 %v488, 16
        %v646 = vrot.slane %v644, 1
        %v647 = vsel %vm623, %v642, %v646
        %v649 = vshrl.u32 %v481, 16
        %v651 = vshll.u32 %v481, 16
        %v653 = vrot.slane %v651, 1
        %v654 = vor.u32 %v649, %v653
        %v656 = vshll.u32 %v489, 16
        %v658 = vrot.slane %v656, 1
        %v659 = vsel %vm623, %v654, %v658
        %v661 = vshrl.u32 %v482, 16
        %v663 = vshll.u32 %v482, 16
        %v665 = vrot.slane %v663, 1
        %v666 = vor.u32 %v661, %v665
        %v668 = vshll.u32 %v490, 16
        %v670 = vrot.slane %v668, 1
        %v671 = vsel %vm623, %v666, %v670
        %v673 = vshrl.u32 %v483, 16
        %v675 = vshll.u32 %v483, 16
        %v677 = vrot.slane %v675, 1
        %v678 = vor.u32 %v673, %v677
        %v680 = vshll.u32 %v491, 16
        %v682 = vrot.slane %v680, 1
        %v683 = vsel %vm623, %v678, %v682
        %v685 = vshrl.u32 %v484, 16
        %v687 = vshll.u32 %v484, 16
        %v689 = vrot.slane %v687, 1
        %v690 = vor.u32 %v685, %v689
        %v692 = vshll.u32 %v492, 16
        %v694 = vrot.slane %v692, 1
        %v695 = vsel %vm623, %v690, %v694
        %v697 = vshrl.u32 %v485, 16
        %v699 = vshll.u32 %v485, 16
        %v701 = vrot.slane %v699, 1
        %v702 = vor.u32 %v697, %v701
        %v704 = vshll.u32 %v493, 16
        %v706 = vrot.slane %v704, 1
        %v707 = vsel %vm623, %v702, %v706
        %v709 = vshrl.u32 %v486, 16
        %v711 = vshll.u32 %v486, 16
        %v713 = vrot.slane %v711, 1
        %v714 = vor.u32 %v709, %v713
        %v716 = vshll.u32 %v494, 16
        %v718 = vrot.slane %v716, 1
        %v719 = vsel %vm623, %v714, %v718
        %s728 = scalar_lea.vmem [#allocation5], 1024
        %v729 = vld [vmem:[%s728] sm:$0xff]
        %v730 = vld [vmem:[%s728 + $0x8] sm:$0xff]
        %v731 = vld [vmem:[%s728 + $0x10] sm:$0xff]
        %v732 = vld [vmem:[%s728 + $0x18] sm:$0xff]
        %v733 = vld [vmem:[%s728 + $0x20] sm:$0xff]
        %v734 = vld [vmem:[%s728 + $0x28] sm:$0xff]
        %v735 = vld [vmem:[%s728 + $0x30] sm:$0xff]
        %v736 = vld [vmem:[%s728 + $0x38] sm:$0xff]
        %v737 = vld [vmem:[%s728 + $0x40] sm:$0xff]
        %v738 = vld [vmem:[%s728 + $0x48] sm:$0xff]
        %v739 = vld [vmem:[%s728 + $0x50] sm:$0xff]
        %v740 = vld [vmem:[%s728 + $0x58] sm:$0xff]
        %v741 = vld [vmem:[%s728 + $0x60] sm:$0xff]
        %v742 = vld [vmem:[%s728 + $0x68] sm:$0xff]
        %v743 = vld [vmem:[%s728 + $0x70] sm:$0xff]
        %v744 = vld [vmem:[%s728 + $0x78] sm:$0xff]
        %v745 = vld [vmem:[%s728 + $0x80] sm:$0xff]
        %v746 = vld [vmem:[%s728 + $0x88] sm:$0xff]
        %v747 = vld [vmem:[%s728 + $0x90] sm:$0xff]
        %v748 = vld [vmem:[%s728 + $0x98] sm:$0xff]
        %v749 = vld [vmem:[%s728 + $0xa0] sm:$0xff]
        %v750 = vld [vmem:[%s728 + $0xa8] sm:$0xff]
        %v751 = vld [vmem:[%s728 + $0xb0] sm:$0xff]
        %v752 = vld [vmem:[%s728 + $0xb8] sm:$0xff]
        %v753 = vld [vmem:[%s728 + $0xc0] sm:$0xff]
        %v754 = vld [vmem:[%s728 + $0xc8] sm:$0xff]
        %v755 = vld [vmem:[%s728 + $0xd0] sm:$0xff]
        %v756 = vld [vmem:[%s728 + $0xd8] sm:$0xff]
        %v757 = vld [vmem:[%s728 + $0xe0] sm:$0xff]
        %v758 = vld [vmem:[%s728 + $0xe8] sm:$0xff]
        %v759 = vld [vmem:[%s728 + $0xf0] sm:$0xff]
        %v760 = vld [vmem:[%s728 + $0xf8] sm:$0xff]
        %v761 = vld [vmem:[%s728 + $0x100] sm:$0xff]
        %v762 = vld [vmem:[%s728 + $0x108] sm:$0xff]
        %v763 = vld [vmem:[%s728 + $0x110] sm:$0xff]
        %v764 = vld [vmem:[%s728 + $0x118] sm:$0xff]
        %v765 = vld [vmem:[%s728 + $0x120] sm:$0xff]
        %v766 = vld [vmem:[%s728 + $0x128] sm:$0xff]
        %v767 = vld [vmem:[%s728 + $0x130] sm:$0xff]
        %v768 = vld [vmem:[%s728 + $0x138] sm:$0xff]
        %v769 = vld [vmem:[%s728 + $0x140] sm:$0xff]
        %v770 = vld [vmem:[%s728 + $0x148] sm:$0xff]
        %v771 = vld [vmem:[%s728 + $0x150] sm:$0xff]
        %v772 = vld [vmem:[%s728 + $0x158] sm:$0xff]
        %v773 = vld [vmem:[%s728 + $0x160] sm:$0xff]
        %v774 = vld [vmem:[%s728 + $0x168] sm:$0xff]
        %v775 = vld [vmem:[%s728 + $0x170] sm:$0xff]
        %v776 = vld [vmem:[%s728 + $0x178] sm:$0xff]
        %v777 = vld [vmem:[%s728 + $0x180] sm:$0xff]
        %v778 = vld [vmem:[%s728 + $0x188] sm:$0xff]
        %v779 = vld [vmem:[%s728 + $0x190] sm:$0xff]
        %v780 = vld [vmem:[%s728 + $0x198] sm:$0xff]
        %v781 = vld [vmem:[%s728 + $0x1a0] sm:$0xff]
        %v782 = vld [vmem:[%s728 + $0x1a8] sm:$0xff]
        %v783 = vld [vmem:[%s728 + $0x1b0] sm:$0xff]
        %v784 = vld [vmem:[%s728 + $0x1b8] sm:$0xff]
        %v785 = vld [vmem:[%s728 + $0x1c0] sm:$0xff]
        %v786 = vld [vmem:[%s728 + $0x1c8] sm:$0xff]
        %v787 = vld [vmem:[%s728 + $0x1d0] sm:$0xff]
        %v788 = vld [vmem:[%s728 + $0x1d8] sm:$0xff]
        %v789 = vld [vmem:[%s728 + $0x1e0] sm:$0xff]
        %v790 = vld [vmem:[%s728 + $0x1e8] sm:$0xff]
        %v791 = vld [vmem:[%s728 + $0x1f0] sm:$0xff]
        %v792 = vld [vmem:[%s728 + $0x1f8] sm:$0xff]
        %v793 = vld [vmem:[%s728 + $0x200] sm:$0xff]
        %v794 = vld [vmem:[%s728 + $0x208] sm:$0xff]
        %v795 = vld [vmem:[%s728 + $0x210] sm:$0xff]
        %v796 = vld [vmem:[%s728 + $0x218] sm:$0xff]
        %v797 = vld [vmem:[%s728 + $0x220] sm:$0xff]
        %v798 = vld [vmem:[%s728 + $0x228] sm:$0xff]
        %v799 = vld [vmem:[%s728 + $0x230] sm:$0xff]
        %v800 = vld [vmem:[%s728 + $0x238] sm:$0xff]
        %v801 = vld [vmem:[%s728 + $0x240] sm:$0xff]
        %v802 = vld [vmem:[%s728 + $0x248] sm:$0xff]
        %v803 = vld [vmem:[%s728 + $0x250] sm:$0xff]
        %v804 = vld [vmem:[%s728 + $0x258] sm:$0xff]
        %v805 = vld [vmem:[%s728 + $0x260] sm:$0xff]
        %v806 = vld [vmem:[%s728 + $0x268] sm:$0xff]
        %v807 = vld [vmem:[%s728 + $0x270] sm:$0xff]
        %v808 = vld [vmem:[%s728 + $0x278] sm:$0xff]
        %v809 = vld [vmem:[%s728 + $0x280] sm:$0xff]
        %v810 = vld [vmem:[%s728 + $0x288] sm:$0xff]
        %v811 = vld [vmem:[%s728 + $0x290] sm:$0xff]
        %v812 = vld [vmem:[%s728 + $0x298] sm:$0xff]
        %v813 = vld [vmem:[%s728 + $0x2a0] sm:$0xff]
        %v814 = vld [vmem:[%s728 + $0x2a8] sm:$0xff]
        %v815 = vld [vmem:[%s728 + $0x2b0] sm:$0xff]
        %v816 = vld [vmem:[%s728 + $0x2b8] sm:$0xff]
        %v817 = vld [vmem:[%s728 + $0x2c0] sm:$0xff]
        %v818 = vld [vmem:[%s728 + $0x2c8] sm:$0xff]
        %v819 = vld [vmem:[%s728 + $0x2d0] sm:$0xff]
        %v820 = vld [vmem:[%s728 + $0x2d8] sm:$0xff]
        %v821 = vld [vmem:[%s728 + $0x2e0] sm:$0xff]
        %v822 = vld [vmem:[%s728 + $0x2e8] sm:$0xff]
        %v823 = vld [vmem:[%s728 + $0x2f0] sm:$0xff]
        %v824 = vld [vmem:[%s728 + $0x2f8] sm:$0xff]
        %v825 = vld [vmem:[%s728 + $0x300] sm:$0xff]
        %v826 = vld [vmem:[%s728 + $0x308] sm:$0xff]
        %v827 = vld [vmem:[%s728 + $0x310] sm:$0xff]
        %v828 = vld [vmem:[%s728 + $0x318] sm:$0xff]
        %v829 = vld [vmem:[%s728 + $0x320] sm:$0xff]
        %v830 = vld [vmem:[%s728 + $0x328] sm:$0xff]
        %v831 = vld [vmem:[%s728 + $0x330] sm:$0xff]
        %v832 = vld [vmem:[%s728 + $0x338] sm:$0xff]
        %v833 = vld [vmem:[%s728 + $0x340] sm:$0xff]
        %v834 = vld [vmem:[%s728 + $0x348] sm:$0xff]
        %v835 = vld [vmem:[%s728 + $0x350] sm:$0xff]
        %v836 = vld [vmem:[%s728 + $0x358] sm:$0xff]
        %v837 = vld [vmem:[%s728 + $0x360] sm:$0xff]
        %v838 = vld [vmem:[%s728 + $0x368] sm:$0xff]
        %v839 = vld [vmem:[%s728 + $0x370] sm:$0xff]
        %v840 = vld [vmem:[%s728 + $0x378] sm:$0xff]
        %v841 = vld [vmem:[%s728 + $0x380] sm:$0xff]
        %v842 = vld [vmem:[%s728 + $0x388] sm:$0xff]
        %v843 = vld [vmem:[%s728 + $0x390] sm:$0xff]
        %v844 = vld [vmem:[%s728 + $0x398] sm:$0xff]
        %v845 = vld [vmem:[%s728 + $0x3a0] sm:$0xff]
        %v846 = vld [vmem:[%s728 + $0x3a8] sm:$0xff]
        %v847 = vld [vmem:[%s728 + $0x3b0] sm:$0xff]
        %v848 = vld [vmem:[%s728 + $0x3b8] sm:$0xff]
        %v849 = vld [vmem:[%s728 + $0x3c0] sm:$0xff]
        %v850 = vld [vmem:[%s728 + $0x3c8] sm:$0xff]
        %v851 = vld [vmem:[%s728 + $0x3d0] sm:$0xff]
        %v852 = vld [vmem:[%s728 + $0x3d8] sm:$0xff]
        %v853 = vld [vmem:[%s728 + $0x3e0] sm:$0xff]
        %v854 = vld [vmem:[%s728 + $0x3e8] sm:$0xff]
        %v855 = vld [vmem:[%s728 + $0x3f0] sm:$0xff]
        %v856 = vld [vmem:[%s728 + $0x3f8] sm:$0xff]
        %v985 = vunpack.c.l.b16 %v729
        %v986 = vunpack.c.h.b16 %v729
        %v987 = vunpack.c.l.b16 %v730
        %v988 = vunpack.c.h.b16 %v730
        %v989 = vunpack.c.l.b16 %v731
        %v990 = vunpack.c.h.b16 %v731
        %v991 = vunpack.c.l.b16 %v732
        %v992 = vunpack.c.h.b16 %v732
        %v993 = vunpack.c.l.b16 %v733
        %v994 = vunpack.c.h.b16 %v733
        %v995 = vunpack.c.l.b16 %v734
        %v996 = vunpack.c.h.b16 %v734
        %v997 = vunpack.c.l.b16 %v735
        %v998 = vunpack.c.h.b16 %v735
        %v999 = vunpack.c.l.b16 %v736
        %v1000 = vunpack.c.h.b16 %v736
        %v1001 = vunpack.c.l.b16 %v737
        %v1002 = vunpack.c.h.b16 %v737
        %v1003 = vunpack.c.l.b16 %v738
        %v1004 = vunpack.c.h.b16 %v738
        %v1005 = vunpack.c.l.b16 %v739
        %v1006 = vunpack.c.h.b16 %v739
        %v1007 = vunpack.c.l.b16 %v740
        %v1008 = vunpack.c.h.b16 %v740
        %v1009 = vunpack.c.l.b16 %v741
        %v1010 = vunpack.c.h.b16 %v741
        %v1011 = vunpack.c.l.b16 %v742
        %v1012 = vunpack.c.h.b16 %v742
        %v1013 = vunpack.c.l.b16 %v743
        %v1014 = vunpack.c.h.b16 %v743
        %v1015 = vunpack.c.l.b16 %v744
        %v1016 = vunpack.c.h.b16 %v744
        %v1017 = vunpack.c.l.b16 %v745
        %v1018 = vunpack.c.h.b16 %v745
        %v1019 = vunpack.c.l.b16 %v746
        %v1020 = vunpack.c.h.b16 %v746
        %v1021 = vunpack.c.l.b16 %v747
        %v1022 = vunpack.c.h.b16 %v747
        %v1023 = vunpack.c.l.b16 %v748
        %v1024 = vunpack.c.h.b16 %v748
        %v1025 = vunpack.c.l.b16 %v749
        %v1026 = vunpack.c.h.b16 %v749
        %v1027 = vunpack.c.l.b16 %v750
        %v1028 = vunpack.c.h.b16 %v750
        %v1029 = vunpack.c.l.b16 %v751
        %v1030 = vunpack.c.h.b16 %v751
        %v1031 = vunpack.c.l.b16 %v752
        %v1032 = vunpack.c.h.b16 %v752
        %v1033 = vunpack.c.l.b16 %v753
        %v1034 = vunpack.c.h.b16 %v753
        %v1035 = vunpack.c.l.b16 %v754
        %v1036 = vunpack.c.h.b16 %v754
        %v1037 = vunpack.c.l.b16 %v755
        %v1038 = vunpack.c.h.b16 %v755
        %v1039 = vunpack.c.l.b16 %v756
        %v1040 = vunpack.c.h.b16 %v756
        %v1041 = vunpack.c.l.b16 %v757
        %v1042 = vunpack.c.h.b16 %v757
        %v1043 = vunpack.c.l.b16 %v758
        %v1044 = vunpack.c.h.b16 %v758
        %v1045 = vunpack.c.l.b16 %v759
        %v1046 = vunpack.c.h.b16 %v759
        %v1047 = vunpack.c.l.b16 %v760
        %v1048 = vunpack.c.h.b16 %v760
        %v1049 = vunpack.c.l.b16 %v761
        %v1050 = vunpack.c.h.b16 %v761
        %v1051 = vunpack.c.l.b16 %v762
        %v1052 = vunpack.c.h.b16 %v762
        %v1053 = vunpack.c.l.b16 %v763
        %v1054 = vunpack.c.h.b16 %v763
        %v1055 = vunpack.c.l.b16 %v764
        %v1056 = vunpack.c.h.b16 %v764
        %v1057 = vunpack.c.l.b16 %v765
        %v1058 = vunpack.c.h.b16 %v765
        %v1059 = vunpack.c.l.b16 %v766
        %v1060 = vunpack.c.h.b16 %v766
        %v1061 = vunpack.c.l.b16 %v767
        %v1062 = vunpack.c.h.b16 %v767
        %v1063 = vunpack.c.l.b16 %v768
        %v1064 = vunpack.c.h.b16 %v768
        %v1065 = vunpack.c.l.b16 %v769
        %v1066 = vunpack.c.h.b16 %v769
        %v1067 = vunpack.c.l.b16 %v770
        %v1068 = vunpack.c.h.b16 %v770
        %v1069 = vunpack.c.l.b16 %v771
        %v1070 = vunpack.c.h.b16 %v771
        %v1071 = vunpack.c.l.b16 %v772
        %v1072 = vunpack.c.h.b16 %v772
        %v1073 = vunpack.c.l.b16 %v773
        %v1074 = vunpack.c.h.b16 %v773
        %v1075 = vunpack.c.l.b16 %v774
        %v1076 = vunpack.c.h.b16 %v774
        %v1077 = vunpack.c.l.b16 %v775
        %v1078 = vunpack.c.h.b16 %v775
        %v1079 = vunpack.c.l.b16 %v776
        %v1080 = vunpack.c.h.b16 %v776
        %v1081 = vunpack.c.l.b16 %v777
        %v1082 = vunpack.c.h.b16 %v777
        %v1083 = vunpack.c.l.b16 %v778
        %v1084 = vunpack.c.h.b16 %v778
        %v1085 = vunpack.c.l.b16 %v779
        %v1086 = vunpack.c.h.b16 %v779
        %v1087 = vunpack.c.l.b16 %v780
        %v1088 = vunpack.c.h.b16 %v780
        %v1089 = vunpack.c.l.b16 %v781
        %v1090 = vunpack.c.h.b16 %v781
        %v1091 = vunpack.c.l.b16 %v782
        %v1092 = vunpack.c.h.b16 %v782
        %v1093 = vunpack.c.l.b16 %v783
        %v1094 = vunpack.c.h.b16 %v783
        %v1095 = vunpack.c.l.b16 %v784
        %v1096 = vunpack.c.h.b16 %v784
        %v1097 = vunpack.c.l.b16 %v785
        %v1098 = vunpack.c.h.b16 %v785
        %v1099 = vunpack.c.l.b16 %v786
        %v1100 = vunpack.c.h.b16 %v786
        %v1101 = vunpack.c.l.b16 %v787
        %v1102 = vunpack.c.h.b16 %v787
        %v1103 = vunpack.c.l.b16 %v788
        %v1104 = vunpack.c.h.b16 %v788
        %v1105 = vunpack.c.l.b16 %v789
        %v1106 = vunpack.c.h.b16 %v789
        %v1107 = vunpack.c.l.b16 %v790
        %v1108 = vunpack.c.h.b16 %v790
        %v1109 = vunpack.c.l.b16 %v791
        %v1110 = vunpack.c.h.b16 %v791
        %v1111 = vunpack.c.l.b16 %v792
        %v1112 = vunpack.c.h.b16 %v792
        %v1113 = vunpack.c.l.b16 %v793
        %v1114 = vunpack.c.h.b16 %v793
        %v1115 = vunpack.c.l.b16 %v794
        %v1116 = vunpack.c.h.b16 %v794
        %v1117 = vunpack.c.l.b16 %v795
        %v1118 = vunpack.c.h.b16 %v795
        %v1119 = vunpack.c.l.b16 %v796
        %v1120 = vunpack.c.h.b16 %v796
        %v1121 = vunpack.c.l.b16 %v797
        %v1122 = vunpack.c.h.b16 %v797
        %v1123 = vunpack.c.l.b16 %v798
        %v1124 = vunpack.c.h.b16 %v798
        %v1125 = vunpack.c.l.b16 %v799
        %v1126 = vunpack.c.h.b16 %v799
        %v1127 = vunpack.c.l.b16 %v800
        %v1128 = vunpack.c.h.b16 %v800
        %v1129 = vunpack.c.l.b16 %v801
        %v1130 = vunpack.c.h.b16 %v801
        %v1131 = vunpack.c.l.b16 %v802
        %v1132 = vunpack.c.h.b16 %v802
        %v1133 = vunpack.c.l.b16 %v803
        %v1134 = vunpack.c.h.b16 %v803
        %v1135 = vunpack.c.l.b16 %v804
        %v1136 = vunpack.c.h.b16 %v804
        %v1137 = vunpack.c.l.b16 %v805
        %v1138 = vunpack.c.h.b16 %v805
        %v1139 = vunpack.c.l.b16 %v806
        %v1140 = vunpack.c.h.b16 %v806
        %v1141 = vunpack.c.l.b16 %v807
        %v1142 = vunpack.c.h.b16 %v807
        %v1143 = vunpack.c.l.b16 %v808
        %v1144 = vunpack.c.h.b16 %v808
        %v1145 = vunpack.c.l.b16 %v809
        %v1146 = vunpack.c.h.b16 %v809
        %v1147 = vunpack.c.l.b16 %v810
        %v1148 = vunpack.c.h.b16 %v810
        %v1149 = vunpack.c.l.b16 %v811
        %v1150 = vunpack.c.h.b16 %v811
        %v1151 = vunpack.c.l.b16 %v812
        %v1152 = vunpack.c.h.b16 %v812
        %v1153 = vunpack.c.l.b16 %v813
        %v1154 = vunpack.c.h.b16 %v813
        %v1155 = vunpack.c.l.b16 %v814
        %v1156 = vunpack.c.h.b16 %v814
        %v1157 = vunpack.c.l.b16 %v815
        %v1158 = vunpack.c.h.b16 %v815
        %v1159 = vunpack.c.l.b16 %v816
        %v1160 = vunpack.c.h.b16 %v816
        %v1161 = vunpack.c.l.b16 %v817
        %v1162 = vunpack.c.h.b16 %v817
        %v1163 = vunpack.c.l.b16 %v818
        %v1164 = vunpack.c.h.b16 %v818
        %v1165 = vunpack.c.l.b16 %v819
        %v1166 = vunpack.c.h.b16 %v819
        %v1167 = vunpack.c.l.b16 %v820
        %v1168 = vunpack.c.h.b16 %v820
        %v1169 = vunpack.c.l.b16 %v821
        %v1170 = vunpack.c.h.b16 %v821
        %v1171 = vunpack.c.l.b16 %v822
        %v1172 = vunpack.c.h.b16 %v822
        %v1173 = vunpack.c.l.b16 %v823
        %v1174 = vunpack.c.h.b16 %v823
        %v1175 = vunpack.c.l.b16 %v824
        %v1176 = vunpack.c.h.b16 %v824
        %v1177 = vunpack.c.l.b16 %v825
        %v1178 = vunpack.c.h.b16 %v825
        %v1179 = vunpack.c.l.b16 %v826
        %v1180 = vunpack.c.h.b16 %v826
        %v1181 = vunpack.c.l.b16 %v827
        %v1182 = vunpack.c.h.b16 %v827
        %v1183 = vunpack.c.l.b16 %v828
        %v1184 = vunpack.c.h.b16 %v828
        %v1185 = vunpack.c.l.b16 %v829
        %v1186 = vunpack.c.h.b16 %v829
        %v1187 = vunpack.c.l.b16 %v830
        %v1188 = vunpack.c.h.b16 %v830
        %v1189 = vunpack.c.l.b16 %v831
        %v1190 = vunpack.c.h.b16 %v831
        %v1191 = vunpack.c.l.b16 %v832
        %v1192 = vunpack.c.h.b16 %v832
        %v1193 = vunpack.c.l.b16 %v833
        %v1194 = vunpack.c.h.b16 %v833
        %v1195 = vunpack.c.l.b16 %v834
        %v1196 = vunpack.c.h.b16 %v834
        %v1197 = vunpack.c.l.b16 %v835
        %v1198 = vunpack.c.h.b16 %v835
        %v1199 = vunpack.c.l.b16 %v836
        %v1200 = vunpack.c.h.b16 %v836
        %v1201 = vunpack.c.l.b16 %v837
        %v1202 = vunpack.c.h.b16 %v837
        %v1203 = vunpack.c.l.b16 %v838
        %v1204 = vunpack.c.h.b16 %v838
        %v1205 = vunpack.c.l.b16 %v839
        %v1206 = vunpack.c.h.b16 %v839
        %v1207 = vunpack.c.l.b16 %v840
        %v1208 = vunpack.c.h.b16 %v840
        %v1209 = vunpack.c.l.b16 %v841
        %v1210 = vunpack.c.h.b16 %v841
        %v1211 = vunpack.c.l.b16 %v842
        %v1212 = vunpack.c.h.b16 %v842
        %v1213 = vunpack.c.l.b16 %v843
        %v1214 = vunpack.c.h.b16 %v843
        %v1215 = vunpack.c.l.b16 %v844
        %v1216 = vunpack.c.h.b16 %v844
        %v1217 = vunpack.c.l.b16 %v845
        %v1218 = vunpack.c.h.b16 %v845
        %v1219 = vunpack.c.l.b16 %v846
        %v1220 = vunpack.c.h.b16 %v846
        %v1221 = vunpack.c.l.b16 %v847
        %v1222 = vunpack.c.h.b16 %v847
        %v1223 = vunpack.c.l.b16 %v848
        %v1224 = vunpack.c.h.b16 %v848
        %v1225 = vunpack.c.l.b16 %v849
        %v1226 = vunpack.c.h.b16 %v849
        %v1227 = vunpack.c.l.b16 %v850
        %v1228 = vunpack.c.h.b16 %v850
        %v1229 = vunpack.c.l.b16 %v851
        %v1230 = vunpack.c.h.b16 %v851
        %v1231 = vunpack.c.l.b16 %v852
        %v1232 = vunpack.c.h.b16 %v852
        %v1233 = vunpack.c.l.b16 %v853
        %v1234 = vunpack.c.h.b16 %v853
        %v1235 = vunpack.c.l.b16 %v854
        %v1236 = vunpack.c.h.b16 %v854
        %v1237 = vunpack.c.l.b16 %v855
        %v1238 = vunpack.c.h.b16 %v855
        %v1239 = vunpack.c.l.b16 %v856
        %v1240 = vunpack.c.h.b16 %v856
        %v1241 = vpack.c.b16 %v989, %v985
        %v1242 = vpack.c.b16 %v990, %v986
        %v1243 = vpack.c.b16 %v991, %v987
        %v1244 = vpack.c.b16 %v992, %v988
        %v1245 = vpack.c.b16 %v997, %v993
        %v1246 = vpack.c.b16 %v998, %v994
        %v1247 = vpack.c.b16 %v999, %v995
        %v1248 = vpack.c.b16 %v1000, %v996
        %v1249 = vpack.c.b16 %v1005, %v1001
        %v1250 = vpack.c.b16 %v1006, %v1002
        %v1251 = vpack.c.b16 %v1007, %v1003
        %v1252 = vpack.c.b16 %v1008, %v1004
        %v1253 = vpack.c.b16 %v1013, %v1009
        %v1254 = vpack.c.b16 %v1014, %v1010
        %v1255 = vpack.c.b16 %v1015, %v1011
        %v1256 = vpack.c.b16 %v1016, %v1012
        %v1257 = vpack.c.b16 %v1021, %v1017
        %v1258 = vpack.c.b16 %v1022, %v1018
        %v1259 = vpack.c.b16 %v1023, %v1019
        %v1260 = vpack.c.b16 %v1024, %v1020
        %v1261 = vpack.c.b16 %v1029, %v1025
        %v1262 = vpack.c.b16 %v1030, %v1026
        %v1263 = vpack.c.b16 %v1031, %v1027
        %v1264 = vpack.c.b16 %v1032, %v1028
        %v1265 = vpack.c.b16 %v1037, %v1033
        %v1266 = vpack.c.b16 %v1038, %v1034
        %v1267 = vpack.c.b16 %v1039, %v1035
        %v1268 = vpack.c.b16 %v1040, %v1036
        %v1269 = vpack.c.b16 %v1045, %v1041
        %v1270 = vpack.c.b16 %v1046, %v1042
        %v1271 = vpack.c.b16 %v1047, %v1043
        %v1272 = vpack.c.b16 %v1048, %v1044
        %v1273 = vpack.c.b16 %v1053, %v1049
        %v1274 = vpack.c.b16 %v1054, %v1050
        %v1275 = vpack.c.b16 %v1055, %v1051
        %v1276 = vpack.c.b16 %v1056, %v1052
        %v1277 = vpack.c.b16 %v1061, %v1057
        %v1278 = vpack.c.b16 %v1062, %v1058
        %v1279 = vpack.c.b16 %v1063, %v1059
        %v1280 = vpack.c.b16 %v1064, %v1060
        %v1281 = vpack.c.b16 %v1069, %v1065
        %v1282 = vpack.c.b16 %v1070, %v1066
        %v1283 = vpack.c.b16 %v1071, %v1067
        %v1284 = vpack.c.b16 %v1072, %v1068
        %v1285 = vpack.c.b16 %v1077, %v1073
        %v1286 = vpack.c.b16 %v1078, %v1074
        %v1287 = vpack.c.b16 %v1079, %v1075
        %v1288 = vpack.c.b16 %v1080, %v1076
        %v1289 = vpack.c.b16 %v1085, %v1081
        %v1290 = vpack.c.b16 %v1086, %v1082
        %v1291 = vpack.c.b16 %v1087, %v1083
        %v1292 = vpack.c.b16 %v1088, %v1084
        %v1293 = vpack.c.b16 %v1093, %v1089
        %v1294 = vpack.c.b16 %v1094, %v1090
        %v1295 = vpack.c.b16 %v1095, %v1091
        %v1296 = vpack.c.b16 %v1096, %v1092
        %v1297 = vpack.c.b16 %v1101, %v1097
        %v1298 = vpack.c.b16 %v1102, %v1098
        %v1299 = vpack.c.b16 %v1103, %v1099
        %v1300 = vpack.c.b16 %v1104, %v1100
        %v1301 = vpack.c.b16 %v1109, %v1105
        %v1302 = vpack.c.b16 %v1110, %v1106
        %v1303 = vpack.c.b16 %v1111, %v1107
        %v1304 = vpack.c.b16 %v1112, %v1108
        %v1305 = vpack.c.b16 %v1117, %v1113
        %v1306 = vpack.c.b16 %v1118, %v1114
        %v1307 = vpack.c.b16 %v1119, %v1115
        %v1308 = vpack.c.b16 %v1120, %v1116
        %v1309 = vpack.c.b16 %v1125, %v1121
        %v1310 = vpack.c.b16 %v1126, %v1122
        %v1311 = vpack.c.b16 %v1127, %v1123
        %v1312 = vpack.c.b16 %v1128, %v1124
        %v1313 = vpack.c.b16 %v1133, %v1129
        %v1314 = vpack.c.b16 %v1134, %v1130
        %v1315 = vpack.c.b16 %v1135, %v1131
        %v1316 = vpack.c.b16 %v1136, %v1132
        %v1317 = vpack.c.b16 %v1141, %v1137
        %v1318 = vpack.c.b16 %v1142, %v1138
        %v1319 = vpack.c.b16 %v1143, %v1139
        %v1320 = vpack.c.b16 %v1144, %v1140
        %v1321 = vpack.c.b16 %v1149, %v1145
        %v1322 = vpack.c.b16 %v1150, %v1146
        %v1323 = vpack.c.b16 %v1151, %v1147
        %v1324 = vpack.c.b16 %v1152, %v1148
        %v1325 = vpack.c.b16 %v1157, %v1153
        %v1326 = vpack.c.b16 %v1158, %v1154
        %v1327 = vpack.c.b16 %v1159, %v1155
        %v1328 = vpack.c.b16 %v1160, %v1156
        %v1329 = vpack.c.b16 %v1165, %v1161
        %v1330 = vpack.c.b16 %v1166, %v1162
        %v1331 = vpack.c.b16 %v1167, %v1163
        %v1332 = vpack.c.b16 %v1168, %v1164
        %v1333 = vpack.c.b16 %v1173, %v1169
        %v1334 = vpack.c.b16 %v1174, %v1170
        %v1335 = vpack.c.b16 %v1175, %v1171
        %v1336 = vpack.c.b16 %v1176, %v1172
        %v1337 = vpack.c.b16 %v1181, %v1177
        %v1338 = vpack.c.b16 %v1182, %v1178
        %v1339 = vpack.c.b16 %v1183, %v1179
        %v1340 = vpack.c.b16 %v1184, %v1180
        %v1341 = vpack.c.b16 %v1189, %v1185
        %v1342 = vpack.c.b16 %v1190, %v1186
        %v1343 = vpack.c.b16 %v1191, %v1187
        %v1344 = vpack.c.b16 %v1192, %v1188
        %v1345 = vpack.c.b16 %v1197, %v1193
        %v1346 = vpack.c.b16 %v1198, %v1194
        %v1347 = vpack.c.b16 %v1199, %v1195
        %v1348 = vpack.c.b16 %v1200, %v1196
        %v1349 = vpack.c.b16 %v1205, %v1201
        %v1350 = vpack.c.b16 %v1206, %v1202
        %v1351 = vpack.c.b16 %v1207, %v1203
        %v1352 = vpack.c.b16 %v1208, %v1204
        %v1353 = vpack.c.b16 %v1213, %v1209
        %v1354 = vpack.c.b16 %v1214, %v1210
        %v1355 = vpack.c.b16 %v1215, %v1211
        %v1356 = vpack.c.b16 %v1216, %v1212
        %v1357 = vpack.c.b16 %v1221, %v1217
        %v1358 = vpack.c.b16 %v1222, %v1218
        %v1359 = vpack.c.b16 %v1223, %v1219
        %v1360 = vpack.c.b16 %v1224, %v1220
        %v1361 = vpack.c.b16 %v1229, %v1225
        %v1362 = vpack.c.b16 %v1230, %v1226
        %v1363 = vpack.c.b16 %v1231, %v1227
        %v1364 = vpack.c.b16 %v1232, %v1228
        %v1365 = vpack.c.b16 %v1237, %v1233
        %v1366 = vpack.c.b16 %v1238, %v1234
        %v1367 = vpack.c.b16 %v1239, %v1235
        %v1368 = vpack.c.b16 %v1240, %v1236
        %1497 = vmatprep.subr.bf16.mxu0 %v1242
        %1498 = vmatpush1.bf16.msra.mxu0 %v1241
        %1499 = vmatprep.subr.bf16.mxu0 %v1246
        %1500 = vmatpush1.bf16.msra.mxu0 %v1245
        %1501 = vmatprep.subr.bf16.mxu0 %v1250
        %1502 = vmatpush1.bf16.msra.mxu0 %v1249
        %1503 = vmatprep.subr.bf16.mxu0 %v1254
        %1504 = vmatpush1.bf16.msra.mxu0 %v1253
        %1505 = vmatprep.subr.bf16.mxu0 %v1258
        %1506 = vmatpush1.bf16.msra.mxu0 %v1257
        %1507 = vmatprep.subr.bf16.mxu0 %v1262
        %1508 = vmatpush1.bf16.msra.mxu0 %v1261
        %1509 = vmatprep.subr.bf16.mxu0 %v1266
        %1510 = vmatpush1.bf16.msra.mxu0 %v1265
        %1511 = vmatprep.subr.bf16.mxu0 %v1270
        %1512 = vmatpush1.bf16.msra.mxu0 %v1269
        %1513 = vmatprep.subr.bf16.mxu0 %v1274
        %1514 = vmatpush1.bf16.msra.mxu0 %v1273
        %1515 = vmatprep.subr.bf16.mxu0 %v1278
        %1516 = vmatpush1.bf16.msra.mxu0 %v1277
        %1517 = vmatprep.subr.bf16.mxu0 %v1282
        %1518 = vmatpush1.bf16.msra.mxu0 %v1281
        %1519 = vmatprep.subr.bf16.mxu0 %v1286
        %1520 = vmatpush1.bf16.msra.mxu0 %v1285
        %1521 = vmatprep.subr.bf16.mxu0 %v1290
        %1522 = vmatpush1.bf16.msra.mxu0 %v1289
        %1523 = vmatprep.subr.bf16.mxu0 %v1294
        %1524 = vmatpush1.bf16.msra.mxu0 %v1293
        %1525 = vmatprep.subr.bf16.mxu0 %v1298
        %1526 = vmatpush1.bf16.msra.mxu0 %v1297
        %1527 = vmatprep.subr.bf16.mxu0 %v1302
        %1528 = vmatpush1.bf16.msra.mxu0 %v1301
        %1529 = vmatprep.mubr.bf16.mxu0 %v647
        %1530 = vmatmul.mubr.bf16.gmra.mrb[0].mxu0 %v635
        %v1531 = vpop.f32.mrb[0].mxu0
        %v1532 = vadd.f32 0.0, %v1531
        %v1533 = vpop.f32.mrb[0].mxu0
        %v1534 = vadd.f32 0.0, %v1533
        %v1535 = vpop.f32.mrb[0].mxu0
        %v1536 = vadd.f32 0.0, %v1535
        %v1537 = vpop.f32.mrb[0].mxu0
        %v1538 = vadd.f32 0.0, %v1537
        %1539 = vmatprep.mubr.bf16.mxu0 %v695
        %1540 = vmatmul.mubr.bf16.gmra.mrb[0].mxu0 %v683
        %v1541 = vpop.f32.mrb[0].mxu0
        %v1542 = vadd.f32 0.0, %v1541
        %v1543 = vpop.f32.mrb[0].mxu0
        %v1544 = vadd.f32 0.0, %v1543
        %v1545 = vpop.f32.mrb[0].mxu0
        %v1546 = vadd.f32 0.0, %v1545
        %v1547 = vpop.f32.mrb[0].mxu0
        %v1548 = vadd.f32 0.0, %v1547
        %1549 = vdwg.mxu0
        %1550 = vmatprep.subr.bf16.mxu0 %v1306
        %1551 = vmatpush1.bf16.msra.mxu0 %v1305
        %1552 = vmatprep.subr.bf16.mxu0 %v1310
        %1553 = vmatpush1.bf16.msra.mxu0 %v1309
        %1554 = vmatprep.subr.bf16.mxu0 %v1314
        %1555 = vmatpush1.bf16.msra.mxu0 %v1313
        %1556 = vmatprep.subr.bf16.mxu0 %v1318
        %1557 = vmatpush1.bf16.msra.mxu0 %v1317
        %1558 = vmatprep.subr.bf16.mxu0 %v1322
        %1559 = vmatpush1.bf16.msra.mxu0 %v1321
        %1560 = vmatprep.subr.bf16.mxu0 %v1326
        %1561 = vmatpush1.bf16.msra.mxu0 %v1325
        %1562 = vmatprep.subr.bf16.mxu0 %v1330
        %1563 = vmatpush1.bf16.msra.mxu0 %v1329
        %1564 = vmatprep.subr.bf16.mxu0 %v1334
        %1565 = vmatpush1.bf16.msra.mxu0 %v1333
        %1566 = vmatprep.subr.bf16.mxu0 %v1338
        %1567 = vmatpush1.bf16.msra.mxu0 %v1337
        %1568 = vmatprep.subr.bf16.mxu0 %v1342
        %1569 = vmatpush1.bf16.msra.mxu0 %v1341
        %1570 = vmatprep.subr.bf16.mxu0 %v1346
        %1571 = vmatpush1.bf16.msra.mxu0 %v1345
        %1572 = vmatprep.subr.bf16.mxu0 %v1350
        %1573 = vmatpush1.bf16.msra.mxu0 %v1349
        %1574 = vmatprep.subr.bf16.mxu0 %v1354
        %1575 = vmatpush1.bf16.msra.mxu0 %v1353
        %1576 = vmatprep.subr.bf16.mxu0 %v1358
        %1577 = vmatpush1.bf16.msra.mxu0 %v1357
        %1578 = vmatprep.subr.bf16.mxu0 %v1362
        %1579 = vmatpush1.bf16.msra.mxu0 %v1361
        %1580 = vmatprep.subr.bf16.mxu0 %v1366
        %1581 = vmatpush1.bf16.msra.mxu0 %v1365
        %1582 = vmatprep.mubr.bf16.mxu0 %v671
        %1583 = vmatmul.mubr.bf16.gmra.mrb[0].mxu0 %v659
        %v1584 = vpop.f32.mrb[0].mxu0
        %v1585 = vadd.f32 %v1532, %v1584
        %v1586 = vpop.f32.mrb[0].mxu0
        %v1587 = vadd.f32 %v1534, %v1586
        %v1588 = vpop.f32.mrb[0].mxu0
        %v1589 = vadd.f32 %v1536, %v1588
        %v1590 = vpop.f32.mrb[0].mxu0
        %v1591 = vadd.f32 %v1538, %v1590
        %1592 = vmatprep.mubr.bf16.mxu0 %v719
        %1593 = vmatmul.mubr.bf16.gmra.mrb[0].mxu0 %v707
        %v1594 = vpop.f32.mrb[0].mxu0
        %v1595 = vadd.f32 %v1542, %v1594
        %v1596 = vpop.f32.mrb[0].mxu0
        %v1597 = vadd.f32 %v1544, %v1596
        %v1598 = vpop.f32.mrb[0].mxu0
        %v1599 = vadd.f32 %v1546, %v1598
        %v1600 = vpop.f32.mrb[0].mxu0
        %v1601 = vadd.f32 %v1548, %v1600
        %1602 = vdwg.mxu0
        %1603 = vmatprep.subr.bf16.mxu0 %v1244
        %1604 = vmatpush1.bf16.msra.mxu0 %v1243
        %1605 = vmatprep.subr.bf16.mxu0 %v1248
        %1606 = vmatpush1.bf16.msra.mxu0 %v1247
        %1607 = vmatprep.subr.bf16.mxu0 %v1252
        %1608 = vmatpush1.bf16.msra.mxu0 %v1251
        %1609 = vmatprep.subr.bf16.mxu0 %v1256
        %1610 = vmatpush1.bf16.msra.mxu0 %v1255
        %1611 = vmatprep.subr.bf16.mxu0 %v1260
        %1612 = vmatpush1.bf16.msra.mxu0 %v1259
        %1613 = vmatprep.subr.bf16.mxu0 %v1264
        %1614 = vmatpush1.bf16.msra.mxu0 %v1263
        %1615 = vmatprep.subr.bf16.mxu0 %v1268
        %1616 = vmatpush1.bf16.msra.mxu0 %v1267
        %1617 = vmatprep.subr.bf16.mxu0 %v1272
        %1618 = vmatpush1.bf16.msra.mxu0 %v1271
        %1619 = vmatprep.subr.bf16.mxu0 %v1276
        %1620 = vmatpush1.bf16.msra.mxu0 %v1275
        %1621 = vmatprep.subr.bf16.mxu0 %v1280
        %1622 = vmatpush1.bf16.msra.mxu0 %v1279
        %1623 = vmatprep.subr.bf16.mxu0 %v1284
        %1624 = vmatpush1.bf16.msra.mxu0 %v1283
        %1625 = vmatprep.subr.bf16.mxu0 %v1288
        %1626 = vmatpush1.bf16.msra.mxu0 %v1287
        %1627 = vmatprep.subr.bf16.mxu0 %v1292
        %1628 = vmatpush1.bf16.msra.mxu0 %v1291
        %1629 = vmatprep.subr.bf16.mxu0 %v1296
        %1630 = vmatpush1.bf16.msra.mxu0 %v1295
        %1631 = vmatprep.subr.bf16.mxu0 %v1300
        %1632 = vmatpush1.bf16.msra.mxu0 %v1299
        %1633 = vmatprep.subr.bf16.mxu0 %v1304
        %1634 = vmatpush1.bf16.msra.mxu0 %v1303
        %1635 = vmatprep.mubr.bf16.mxu0 %v647
        %1636 = vmatmul.mubr.bf16.gmra.mrb[0].mxu0 %v635
        %v1637 = vpop.f32.mrb[0].mxu0
        %v1638 = vadd.f32 0.0, %v1637
        %v1639 = vpop.f32.mrb[0].mxu0
        %v1640 = vadd.f32 0.0, %v1639
        %v1641 = vpop.f32.mrb[0].mxu0
        %v1642 = vadd.f32 0.0, %v1641
        %v1643 = vpop.f32.mrb[0].mxu0
        %v1644 = vadd.f32 0.0, %v1643
        %1645 = vmatprep.mubr.bf16.mxu0 %v695
        %1646 = vmatmul.mubr.bf16.gmra.mrb[0].mxu0 %v683
        %v1647 = vpop.f32.mrb[0].mxu0
        %v1648 = vadd.f32 0.0, %v1647
        %v1649 = vpop.f32.mrb[0].mxu0
        %v1650 = vadd.f32 0.0, %v1649
        %v1651 = vpop.f32.mrb[0].mxu0
        %v1652 = vadd.f32 0.0, %v1651
        %v1653 = vpop.f32.mrb[0].mxu0
        %v1654 = vadd.f32 0.0, %v1653
        %1655 = vdwg.mxu0
        %1656 = vmatprep.subr.bf16.mxu0 %v1308
        %1657 = vmatpush1.bf16.msra.mxu0 %v1307
        %1658 = vmatprep.subr.bf16.mxu0 %v1312
        %1659 = vmatpush1.bf16.msra.mxu0 %v1311
        %1660 = vmatprep.subr.bf16.mxu0 %v1316
        %1661 = vmatpush1.bf16.msra.mxu0 %v1315
        %1662 = vmatprep.subr.bf16.mxu0 %v1320
        %1663 = vmatpush1.bf16.msra.mxu0 %v1319
        %1664 = vmatprep.subr.bf16.mxu0 %v1324
        %1665 = vmatpush1.bf16.msra.mxu0 %v1323
        %1666 = vmatprep.subr.bf16.mxu0 %v1328
        %1667 = vmatpush1.bf16.msra.mxu0 %v1327
        %1668 = vmatprep.subr.bf16.mxu0 %v1332
        %1669 = vmatpush1.bf16.msra.mxu0 %v1331
        %1670 = vmatprep.subr.bf16.mxu0 %v1336
        %1671 = vmatpush1.bf16.msra.mxu0 %v1335
        %1672 = vmatprep.subr.bf16.mxu0 %v1340
        %1673 = vmatpush1.bf16.msra.mxu0 %v1339
        %1674 = vmatprep.subr.bf16.mxu0 %v1344
        %1675 = vmatpush1.bf16.msra.mxu0 %v1343
        %1676 = vmatprep.subr.bf16.mxu0 %v1348
        %1677 = vmatpush1.bf16.msra.mxu0 %v1347
        %1678 = vmatprep.subr.bf16.mxu0 %v1352
        %1679 = vmatpush1.bf16.msra.mxu0 %v1351
        %1680 = vmatprep.subr.bf16.mxu0 %v1356
        %1681 = vmatpush1.bf16.msra.mxu0 %v1355
        %1682 = vmatprep.subr.bf16.mxu0 %v1360
        %1683 = vmatpush1.bf16.msra.mxu0 %v1359
        %1684 = vmatprep.subr.bf16.mxu0 %v1364
        %1685 = vmatpush1.bf16.msra.mxu0 %v1363
        %1686 = vmatprep.subr.bf16.mxu0 %v1368
        %1687 = vmatpush1.bf16.msra.mxu0 %v1367
        %1688 = vmatprep.mubr.bf16.mxu0 %v671
        %1689 = vmatmul.mubr.bf16.gmra.mrb[0].mxu0 %v659
        %v1690 = vpop.f32.mrb[0].mxu0
        %v1691 = vadd.f32 %v1638, %v1690
        %v1692 = vpop.f32.mrb[0].mxu0
        %v1693 = vadd.f32 %v1640, %v1692
        %v1694 = vpop.f32.mrb[0].mxu0
        %v1695 = vadd.f32 %v1642, %v1694
        %v1696 = vpop.f32.mrb[0].mxu0
        %v1697 = vadd.f32 %v1644, %v1696
        %1698 = vmatprep.mubr.bf16.mxu0 %v719
        %1699 = vmatmul.mubr.bf16.gmra.mrb[0].mxu0 %v707
        %v1700 = vpop.f32.mrb[0].mxu0
        %v1701 = vadd.f32 %v1648, %v1700
        %v1702 = vpop.f32.mrb[0].mxu0
        %v1703 = vadd.f32 %v1650, %v1702
        %v1704 = vpop.f32.mrb[0].mxu0
        %v1705 = vadd.f32 %v1652, %v1704
        %v1706 = vpop.f32.mrb[0].mxu0
        %v1707 = vadd.f32 %v1654, %v1706
        %1708 = vdwg.mxu0
        %v1837 = vunpack.c.l.b16 %v495
        %v1838 = vunpack.c.h.b16 %v495
        %v1839 = vunpack.c.l.b16 %v496
        %v1840 = vunpack.c.h.b16 %v496
        %v1841 = vunpack.c.l.b16 %v497
        %v1842 = vunpack.c.h.b16 %v497
        %v1843 = vunpack.c.l.b16 %v498
        %v1844 = vunpack.c.h.b16 %v498
        %v1845 = vunpack.c.l.b16 %v499
        %v1846 = vunpack.c.h.b16 %v499
        %v1847 = vunpack.c.l.b16 %v500
        %v1848 = vunpack.c.h.b16 %v500
        %v1849 = vunpack.c.l.b16 %v501
        %v1850 = vunpack.c.h.b16 %v501
        %v1851 = vunpack.c.l.b16 %v502
        %v1852 = vunpack.c.h.b16 %v502
        %v1853 = vunpack.c.l.b16 %v503
        %v1854 = vunpack.c.h.b16 %v503
        %v1855 = vunpack.c.l.b16 %v504
        %v1856 = vunpack.c.h.b16 %v504
        %v1857 = vunpack.c.l.b16 %v505
        %v1858 = vunpack.c.h.b16 %v505
        %v1859 = vunpack.c.l.b16 %v506
        %v1860 = vunpack.c.h.b16 %v506
        %v1861 = vunpack.c.l.b16 %v507
        %v1862 = vunpack.c.h.b16 %v507
        %v1863 = vunpack.c.l.b16 %v508
        %v1864 = vunpack.c.h.b16 %v508
        %v1865 = vunpack.c.l.b16 %v509
        %v1866 = vunpack.c.h.b16 %v509
        %v1867 = vunpack.c.l.b16 %v510
        %v1868 = vunpack.c.h.b16 %v510
        %v1869 = vunpack.c.l.b16 %v511
        %v1870 = vunpack.c.h.b16 %v511
        %v1871 = vunpack.c.l.b16 %v512
        %v1872 = vunpack.c.h.b16 %v512
        %v1873 = vunpack.c.l.b16 %v513
        %v1874 = vunpack.c.h.b16 %v513
        %v1875 = vunpack.c.l.b16 %v514
        %v1876 = vunpack.c.h.b16 %v514
        %v1877 = vunpack.c.l.b16 %v515
        %v1878 = vunpack.c.h.b16 %v515
        %v1879 = vunpack.c.l.b16 %v516
        %v1880 = vunpack.c.h.b16 %v516
        %v1881 = vunpack.c.l.b16 %v517
        %v1882 = vunpack.c.h.b16 %v517
        %v1883 = vunpack.c.l.b16 %v518
        %v1884 = vunpack.c.h.b16 %v518
        %v1885 = vunpack.c.l.b16 %v519
        %v1886 = vunpack.c.h.b16 %v519
        %v1887 = vunpack.c.l.b16 %v520
        %v1888 = vunpack.c.h.b16 %v520
        %v1889 = vunpack.c.l.b16 %v521
        %v1890 = vunpack.c.h.b16 %v521
        %v1891 = vunpack.c.l.b16 %v522
        %v1892 = vunpack.c.h.b16 %v522
        %v1893 = vunpack.c.l.b16 %v523
        %v1894 = vunpack.c.h.b16 %v523
        %v1895 = vunpack.c.l.b16 %v524
        %v1896 = vunpack.c.h.b16 %v524
        %v1897 = vunpack.c.l.b16 %v525
        %v1898 = vunpack.c.h.b16 %v525
        %v1899 = vunpack.c.l.b16 %v526
        %v1900 = vunpack.c.h.b16 %v526
        %v1901 = vunpack.c.l.b16 %v527
        %v1902 = vunpack.c.h.b16 %v527
        %v1903 = vunpack.c.l.b16 %v528
        %v1904 = vunpack.c.h.b16 %v528
        %v1905 = vunpack.c.l.b16 %v529
        %v1906 = vunpack.c.h.b16 %v529
        %v1907 = vunpack.c.l.b16 %v530
        %v1908 = vunpack.c.h.b16 %v530
        %v1909 = vunpack.c.l.b16 %v531
        %v1910 = vunpack.c.h.b16 %v531
        %v1911 = vunpack.c.l.b16 %v532
        %v1912 = vunpack.c.h.b16 %v532
        %v1913 = vunpack.c.l.b16 %v533
        %v1914 = vunpack.c.h.b16 %v533
        %v1915 = vunpack.c.l.b16 %v534
        %v1916 = vunpack.c.h.b16 %v534
        %v1917 = vunpack.c.l.b16 %v535
        %v1918 = vunpack.c.h.b16 %v535
        %v1919 = vunpack.c.l.b16 %v536
        %v1920 = vunpack.c.h.b16 %v536
        %v1921 = vunpack.c.l.b16 %v537
        %v1922 = vunpack.c.h.b16 %v537
        %v1923 = vunpack.c.l.b16 %v538
        %v1924 = vunpack.c.h.b16 %v538
        %v1925 = vunpack.c.l.b16 %v539
        %v1926 = vunpack.c.h.b16 %v539
        %v1927 = vunpack.c.l.b16 %v540
        %v1928 = vunpack.c.h.b16 %v540
        %v1929 = vunpack.c.l.b16 %v541
        %v1930 = vunpack.c.h.b16 %v541
        %v1931 = vunpack.c.l.b16 %v542
        %v1932 = vunpack.c.h.b16 %v542
        %v1933 = vunpack.c.l.b16 %v543
        %v1934 = vunpack.c.h.b16 %v543
        %v1935 = vunpack.c.l.b16 %v544
        %v1936 = vunpack.c.h.b16 %v544
        %v1937 = vunpack.c.l.b16 %v545
        %v1938 = vunpack.c.h.b16 %v545
        %v1939 = vunpack.c.l.b16 %v546
        %v1940 = vunpack.c.h.b16 %v546
        %v1941 = vunpack.c.l.b16 %v547
        %v1942 = vunpack.c.h.b16 %v547
        %v1943 = vunpack.c.l.b16 %v548
        %v1944 = vunpack.c.h.b16 %v548
        %v1945 = vunpack.c.l.b16 %v549
        %v1946 = vunpack.c.h.b16 %v549
        %v1947 = vunpack.c.l.b16 %v550
        %v1948 = vunpack.c.h.b16 %v550
        %v1949 = vunpack.c.l.b16 %v551
        %v1950 = vunpack.c.h.b16 %v551
        %v1951 = vunpack.c.l.b16 %v552
        %v1952 = vunpack.c.h.b16 %v552
        %v1953 = vunpack.c.l.b16 %v553
        %v1954 = vunpack.c.h.b16 %v553
        %v1955 = vunpack.c.l.b16 %v554
        %v1956 = vunpack.c.h.b16 %v554
        %v1957 = vunpack.c.l.b16 %v555
        %v1958 = vunpack.c.h.b16 %v555
        %v1959 = vunpack.c.l.b16 %v556
        %v1960 = vunpack.c.h.b16 %v556
        %v1961 = vunpack.c.l.b16 %v557
        %v1962 = vunpack.c.h.b16 %v557
        %v1963 = vunpack.c.l.b16 %v558
        %v1964 = vunpack.c.h.b16 %v558
        %v1965 = vunpack.c.l.b16 %v559
        %v1966 = vunpack.c.h.b16 %v559
        %v1967 = vunpack.c.l.b16 %v560
        %v1968 = vunpack.c.h.b16 %v560
        %v1969 = vunpack.c.l.b16 %v561
        %v1970 = vunpack.c.h.b16 %v561
        %v1971 = vunpack.c.l.b16 %v562
        %v1972 = vunpack.c.h.b16 %v562
        %v1973 = vunpack.c.l.b16 %v563
        %v1974 = vunpack.c.h.b16 %v563
        %v1975 = vunpack.c.l.b16 %v564
        %v1976 = vunpack.c.h.b16 %v564
        %v1977 = vunpack.c.l.b16 %v565
        %v1978 = vunpack.c.h.b16 %v565
        %v1979 = vunpack.c.l.b16 %v566
        %v1980 = vunpack.c.h.b16 %v566
        %v1981 = vunpack.c.l.b16 %v567
        %v1982 = vunpack.c.h.b16 %v567
        %v1983 = vunpack.c.l.b16 %v568
        %v1984 = vunpack.c.h.b16 %v568
        %v1985 = vunpack.c.l.b16 %v569
        %v1986 = vunpack.c.h.b16 %v569
        %v1987 = vunpack.c.l.b16 %v570
        %v1988 = vunpack.c.h.b16 %v570
        %v1989 = vunpack.c.l.b16 %v571
        %v1990 = vunpack.c.h.b16 %v571
        %v1991 = vunpack.c.l.b16 %v572
        %v1992 = vunpack.c.h.b16 %v572
        %v1993 = vunpack.c.l.b16 %v573
        %v1994 = vunpack.c.h.b16 %v573
        %v1995 = vunpack.c.l.b16 %v574
        %v1996 = vunpack.c.h.b16 %v574
        %v1997 = vunpack.c.l.b16 %v575
        %v1998 = vunpack.c.h.b16 %v575
        %v1999 = vunpack.c.l.b16 %v576
        %v2000 = vunpack.c.h.b16 %v576
        %v2001 = vunpack.c.l.b16 %v577
        %v2002 = vunpack.c.h.b16 %v577
        %v2003 = vunpack.c.l.b16 %v578
        %v2004 = vunpack.c.h.b16 %v578
        %v2005 = vunpack.c.l.b16 %v579
        %v2006 = vunpack.c.h.b16 %v579
        %v2007 = vunpack.c.l.b16 %v580
        %v2008 = vunpack.c.h.b16 %v580
        %v2009 = vunpack.c.l.b16 %v581
        %v2010 = vunpack.c.h.b16 %v581
        %v2011 = vunpack.c.l.b16 %v582
        %v2012 = vunpack.c.h.b16 %v582
        %v2013 = vunpack.c.l.b16 %v583
        %v2014 = vunpack.c.h.b16 %v583
        %v2015 = vunpack.c.l.b16 %v584
        %v2016 = vunpack.c.h.b16 %v584
        %v2017 = vunpack.c.l.b16 %v585
        %v2018 = vunpack.c.h.b16 %v585
        %v2019 = vunpack.c.l.b16 %v586
        %v2020 = vunpack.c.h.b16 %v586
        %v2021 = vunpack.c.l.b16 %v587
        %v2022 = vunpack.c.h.b16 %v587
        %v2023 = vunpack.c.l.b16 %v588
        %v2024 = vunpack.c.h.b16 %v588
        %v2025 = vunpack.c.l.b16 %v589
        %v2026 = vunpack.c.h.b16 %v589
        %v2027 = vunpack.c.l.b16 %v590
        %v2028 = vunpack.c.h.b16 %v590
        %v2029 = vunpack.c.l.b16 %v591
        %v2030 = vunpack.c.h.b16 %v591
        %v2031 = vunpack.c.l.b16 %v592
        %v2032 = vunpack.c.h.b16 %v592
        %v2033 = vunpack.c.l.b16 %v593
        %v2034 = vunpack.c.h.b16 %v593
        %v2035 = vunpack.c.l.b16 %v594
        %v2036 = vunpack.c.h.b16 %v594
        %v2037 = vunpack.c.l.b16 %v595
        %v2038 = vunpack.c.h.b16 %v595
        %v2039 = vunpack.c.l.b16 %v596
        %v2040 = vunpack.c.h.b16 %v596
        %v2041 = vunpack.c.l.b16 %v597
        %v2042 = vunpack.c.h.b16 %v597
        %v2043 = vunpack.c.l.b16 %v598
        %v2044 = vunpack.c.h.b16 %v598
        %v2045 = vunpack.c.l.b16 %v599
        %v2046 = vunpack.c.h.b16 %v599
        %v2047 = vunpack.c.l.b16 %v600
        %v2048 = vunpack.c.h.b16 %v600
        %v2049 = vunpack.c.l.b16 %v601
        %v2050 = vunpack.c.h.b16 %v601
        %v2051 = vunpack.c.l.b16 %v602
        %v2052 = vunpack.c.h.b16 %v602
        %v2053 = vunpack.c.l.b16 %v603
        %v2054 = vunpack.c.h.b16 %v603
        %v2055 = vunpack.c.l.b16 %v604
        %v2056 = vunpack.c.h.b16 %v604
        %v2057 = vunpack.c.l.b16 %v605
        %v2058 = vunpack.c.h.b16 %v605
        %v2059 = vunpack.c.l.b16 %v606
        %v2060 = vunpack.c.h.b16 %v606
        %v2061 = vunpack.c.l.b16 %v607
        %v2062 = vunpack.c.h.b16 %v607
        %v2063 = vunpack.c.l.b16 %v608
        %v2064 = vunpack.c.h.b16 %v608
        %v2065 = vunpack.c.l.b16 %v609
        %v2066 = vunpack.c.h.b16 %v609
        %v2067 = vunpack.c.l.b16 %v610
        %v2068 = vunpack.c.h.b16 %v610
        %v2069 = vunpack.c.l.b16 %v611
        %v2070 = vunpack.c.h.b16 %v611
        %v2071 = vunpack.c.l.b16 %v612
        %v2072 = vunpack.c.h.b16 %v612
        %v2073 = vunpack.c.l.b16 %v613
        %v2074 = vunpack.c.h.b16 %v613
        %v2075 = vunpack.c.l.b16 %v614
        %v2076 = vunpack.c.h.b16 %v614
        %v2077 = vunpack.c.l.b16 %v615
        %v2078 = vunpack.c.h.b16 %v615
        %v2079 = vunpack.c.l.b16 %v616
        %v2080 = vunpack.c.h.b16 %v616
        %v2081 = vunpack.c.l.b16 %v617
        %v2082 = vunpack.c.h.b16 %v617
        %v2083 = vunpack.c.l.b16 %v618
        %v2084 = vunpack.c.h.b16 %v618
        %v2085 = vunpack.c.l.b16 %v619
        %v2086 = vunpack.c.h.b16 %v619
        %v2087 = vunpack.c.l.b16 %v620
        %v2088 = vunpack.c.h.b16 %v620
        %v2089 = vunpack.c.l.b16 %v621
        %v2090 = vunpack.c.h.b16 %v621
        %v2091 = vunpack.c.l.b16 %v622
        %v2092 = vunpack.c.h.b16 %v622
        %v2093 = vpack.c.b16 %v1841, %v1837
        %v2094 = vpack.c.b16 %v1842, %v1838
        %v2095 = vpack.c.b16 %v1843, %v1839
        %v2096 = vpack.c.b16 %v1844, %v1840
        %v2097 = vpack.c.b16 %v1849, %v1845
        %v2098 = vpack.c.b16 %v1850, %v1846
        %v2099 = vpack.c.b16 %v1851, %v1847
        %v2100 = vpack.c.b16 %v1852, %v1848
        %v2101 = vpack.c.b16 %v1857, %v1853
        %v2102 = vpack.c.b16 %v1858, %v1854
        %v2103 = vpack.c.b16 %v1859, %v1855
        %v2104 = vpack.c.b16 %v1860, %v1856
        %v2105 = vpack.c.b16 %v1865, %v1861
        %v2106 = vpack.c.b16 %v1866, %v1862
        %v2107 = vpack.c.b16 %v1867, %v1863
        %v2108 = vpack.c.b16 %v1868, %v1864
        %v2109 = vpack.c.b16 %v1873, %v1869
        %v2110 = vpack.c.b16 %v1874, %v1870
        %v2111 = vpack.c.b16 %v1875, %v1871
        %v2112 = vpack.c.b16 %v1876, %v1872
        %v2113 = vpack.c.b16 %v1881, %v1877
        %v2114 = vpack.c.b16 %v1882, %v1878
        %v2115 = vpack.c.b16 %v1883, %v1879
        %v2116 = vpack.c.b16 %v1884, %v1880
        %v2117 = vpack.c.b16 %v1889, %v1885
        %v2118 = vpack.c.b16 %v1890, %v1886
        %v2119 = vpack.c.b16 %v1891, %v1887
        %v2120 = vpack.c.b16 %v1892, %v1888
        %v2121 = vpack.c.b16 %v1897, %v1893
        %v2122 = vpack.c.b16 %v1898, %v1894
        %v2123 = vpack.c.b16 %v1899, %v1895
        %v2124 = vpack.c.b16 %v1900, %v1896
        %v2125 = vpack.c.b16 %v1905, %v1901
        %v2126 = vpack.c.b16 %v1906, %v1902
        %v2127 = vpack.c.b16 %v1907, %v1903
        %v2128 = vpack.c.b16 %v1908, %v1904
        %v2129 = vpack.c.b16 %v1913, %v1909
        %v2130 = vpack.c.b16 %v1914, %v1910
        %v2131 = vpack.c.b16 %v1915, %v1911
        %v2132 = vpack.c.b16 %v1916, %v1912
        %v2133 = vpack.c.b16 %v1921, %v1917
        %v2134 = vpack.c.b16 %v1922, %v1918
        %v2135 = vpack.c.b16 %v1923, %v1919
        %v2136 = vpack.c.b16 %v1924, %v1920
        %v2137 = vpack.c.b16 %v1929, %v1925
        %v2138 = vpack.c.b16 %v1930, %v1926
        %v2139 = vpack.c.b16 %v1931, %v1927
        %v2140 = vpack.c.b16 %v1932, %v1928
        %v2141 = vpack.c.b16 %v1937, %v1933
        %v2142 = vpack.c.b16 %v1938, %v1934
        %v2143 = vpack.c.b16 %v1939, %v1935
        %v2144 = vpack.c.b16 %v1940, %v1936
        %v2145 = vpack.c.b16 %v1945, %v1941
        %v2146 = vpack.c.b16 %v1946, %v1942
        %v2147 = vpack.c.b16 %v1947, %v1943
        %v2148 = vpack.c.b16 %v1948, %v1944
        %v2149 = vpack.c.b16 %v1953, %v1949
        %v2150 = vpack.c.b16 %v1954, %v1950
        %v2151 = vpack.c.b16 %v1955, %v1951
        %v2152 = vpack.c.b16 %v1956, %v1952
        %v2153 = vpack.c.b16 %v1961, %v1957
        %v2154 = vpack.c.b16 %v1962, %v1958
        %v2155 = vpack.c.b16 %v1963, %v1959
        %v2156 = vpack.c.b16 %v1964, %v1960
        %v2157 = vpack.c.b16 %v1969, %v1965
        %v2158 = vpack.c.b16 %v1970, %v1966
        %v2159 = vpack.c.b16 %v1971, %v1967
        %v2160 = vpack.c.b16 %v1972, %v1968
        %v2161 = vpack.c.b16 %v1977, %v1973
        %v2162 = vpack.c.b16 %v1978, %v1974
        %v2163 = vpack.c.b16 %v1979, %v1975
        %v2164 = vpack.c.b16 %v1980, %v1976
        %v2165 = vpack.c.b16 %v1985, %v1981
        %v2166 = vpack.c.b16 %v1986, %v1982
        %v2167 = vpack.c.b16 %v1987, %v1983
        %v2168 = vpack.c.b16 %v1988, %v1984
        %v2169 = vpack.c.b16 %v1993, %v1989
        %v2170 = vpack.c.b16 %v1994, %v1990
        %v2171 = vpack.c.b16 %v1995, %v1991
        %v2172 = vpack.c.b16 %v1996, %v1992
        %v2173 = vpack.c.b16 %v2001, %v1997
        %v2174 = vpack.c.b16 %v2002, %v1998
        %v2175 = vpack.c.b16 %v2003, %v1999
        %v2176 = vpack.c.b16 %v2004, %v2000
        %v2177 = vpack.c.b16 %v2009, %v2005
        %v2178 = vpack.c.b16 %v2010, %v2006
        %v2179 = vpack.c.b16 %v2011, %v2007
        %v2180 = vpack.c.b16 %v2012, %v2008
        %v2181 = vpack.c.b16 %v2017, %v2013
        %v2182 = vpack.c.b16 %v2018, %v2014
        %v2183 = vpack.c.b16 %v2019, %v2015
        %v2184 = vpack.c.b16 %v2020, %v2016
        %v2185 = vpack.c.b16 %v2025, %v2021
        %v2186 = vpack.c.b16 %v2026, %v2022
        %v2187 = vpack.c.b16 %v2027, %v2023
        %v2188 = vpack.c.b16 %v2028, %v2024
        %v2189 = vpack.c.b16 %v2033, %v2029
        %v2190 = vpack.c.b16 %v2034, %v2030
        %v2191 = vpack.c.b16 %v2035, %v2031
        %v2192 = vpack.c.b16 %v2036, %v2032
        %v2193 = vpack.c.b16 %v2041, %v2037
        %v2194 = vpack.c.b16 %v2042, %v2038
        %v2195 = vpack.c.b16 %v2043, %v2039
        %v2196 = vpack.c.b16 %v2044, %v2040
        %v2197 = vpack.c.b16 %v2049, %v2045
        %v2198 = vpack.c.b16 %v2050, %v2046
        %v2199 = vpack.c.b16 %v2051, %v2047
        %v2200 = vpack.c.b16 %v2052, %v2048
        %v2201 = vpack.c.b16 %v2057, %v2053
        %v2202 = vpack.c.b16 %v2058, %v2054
        %v2203 = vpack.c.b16 %v2059, %v2055
        %v2204 = vpack.c.b16 %v2060, %v2056
        %v2205 = vpack.c.b16 %v2065, %v2061
        %v2206 = vpack.c.b16 %v2066, %v2062
        %v2207 = vpack.c.b16 %v2067, %v2063
        %v2208 = vpack.c.b16 %v2068, %v2064
        %v2209 = vpack.c.b16 %v2073, %v2069
        %v2210 = vpack.c.b16 %v2074, %v2070
        %v2211 = vpack.c.b16 %v2075, %v2071
        %v2212 = vpack.c.b16 %v2076, %v2072
        %v2213 = vpack.c.b16 %v2081, %v2077
        %v2214 = vpack.c.b16 %v2082, %v2078
        %v2215 = vpack.c.b16 %v2083, %v2079
        %v2216 = vpack.c.b16 %v2084, %v2080
        %v2217 = vpack.c.b16 %v2089, %v2085
        %v2218 = vpack.c.b16 %v2090, %v2086
        %v2219 = vpack.c.b16 %v2091, %v2087
        %v2220 = vpack.c.b16 %v2092, %v2088
        %2349 = vmatprep.subr.bf16.mxu0 %v2094
        %2350 = vmatpush1.bf16.msra.mxu0 %v2093
        %2351 = vmatprep.subr.bf16.mxu0 %v2098
        %2352 = vmatpush1.bf16.msra.mxu0 %v2097
        %2353 = vmatprep.subr.bf16.mxu0 %v2102
        %2354 = vmatpush1.bf16.msra.mxu0 %v2101
        %2355 = vmatprep.subr.bf16.mxu0 %v2106
        %2356 = vmatpush1.bf16.msra.mxu0 %v2105
        %2357 = vmatprep.subr.bf16.mxu0 %v2110
        %2358 = vmatpush1.bf16.msra.mxu0 %v2109
        %2359 = vmatprep.subr.bf16.mxu0 %v2114
        %2360 = vmatpush1.bf16.msra.mxu0 %v2113
        %2361 = vmatprep.subr.bf16.mxu0 %v2118
        %2362 = vmatpush1.bf16.msra.mxu0 %v2117
        %2363 = vmatprep.subr.bf16.mxu0 %v2122
        %2364 = vmatpush1.bf16.msra.mxu0 %v2121
        %2365 = vmatprep.subr.bf16.mxu0 %v2126
        %2366 = vmatpush1.bf16.msra.mxu0 %v2125
        %2367 = vmatprep.subr.bf16.mxu0 %v2130
        %2368 = vmatpush1.bf16.msra.mxu0 %v2129
        %2369 = vmatprep.subr.bf16.mxu0 %v2134
        %2370 = vmatpush1.bf16.msra.mxu0 %v2133
        %2371 = vmatprep.subr.bf16.mxu0 %v2138
        %2372 = vmatpush1.bf16.msra.mxu0 %v2137
        %2373 = vmatprep.subr.bf16.mxu0 %v2142
        %2374 = vmatpush1.bf16.msra.mxu0 %v2141
        %2375 = vmatprep.subr.bf16.mxu0 %v2146
        %2376 = vmatpush1.bf16.msra.mxu0 %v2145
        %2377 = vmatprep.subr.bf16.mxu0 %v2150
        %2378 = vmatpush1.bf16.msra.mxu0 %v2149
        %2379 = vmatprep.subr.bf16.mxu0 %v2154
        %2380 = vmatpush1.bf16.msra.mxu0 %v2153
        %2381 = vmatprep.mubr.bf16.mxu0 %v480
        %2382 = vmatmul.mubr.bf16.gmra.mrb[0].mxu0 %v479
        %v2383 = vpop.f32.mrb[0].mxu0
        %v2384 = vadd.f32 %v1585, %v2383
        %v2385 = vpop.f32.mrb[0].mxu0
        %v2386 = vadd.f32 %v1587, %v2385
        %v2387 = vpop.f32.mrb[0].mxu0
        %v2388 = vadd.f32 %v1589, %v2387
        %v2389 = vpop.f32.mrb[0].mxu0
        %v2390 = vadd.f32 %v1591, %v2389
        %2391 = vmatprep.mubr.bf16.mxu0 %v484
        %2392 = vmatmul.mubr.bf16.gmra.mrb[0].mxu0 %v483
        %v2393 = vpop.f32.mrb[0].mxu0
        %v2394 = vadd.f32 %v1595, %v2393
        %v2395 = vpop.f32.mrb[0].mxu0
        %v2396 = vadd.f32 %v1597, %v2395
        %v2397 = vpop.f32.mrb[0].mxu0
        %v2398 = vadd.f32 %v1599, %v2397
        %v2399 = vpop.f32.mrb[0].mxu0
        %v2400 = vadd.f32 %v1601, %v2399
        %2401 = vdwg.mxu0
        %2402 = vmatprep.subr.bf16.mxu0 %v2158
        %2403 = vmatpush1.bf16.msra.mxu0 %v2157
        %2404 = vmatprep.subr.bf16.mxu0 %v2162
        %2405 = vmatpush1.bf16.msra.mxu0 %v2161
        %2406 = vmatprep.subr.bf16.mxu0 %v2166
        %2407 = vmatpush1.bf16.msra.mxu0 %v2165
        %2408 = vmatprep.subr.bf16.mxu0 %v2170
        %2409 = vmatpush1.bf16.msra.mxu0 %v2169
        %2410 = vmatprep.subr.bf16.mxu0 %v2174
        %2411 = vmatpush1.bf16.msra.mxu0 %v2173
        %2412 = vmatprep.subr.bf16.mxu0 %v2178
        %2413 = vmatpush1.bf16.msra.mxu0 %v2177
        %2414 = vmatprep.subr.bf16.mxu0 %v2182
        %2415 = vmatpush1.bf16.msra.mxu0 %v2181
        %2416 = vmatprep.subr.bf16.mxu0 %v2186
        %2417 = vmatpush1.bf16.msra.mxu0 %v2185
        %2418 = vmatprep.subr.bf16.mxu0 %v2190
        %2419 = vmatpush1.bf16.msra.mxu0 %v2189
        %2420 = vmatprep.subr.bf16.mxu0 %v2194
        %2421 = vmatpush1.bf16.msra.mxu0 %v2193
        %2422 = vmatprep.subr.bf16.mxu0 %v2198
        %2423 = vmatpush1.bf16.msra.mxu0 %v2197
        %2424 = vmatprep.subr.bf16.mxu0 %v2202
        %2425 = vmatpush1.bf16.msra.mxu0 %v2201
        %2426 = vmatprep.subr.bf16.mxu0 %v2206
        %2427 = vmatpush1.bf16.msra.mxu0 %v2205
        %2428 = vmatprep.subr.bf16.mxu0 %v2210
        %2429 = vmatpush1.bf16.msra.mxu0 %v2209
        %2430 = vmatprep.subr.bf16.mxu0 %v2214
        %2431 = vmatpush1.bf16.msra.mxu0 %v2213
        %2432 = vmatprep.subr.bf16.mxu0 %v2218
        %2433 = vmatpush1.bf16.msra.mxu0 %v2217
        %2434 = vmatprep.mubr.bf16.mxu0 %v482
        %2435 = vmatmul.mubr.bf16.gmra.mrb[0].mxu0 %v481
        %v2436 = vpop.f32.mrb[0].mxu0
        %v2437 = vadd.f32 %v2384, %v2436
        %v2438 = vpop.f32.mrb[0].mxu0
        %v2439 = vadd.f32 %v2386, %v2438
        %v2440 = vpop.f32.mrb[0].mxu0
        %v2441 = vadd.f32 %v2388, %v2440
        %v2442 = vpop.f32.mrb[0].mxu0
        %v2443 = vadd.f32 %v2390, %v2442
        %2444 = vmatprep.mubr.bf16.mxu0 %v486
        %2445 = vmatmul.mubr.bf16.gmra.mrb[0].mxu0 %v485
        %v2446 = vpop.f32.mrb[0].mxu0
        %v2447 = vadd.f32 %v2394, %v2446
        %v2448 = vpop.f32.mrb[0].mxu0
        %v2449 = vadd.f32 %v2396, %v2448
        %v2450 = vpop.f32.mrb[0].mxu0
        %v2451 = vadd.f32 %v2398, %v2450
        %v2452 = vpop.f32.mrb[0].mxu0
        %v2453 = vadd.f32 %v2400, %v2452
        %2454 = vdwg.mxu0
        %2455 = vmatprep.subr.bf16.mxu0 %v2096
        %2456 = vmatpush1.bf16.msra.mxu0 %v2095
        %2457 = vmatprep.subr.bf16.mxu0 %v2100
        %2458 = vmatpush1.bf16.msra.mxu0 %v2099
        %2459 = vmatprep.subr.bf16.mxu0 %v2104
        %2460 = vmatpush1.bf16.msra.mxu0 %v2103
        %2461 = vmatprep.subr.bf16.mxu0 %v2108
        %2462 = vmatpush1.bf16.msra.mxu0 %v2107
        %2463 = vmatprep.subr.bf16.mxu0 %v2112
        %2464 = vmatpush1.bf16.msra.mxu0 %v2111
        %2465 = vmatprep.subr.bf16.mxu0 %v2116
        %2466 = vmatpush1.bf16.msra.mxu0 %v2115
        %2467 = vmatprep.subr.bf16.mxu0 %v2120
        %2468 = vmatpush1.bf16.msra.mxu0 %v2119
        %2469 = vmatprep.subr.bf16.mxu0 %v2124
        %2470 = vmatpush1.bf16.msra.mxu0 %v2123
        %2471 = vmatprep.subr.bf16.mxu0 %v2128
        %2472 = vmatpush1.bf16.msra.mxu0 %v2127
        %2473 = vmatprep.subr.bf16.mxu0 %v2132
        %2474 = vmatpush1.bf16.msra.mxu0 %v2131
        %2475 = vmatprep.subr.bf16.mxu0 %v2136
        %2476 = vmatpush1.bf16.msra.mxu0 %v2135
        %2477 = vmatprep.subr.bf16.mxu0 %v2140
        %2478 = vmatpush1.bf16.msra.mxu0 %v2139
        %2479 = vmatprep.subr.bf16.mxu0 %v2144
        %2480 = vmatpush1.bf16.msra.mxu0 %v2143
        %2481 = vmatprep.subr.bf16.mxu0 %v2148
        %2482 = vmatpush1.bf16.msra.mxu0 %v2147
        %2483 = vmatprep.subr.bf16.mxu0 %v2152
        %2484 = vmatpush1.bf16.msra.mxu0 %v2151
        %2485 = vmatprep.subr.bf16.mxu0 %v2156
        %2486 = vmatpush1.bf16.msra.mxu0 %v2155
        %2487 = vmatprep.mubr.bf16.mxu0 %v480
        %2488 = vmatmul.mubr.bf16.gmra.mrb[0].mxu0 %v479
        %v2489 = vpop.f32.mrb[0].mxu0
        %v2490 = vadd.f32 %v1691, %v2489
        %v2491 = vpop.f32.mrb[0].mxu0
        %v2492 = vadd.f32 %v1693, %v2491
        %v2493 = vpop.f32.mrb[0].mxu0
        %v2494 = vadd.f32 %v1695, %v2493
        %v2495 = vpop.f32.mrb[0].mxu0
        %v2496 = vadd.f32 %v1697, %v2495
        %2497 = vmatprep.mubr.bf16.mxu0 %v484
        %2498 = vmatmul.mubr.bf16.gmra.mrb[0].mxu0 %v483
        %v2499 = vpop.f32.mrb[0].mxu0
        %v2500 = vadd.f32 %v1701, %v2499
        %v2501 = vpop.f32.mrb[0].mxu0
        %v2502 = vadd.f32 %v1703, %v2501
        %v2503 = vpop.f32.mrb[0].mxu0
        %v2504 = vadd.f32 %v1705, %v2503
        %v2505 = vpop.f32.mrb[0].mxu0
        %v2506 = vadd.f32 %v1707, %v2505
        %2507 = vdwg.mxu0
        %2508 = vmatprep.subr.bf16.mxu0 %v2160
        %2509 = vmatpush1.bf16.msra.mxu0 %v2159
        %2510 = vmatprep.subr.bf16.mxu0 %v2164
        %2511 = vmatpush1.bf16.msra.mxu0 %v2163
        %2512 = vmatprep.subr.bf16.mxu0 %v2168
        %2513 = vmatpush1.bf16.msra.mxu0 %v2167
        %2514 = vmatprep.subr.bf16.mxu0 %v2172
        %2515 = vmatpush1.bf16.msra.mxu0 %v2171
        %2516 = vmatprep.subr.bf16.mxu0 %v2176
        %2517 = vmatpush1.bf16.msra.mxu0 %v2175
        %2518 = vmatprep.subr.bf16.mxu0 %v2180
        %2519 = vmatpush1.bf16.msra.mxu0 %v2179
        %2520 = vmatprep.subr.bf16.mxu0 %v2184
        %2521 = vmatpush1.bf16.msra.mxu0 %v2183
        %2522 = vmatprep.subr.bf16.mxu0 %v2188
        %2523 = vmatpush1.bf16.msra.mxu0 %v2187
        %2524 = vmatprep.subr.bf16.mxu0 %v2192
        %2525 = vmatpush1.bf16.msra.mxu0 %v2191
        %2526 = vmatprep.subr.bf16.mxu0 %v2196
        %2527 = vmatpush1.bf16.msra.mxu0 %v2195
        %2528 = vmatprep.subr.bf16.mxu0 %v2200
        %2529 = vmatpush1.bf16.msra.mxu0 %v2199
        %2530 = vmatprep.subr.bf16.mxu0 %v2204
        %2531 = vmatpush1.bf16.msra.mxu0 %v2203
        %2532 = vmatprep.subr.bf16.mxu0 %v2208
        %2533 = vmatpush1.bf16.msra.mxu0 %v2207
        %2534 = vmatprep.subr.bf16.mxu0 %v2212
        %2535 = vmatpush1.bf16.msra.mxu0 %v2211
        %2536 = vmatprep.subr.bf16.mxu0 %v2216
        %2537 = vmatpush1.bf16.msra.mxu0 %v2215
        %2538 = vmatprep.subr.bf16.mxu0 %v2220
        %2539 = vmatpush1.bf16.msra.mxu0 %v2219
        %2540 = vmatprep.mubr.bf16.mxu0 %v482
        %2541 = vmatmul.mubr.bf16.gmra.mrb[0].mxu0 %v481
        %v2542 = vpop.f32.mrb[0].mxu0
        %v2543 = vadd.f32 %v2490, %v2542
        %v2544 = vpop.f32.mrb[0].mxu0
        %v2545 = vadd.f32 %v2492, %v2544
        %v2546 = vpop.f32.mrb[0].mxu0
        %v2547 = vadd.f32 %v2494, %v2546
        %v2548 = vpop.f32.mrb[0].mxu0
        %v2549 = vadd.f32 %v2496, %v2548
        %2550 = vmatprep.mubr.bf16.mxu0 %v486
        %2551 = vmatmul.mubr.bf16.gmra.mrb[0].mxu0 %v485
        %v2552 = vpop.f32.mrb[0].mxu0
        %v2553 = vadd.f32 %v2500, %v2552
        %v2554 = vpop.f32.mrb[0].mxu0
        %v2555 = vadd.f32 %v2502, %v2554
        %v2556 = vpop.f32.mrb[0].mxu0
        %v2557 = vadd.f32 %v2504, %v2556
        %v2558 = vpop.f32.mrb[0].mxu0
        %v2559 = vadd.f32 %v2506, %v2558
        %2560 = vdwg.mxu0
        %vm2577 = vcmask 1046528
        %v2578 = vrot.slane %v479, 1
        %v2579 = vrot.slane %v487, 1
        %v2580 = vsel %vm2577, %v2578, %v2579
        %v2581 = vrot.slane %v480, 1
        %v2582 = vrot.slane %v488, 1
        %v2583 = vsel %vm2577, %v2581, %v2582
        %v2584 = vrot.slane %v481, 1
        %v2585 = vrot.slane %v489, 1
        %v2586 = vsel %vm2577, %v2584, %v2585
        %v2587 = vrot.slane %v482, 1
        %v2588 = vrot.slane %v490, 1
        %v2589 = vsel %vm2577, %v2587, %v2588
        %v2590 = vrot.slane %v483, 1
        %v2591 = vrot.slane %v491, 1
        %v2592 = vsel %vm2577, %v2590, %v2591
        %v2593 = vrot.slane %v484, 1
        %v2594 = vrot.slane %v492, 1
        %v2595 = vsel %vm2577, %v2593, %v2594
        %v2596 = vrot.slane %v485, 1
        %v2597 = vrot.slane %v493, 1
        %v2598 = vsel %vm2577, %v2596, %v2597
        %v2599 = vrot.slane %v486, 1
        %v2600 = vrot.slane %v494, 1
        %v2601 = vsel %vm2577, %v2599, %v2600
        %s2610 = scalar_lea.vmem [#allocation5], 2048
        %v2611 = vld [vmem:[%s2610] sm:$0xff]
        %v2612 = vld [vmem:[%s2610 + $0x8] sm:$0xff]
        %v2613 = vld [vmem:[%s2610 + $0x10] sm:$0xff]
        %v2614 = vld [vmem:[%s2610 + $0x18] sm:$0xff]
        %v2615 = vld [vmem:[%s2610 + $0x20] sm:$0xff]
        %v2616 = vld [vmem:[%s2610 + $0x28] sm:$0xff]
        %v2617 = vld [vmem:[%s2610 + $0x30] sm:$0xff]
        %v2618 = vld [vmem:[%s2610 + $0x38] sm:$0xff]
        %v2619 = vld [vmem:[%s2610 + $0x40] sm:$0xff]
        %v2620 = vld [vmem:[%s2610 + $0x48] sm:$0xff]
        %v2621 = vld [vmem:[%s2610 + $0x50] sm:$0xff]
        %v2622 = vld [vmem:[%s2610 + $0x58] sm:$0xff]
        %v2623 = vld [vmem:[%s2610 + $0x60] sm:$0xff]
        %v2624 = vld [vmem:[%s2610 + $0x68] sm:$0xff]
        %v2625 = vld [vmem:[%s2610 + $0x70] sm:$0xff]
        %v2626 = vld [vmem:[%s2610 + $0x78] sm:$0xff]
        %v2627 = vld [vmem:[%s2610 + $0x80] sm:$0xff]
        %v2628 = vld [vmem:[%s2610 + $0x88] sm:$0xff]
        %v2629 = vld [vmem:[%s2610 + $0x90] sm:$0xff]
        %v2630 = vld [vmem:[%s2610 + $0x98] sm:$0xff]
        %v2631 = vld [vmem:[%s2610 + $0xa0] sm:$0xff]
        %v2632 = vld [vmem:[%s2610 + $0xa8] sm:$0xff]
        %v2633 = vld [vmem:[%s2610 + $0xb0] sm:$0xff]
        %v2634 = vld [vmem:[%s2610 + $0xb8] sm:$0xff]
        %v2635 = vld [vmem:[%s2610 + $0xc0] sm:$0xff]
        %v2636 = vld [vmem:[%s2610 + $0xc8] sm:$0xff]
        %v2637 = vld [vmem:[%s2610 + $0xd0] sm:$0xff]
        %v2638 = vld [vmem:[%s2610 + $0xd8] sm:$0xff]
        %v2639 = vld [vmem:[%s2610 + $0xe0] sm:$0xff]
        %v2640 = vld [vmem:[%s2610 + $0xe8] sm:$0xff]
        %v2641 = vld [vmem:[%s2610 + $0xf0] sm:$0xff]
        %v2642 = vld [vmem:[%s2610 + $0xf8] sm:$0xff]
        %v2643 = vld [vmem:[%s2610 + $0x100] sm:$0xff]
        %v2644 = vld [vmem:[%s2610 + $0x108] sm:$0xff]
        %v2645 = vld [vmem:[%s2610 + $0x110] sm:$0xff]
        %v2646 = vld [vmem:[%s2610 + $0x118] sm:$0xff]
        %v2647 = vld [vmem:[%s2610 + $0x120] sm:$0xff]
        %v2648 = vld [vmem:[%s2610 + $0x128] sm:$0xff]
        %v2649 = vld [vmem:[%s2610 + $0x130] sm:$0xff]
        %v2650 = vld [vmem:[%s2610 + $0x138] sm:$0xff]
        %v2651 = vld [vmem:[%s2610 + $0x140] sm:$0xff]
        %v2652 = vld [vmem:[%s2610 + $0x148] sm:$0xff]
        %v2653 = vld [vmem:[%s2610 + $0x150] sm:$0xff]
        %v2654 = vld [vmem:[%s2610 + $0x158] sm:$0xff]
        %v2655 = vld [vmem:[%s2610 + $0x160] sm:$0xff]
        %v2656 = vld [vmem:[%s2610 + $0x168] sm:$0xff]
        %v2657 = vld [vmem:[%s2610 + $0x170] sm:$0xff]
        %v2658 = vld [vmem:[%s2610 + $0x178] sm:$0xff]
        %v2659 = vld [vmem:[%s2610 + $0x180] sm:$0xff]
        %v2660 = vld [vmem:[%s2610 + $0x188] sm:$0xff]
        %v2661 = vld [vmem:[%s2610 + $0x190] sm:$0xff]
        %v2662 = vld [vmem:[%s2610 + $0x198] sm:$0xff]
        %v2663 = vld [vmem:[%s2610 + $0x1a0] sm:$0xff]
        %v2664 = vld [vmem:[%s2610 + $0x1a8] sm:$0xff]
        %v2665 = vld [vmem:[%s2610 + $0x1b0] sm:$0xff]
        %v2666 = vld [vmem:[%s2610 + $0x1b8] sm:$0xff]
        %v2667 = vld [vmem:[%s2610 + $0x1c0] sm:$0xff]
        %v2668 = vld [vmem:[%s2610 + $0x1c8] sm:$0xff]
        %v2669 = vld [vmem:[%s2610 + $0x1d0] sm:$0xff]
        %v2670 = vld [vmem:[%s2610 + $0x1d8] sm:$0xff]
        %v2671 = vld [vmem:[%s2610 + $0x1e0] sm:$0xff]
        %v2672 = vld [vmem:[%s2610 + $0x1e8] sm:$0xff]
        %v2673 = vld [vmem:[%s2610 + $0x1f0] sm:$0xff]
        %v2674 = vld [vmem:[%s2610 + $0x1f8] sm:$0xff]
        %v2675 = vld [vmem:[%s2610 + $0x200] sm:$0xff]
        %v2676 = vld [vmem:[%s2610 + $0x208] sm:$0xff]
        %v2677 = vld [vmem:[%s2610 + $0x210] sm:$0xff]
        %v2678 = vld [vmem:[%s2610 + $0x218] sm:$0xff]
        %v2679 = vld [vmem:[%s2610 + $0x220] sm:$0xff]
        %v2680 = vld [vmem:[%s2610 + $0x228] sm:$0xff]
        %v2681 = vld [vmem:[%s2610 + $0x230] sm:$0xff]
        %v2682 = vld [vmem:[%s2610 + $0x238] sm:$0xff]
        %v2683 = vld [vmem:[%s2610 + $0x240] sm:$0xff]
        %v2684 = vld [vmem:[%s2610 + $0x248] sm:$0xff]
        %v2685 = vld [vmem:[%s2610 + $0x250] sm:$0xff]
        %v2686 = vld [vmem:[%s2610 + $0x258] sm:$0xff]
        %v2687 = vld [vmem:[%s2610 + $0x260] sm:$0xff]
        %v2688 = vld [vmem:[%s2610 + $0x268] sm:$0xff]
        %v2689 = vld [vmem:[%s2610 + $0x270] sm:$0xff]
        %v2690 = vld [vmem:[%s2610 + $0x278] sm:$0xff]
        %v2691 = vld [vmem:[%s2610 + $0x280] sm:$0xff]
        %v2692 = vld [vmem:[%s2610 + $0x288] sm:$0xff]
        %v2693 = vld [vmem:[%s2610 + $0x290] sm:$0xff]
        %v2694 = vld [vmem:[%s2610 + $0x298] sm:$0xff]
        %v2695 = vld [vmem:[%s2610 + $0x2a0] sm:$0xff]
        %v2696 = vld [vmem:[%s2610 + $0x2a8] sm:$0xff]
        %v2697 = vld [vmem:[%s2610 + $0x2b0] sm:$0xff]
        %v2698 = vld [vmem:[%s2610 + $0x2b8] sm:$0xff]
        %v2699 = vld [vmem:[%s2610 + $0x2c0] sm:$0xff]
        %v2700 = vld [vmem:[%s2610 + $0x2c8] sm:$0xff]
        %v2701 = vld [vmem:[%s2610 + $0x2d0] sm:$0xff]
        %v2702 = vld [vmem:[%s2610 + $0x2d8] sm:$0xff]
        %v2703 = vld [vmem:[%s2610 + $0x2e0] sm:$0xff]
        %v2704 = vld [vmem:[%s2610 + $0x2e8] sm:$0xff]
        %v2705 = vld [vmem:[%s2610 + $0x2f0] sm:$0xff]
        %v2706 = vld [vmem:[%s2610 + $0x2f8] sm:$0xff]
        %v2707 = vld [vmem:[%s2610 + $0x300] sm:$0xff]
        %v2708 = vld [vmem:[%s2610 + $0x308] sm:$0xff]
        %v2709 = vld [vmem:[%s2610 + $0x310] sm:$0xff]
        %v2710 = vld [vmem:[%s2610 + $0x318] sm:$0xff]
        %v2711 = vld [vmem:[%s2610 + $0x320] sm:$0xff]
        %v2712 = vld [vmem:[%s2610 + $0x328] sm:$0xff]
        %v2713 = vld [vmem:[%s2610 + $0x330] sm:$0xff]
        %v2714 = vld [vmem:[%s2610 + $0x338] sm:$0xff]
        %v2715 = vld [vmem:[%s2610 + $0x340] sm:$0xff]
        %v2716 = vld [vmem:[%s2610 + $0x348] sm:$0xff]
        %v2717 = vld [vmem:[%s2610 + $0x350] sm:$0xff]
        %v2718 = vld [vmem:[%s2610 + $0x358] sm:$0xff]
        %v2719 = vld [vmem:[%s2610 + $0x360] sm:$0xff]
        %v2720 = vld [vmem:[%s2610 + $0x368] sm:$0xff]
        %v2721 = vld [vmem:[%s2610 + $0x370] sm:$0xff]
        %v2722 = vld [vmem:[%s2610 + $0x378] sm:$0xff]
        %v2723 = vld [vmem:[%s2610 + $0x380] sm:$0xff]
        %v2724 = vld [vmem:[%s2610 + $0x388] sm:$0xff]
        %v2725 = vld [vmem:[%s2610 + $0x390] sm:$0xff]
        %v2726 = vld [vmem:[%s2610 + $0x398] sm:$0xff]
        %v2727 = vld [vmem:[%s2610 + $0x3a0] sm:$0xff]
        %v2728 = vld [vmem:[%s2610 + $0x3a8] sm:$0xff]
        %v2729 = vld [vmem:[%s2610 + $0x3b0] sm:$0xff]
        %v2730 = vld [vmem:[%s2610 + $0x3b8] sm:$0xff]
        %v2731 = vld [vmem:[%s2610 + $0x3c0] sm:$0xff]
        %v2732 = vld [vmem:[%s2610 + $0x3c8] sm:$0xff]
        %v2733 = vld [vmem:[%s2610 + $0x3d0] sm:$0xff]
        %v2734 = vld [vmem:[%s2610 + $0x3d8] sm:$0xff]
        %v2735 = vld [vmem:[%s2610 + $0x3e0] sm:$0xff]
        %v2736 = vld [vmem:[%s2610 + $0x3e8] sm:$0xff]
        %v2737 = vld [vmem:[%s2610 + $0x3f0] sm:$0xff]
        %v2738 = vld [vmem:[%s2610 + $0x3f8] sm:$0xff]
        %v2867 = vunpack.c.l.b16 %v2611
        %v2868 = vunpack.c.h.b16 %v2611
        %v2869 = vunpack.c.l.b16 %v2612
        %v2870 = vunpack.c.h.b16 %v2612
        %v2871 = vunpack.c.l.b16 %v2613
        %v2872 = vunpack.c.h.b16 %v2613
        %v2873 = vunpack.c.l.b16 %v2614
        %v2874 = vunpack.c.h.b16 %v2614
        %v2875 = vunpack.c.l.b16 %v2615
        %v2876 = vunpack.c.h.b16 %v2615
        %v2877 = vunpack.c.l.b16 %v2616
        %v2878 = vunpack.c.h.b16 %v2616
        %v2879 = vunpack.c.l.b16 %v2617
        %v2880 = vunpack.c.h.b16 %v2617
        %v2881 = vunpack.c.l.b16 %v2618
        %v2882 = vunpack.c.h.b16 %v2618
        %v2883 = vunpack.c.l.b16 %v2619
        %v2884 = vunpack.c.h.b16 %v2619
        %v2885 = vunpack.c.l.b16 %v2620
        %v2886 = vunpack.c.h.b16 %v2620
        %v2887 = vunpack.c.l.b16 %v2621
        %v2888 = vunpack.c.h.b16 %v2621
        %v2889 = vunpack.c.l.b16 %v2622
        %v2890 = vunpack.c.h.b16 %v2622
        %v2891 = vunpack.c.l.b16 %v2623
        %v2892 = vunpack.c.h.b16 %v2623
        %v2893 = vunpack.c.l.b16 %v2624
        %v2894 = vunpack.c.h.b16 %v2624
        %v2895 = vunpack.c.l.b16 %v2625
        %v2896 = vunpack.c.h.b16 %v2625
        %v2897 = vunpack.c.l.b16 %v2626
        %v2898 = vunpack.c.h.b16 %v2626
        %v2899 = vunpack.c.l.b16 %v2627
        %v2900 = vunpack.c.h.b16 %v2627
        %v2901 = vunpack.c.l.b16 %v2628
        %v2902 = vunpack.c.h.b16 %v2628
        %v2903 = vunpack.c.l.b16 %v2629
        %v2904 = vunpack.c.h.b16 %v2629
        %v2905 = vunpack.c.l.b16 %v2630
        %v2906 = vunpack.c.h.b16 %v2630
        %v2907 = vunpack.c.l.b16 %v2631
        %v2908 = vunpack.c.h.b16 %v2631
        %v2909 = vunpack.c.l.b16 %v2632
        %v2910 = vunpack.c.h.b16 %v2632
        %v2911 = vunpack.c.l.b16 %v2633
        %v2912 = vunpack.c.h.b16 %v2633
        %v2913 = vunpack.c.l.b16 %v2634
        %v2914 = vunpack.c.h.b16 %v2634
        %v2915 = vunpack.c.l.b16 %v2635
        %v2916 = vunpack.c.h.b16 %v2635
        %v2917 = vunpack.c.l.b16 %v2636
        %v2918 = vunpack.c.h.b16 %v2636
        %v2919 = vunpack.c.l.b16 %v2637
        %v2920 = vunpack.c.h.b16 %v2637
        %v2921 = vunpack.c.l.b16 %v2638
        %v2922 = vunpack.c.h.b16 %v2638
        %v2923 = vunpack.c.l.b16 %v2639
        %v2924 = vunpack.c.h.b16 %v2639
        %v2925 = vunpack.c.l.b16 %v2640
        %v2926 = vunpack.c.h.b16 %v2640
        %v2927 = vunpack.c.l.b16 %v2641
        %v2928 = vunpack.c.h.b16 %v2641
        %v2929 = vunpack.c.l.b16 %v2642
        %v2930 = vunpack.c.h.b16 %v2642
        %v2931 = vunpack.c.l.b16 %v2643
        %v2932 = vunpack.c.h.b16 %v2643
        %v2933 = vunpack.c.l.b16 %v2644
        %v2934 = vunpack.c.h.b16 %v2644
        %v2935 = vunpack.c.l.b16 %v2645
        %v2936 = vunpack.c.h.b16 %v2645
        %v2937 = vunpack.c.l.b16 %v2646
        %v2938 = vunpack.c.h.b16 %v2646
        %v2939 = vunpack.c.l.b16 %v2647
        %v2940 = vunpack.c.h.b16 %v2647
        %v2941 = vunpack.c.l.b16 %v2648
        %v2942 = vunpack.c.h.b16 %v2648
        %v2943 = vunpack.c.l.b16 %v2649
        %v2944 = vunpack.c.h.b16 %v2649
        %v2945 = vunpack.c.l.b16 %v2650
        %v2946 = vunpack.c.h.b16 %v2650
        %v2947 = vunpack.c.l.b16 %v2651
        %v2948 = vunpack.c.h.b16 %v2651
        %v2949 = vunpack.c.l.b16 %v2652
        %v2950 = vunpack.c.h.b16 %v2652
        %v2951 = vunpack.c.l.b16 %v2653
        %v2952 = vunpack.c.h.b16 %v2653
        %v2953 = vunpack.c.l.b16 %v2654
        %v2954 = vunpack.c.h.b16 %v2654
        %v2955 = vunpack.c.l.b16 %v2655
        %v2956 = vunpack.c.h.b16 %v2655
        %v2957 = vunpack.c.l.b16 %v2656
        %v2958 = vunpack.c.h.b16 %v2656
        %v2959 = vunpack.c.l.b16 %v2657
        %v2960 = vunpack.c.h.b16 %v2657
        %v2961 = vunpack.c.l.b16 %v2658
        %v2962 = vunpack.c.h.b16 %v2658
        %v2963 = vunpack.c.l.b16 %v2659
        %v2964 = vunpack.c.h.b16 %v2659
        %v2965 = vunpack.c.l.b16 %v2660
        %v2966 = vunpack.c.h.b16 %v2660
        %v2967 = vunpack.c.l.b16 %v2661
        %v2968 = vunpack.c.h.b16 %v2661
        %v2969 = vunpack.c.l.b16 %v2662
        %v2970 = vunpack.c.h.b16 %v2662
        %v2971 = vunpack.c.l.b16 %v2663
        %v2972 = vunpack.c.h.b16 %v2663
        %v2973 = vunpack.c.l.b16 %v2664
        %v2974 = vunpack.c.h.b16 %v2664
        %v2975 = vunpack.c.l.b16 %v2665
        %v2976 = vunpack.c.h.b16 %v2665
        %v2977 = vunpack.c.l.b16 %v2666
        %v2978 = vunpack.c.h.b16 %v2666
        %v2979 = vunpack.c.l.b16 %v2667
        %v2980 = vunpack.c.h.b16 %v2667
        %v2981 = vunpack.c.l.b16 %v2668
        %v2982 = vunpack.c.h.b16 %v2668
        %v2983 = vunpack.c.l.b16 %v2669
        %v2984 = vunpack.c.h.b16 %v2669
        %v2985 = vunpack.c.l.b16 %v2670
        %v2986 = vunpack.c.h.b16 %v2670
        %v2987 = vunpack.c.l.b16 %v2671
        %v2988 = vunpack.c.h.b16 %v2671
        %v2989 = vunpack.c.l.b16 %v2672
        %v2990 = vunpack.c.h.b16 %v2672
        %v2991 = vunpack.c.l.b16 %v2673
        %v2992 = vunpack.c.h.b16 %v2673
        %v2993 = vunpack.c.l.b16 %v2674
        %v2994 = vunpack.c.h.b16 %v2674
        %v2995 = vunpack.c.l.b16 %v2675
        %v2996 = vunpack.c.h.b16 %v2675
        %v2997 = vunpack.c.l.b16 %v2676
        %v2998 = vunpack.c.h.b16 %v2676
        %v2999 = vunpack.c.l.b16 %v2677
        %v3000 = vunpack.c.h.b16 %v2677
        %v3001 = vunpack.c.l.b16 %v2678
        %v3002 = vunpack.c.h.b16 %v2678
        %v3003 = vunpack.c.l.b16 %v2679
        %v3004 = vunpack.c.h.b16 %v2679
        %v3005 = vunpack.c.l.b16 %v2680
        %v3006 = vunpack.c.h.b16 %v2680
        %v3007 = vunpack.c.l.b16 %v2681
        %v3008 = vunpack.c.h.b16 %v2681
        %v3009 = vunpack.c.l.b16 %v2682
        %v3010 = vunpack.c.h.b16 %v2682
        %v3011 = vunpack.c.l.b16 %v2683
        %v3012 = vunpack.c.h.b16 %v2683
        %v3013 = vunpack.c.l.b16 %v2684
        %v3014 = vunpack.c.h.b16 %v2684
        %v3015 = vunpack.c.l.b16 %v2685
        %v3016 = vunpack.c.h.b16 %v2685
        %v3017 = vunpack.c.l.b16 %v2686
        %v3018 = vunpack.c.h.b16 %v2686
        %v3019 = vunpack.c.l.b16 %v2687
        %v3020 = vunpack.c.h.b16 %v2687
        %v3021 = vunpack.c.l.b16 %v2688
        %v3022 = vunpack.c.h.b16 %v2688
        %v3023 = vunpack.c.l.b16 %v2689
        %v3024 = vunpack.c.h.b16 %v2689
        %v3025 = vunpack.c.l.b16 %v2690
        %v3026 = vunpack.c.h.b16 %v2690
        %v3027 = vunpack.c.l.b16 %v2691
        %v3028 = vunpack.c.h.b16 %v2691
        %v3029 = vunpack.c.l.b16 %v2692
        %v3030 = vunpack.c.h.b16 %v2692
        %v3031 = vunpack.c.l.b16 %v2693
        %v3032 = vunpack.c.h.b16 %v2693
        %v3033 = vunpack.c.l.b16 %v2694
        %v3034 = vunpack.c.h.b16 %v2694
        %v3035 = vunpack.c.l.b16 %v2695
        %v3036 = vunpack.c.h.b16 %v2695
        %v3037 = vunpack.c.l.b16 %v2696
        %v3038 = vunpack.c.h.b16 %v2696
        %v3039 = vunpack.c.l.b16 %v2697
        %v3040 = vunpack.c.h.b16 %v2697
        %v3041 = vunpack.c.l.b16 %v2698
        %v3042 = vunpack.c.h.b16 %v2698
        %v3043 = vunpack.c.l.b16 %v2699
        %v3044 = vunpack.c.h.b16 %v2699
        %v3045 = vunpack.c.l.b16 %v2700
        %v3046 = vunpack.c.h.b16 %v2700
        %v3047 = vunpack.c.l.b16 %v2701
        %v3048 = vunpack.c.h.b16 %v2701
        %v3049 = vunpack.c.l.b16 %v2702
        %v3050 = vunpack.c.h.b16 %v2702
        %v3051 = vunpack.c.l.b16 %v2703
        %v3052 = vunpack.c.h.b16 %v2703
        %v3053 = vunpack.c.l.b16 %v2704
        %v3054 = vunpack.c.h.b16 %v2704
        %v3055 = vunpack.c.l.b16 %v2705
        %v3056 = vunpack.c.h.b16 %v2705
        %v3057 = vunpack.c.l.b16 %v2706
        %v3058 = vunpack.c.h.b16 %v2706
        %v3059 = vunpack.c.l.b16 %v2707
        %v3060 = vunpack.c.h.b16 %v2707
        %v3061 = vunpack.c.l.b16 %v2708
        %v3062 = vunpack.c.h.b16 %v2708
        %v3063 = vunpack.c.l.b16 %v2709
        %v3064 = vunpack.c.h.b16 %v2709
        %v3065 = vunpack.c.l.b16 %v2710
        %v3066 = vunpack.c.h.b16 %v2710
        %v3067 = vunpack.c.l.b16 %v2711
        %v3068 = vunpack.c.h.b16 %v2711
        %v3069 = vunpack.c.l.b16 %v2712
        %v3070 = vunpack.c.h.b16 %v2712
        %v3071 = vunpack.c.l.b16 %v2713
        %v3072 = vunpack.c.h.b16 %v2713
        %v3073 = vunpack.c.l.b16 %v2714
        %v3074 = vunpack.c.h.b16 %v2714
        %v3075 = vunpack.c.l.b16 %v2715
        %v3076 = vunpack.c.h.b16 %v2715
        %v3077 = vunpack.c.l.b16 %v2716
        %v3078 = vunpack.c.h.b16 %v2716
        %v3079 = vunpack.c.l.b16 %v2717
        %v3080 = vunpack.c.h.b16 %v2717
        %v3081 = vunpack.c.l.b16 %v2718
        %v3082 = vunpack.c.h.b16 %v2718
        %v3083 = vunpack.c.l.b16 %v2719
        %v3084 = vunpack.c.h.b16 %v2719
        %v3085 = vunpack.c.l.b16 %v2720
        %v3086 = vunpack.c.h.b16 %v2720
        %v3087 = vunpack.c.l.b16 %v2721
        %v3088 = vunpack.c.h.b16 %v2721
        %v3089 = vunpack.c.l.b16 %v2722
        %v3090 = vunpack.c.h.b16 %v2722
        %v3091 = vunpack.c.l.b16 %v2723
        %v3092 = vunpack.c.h.b16 %v2723
        %v3093 = vunpack.c.l.b16 %v2724
        %v3094 = vunpack.c.h.b16 %v2724
        %v3095 = vunpack.c.l.b16 %v2725
        %v3096 = vunpack.c.h.b16 %v2725
        %v3097 = vunpack.c.l.b16 %v2726
        %v3098 = vunpack.c.h.b16 %v2726
        %v3099 = vunpack.c.l.b16 %v2727
        %v3100 = vunpack.c.h.b16 %v2727
        %v3101 = vunpack.c.l.b16 %v2728
        %v3102 = vunpack.c.h.b16 %v2728
        %v3103 = vunpack.c.l.b16 %v2729
        %v3104 = vunpack.c.h.b16 %v2729
        %v3105 = vunpack.c.l.b16 %v2730
        %v3106 = vunpack.c.h.b16 %v2730
        %v3107 = vunpack.c.l.b16 %v2731
        %v3108 = vunpack.c.h.b16 %v2731
        %v3109 = vunpack.c.l.b16 %v2732
        %v3110 = vunpack.c.h.b16 %v2732
        %v3111 = vunpack.c.l.b16 %v2733
        %v3112 = vunpack.c.h.b16 %v2733
        %v3113 = vunpack.c.l.b16 %v2734
        %v3114 = vunpack.c.h.b16 %v2734
        %v3115 = vunpack.c.l.b16 %v2735
        %v3116 = vunpack.c.h.b16 %v2735
        %v3117 = vunpack.c.l.b16 %v2736
        %v3118 = vunpack.c.h.b16 %v2736
        %v3119 = vunpack.c.l.b16 %v2737
        %v3120 = vunpack.c.h.b16 %v2737
        %v3121 = vunpack.c.l.b16 %v2738
        %v3122 = vunpack.c.h.b16 %v2738
        %v3123 = vpack.c.b16 %v2871, %v2867
        %v3124 = vpack.c.b16 %v2872, %v2868
        %v3125 = vpack.c.b16 %v2873, %v2869
        %v3126 = vpack.c.b16 %v2874, %v2870
        %v3127 = vpack.c.b16 %v2879, %v2875
        %v3128 = vpack.c.b16 %v2880, %v2876
        %v3129 = vpack.c.b16 %v2881, %v2877
        %v3130 = vpack.c.b16 %v2882, %v2878
        %v3131 = vpack.c.b16 %v2887, %v2883
        %v3132 = vpack.c.b16 %v2888, %v2884
        %v3133 = vpack.c.b16 %v2889, %v2885
        %v3134 = vpack.c.b16 %v2890, %v2886
        %v3135 = vpack.c.b16 %v2895, %v2891
        %v3136 = vpack.c.b16 %v2896, %v2892
        %v3137 = vpack.c.b16 %v2897, %v2893
        %v3138 = vpack.c.b16 %v2898, %v2894
        %v3139 = vpack.c.b16 %v2903, %v2899
        %v3140 = vpack.c.b16 %v2904, %v2900
        %v3141 = vpack.c.b16 %v2905, %v2901
        %v3142 = vpack.c.b16 %v2906, %v2902
        %v3143 = vpack.c.b16 %v2911, %v2907
        %v3144 = vpack.c.b16 %v2912, %v2908
        %v3145 = vpack.c.b16 %v2913, %v2909
        %v3146 = vpack.c.b16 %v2914, %v2910
        %v3147 = vpack.c.b16 %v2919, %v2915
        %v3148 = vpack.c.b16 %v2920, %v2916
        %v3149 = vpack.c.b16 %v2921, %v2917
        %v3150 = vpack.c.b16 %v2922, %v2918
        %v3151 = vpack.c.b16 %v2927, %v2923
        %v3152 = vpack.c.b16 %v2928, %v2924
        %v3153 = vpack.c.b16 %v2929, %v2925
        %v3154 = vpack.c.b16 %v2930, %v2926
        %v3155 = vpack.c.b16 %v2935, %v2931
        %v3156 = vpack.c.b16 %v2936, %v2932
        %v3157 = vpack.c.b16 %v2937, %v2933
        %v3158 = vpack.c.b16 %v2938, %v2934
        %v3159 = vpack.c.b16 %v2943, %v2939
        %v3160 = vpack.c.b16 %v2944, %v2940
        %v3161 = vpack.c.b16 %v2945, %v2941
        %v3162 = vpack.c.b16 %v2946, %v2942
        %v3163 = vpack.c.b16 %v2951, %v2947
        %v3164 = vpack.c.b16 %v2952, %v2948
        %v3165 = vpack.c.b16 %v2953, %v2949
        %v3166 = vpack.c.b16 %v2954, %v2950
        %v3167 = vpack.c.b16 %v2959, %v2955
        %v3168 = vpack.c.b16 %v2960, %v2956
        %v3169 = vpack.c.b16 %v2961, %v2957
        %v3170 = vpack.c.b16 %v2962, %v2958
        %v3171 = vpack.c.b16 %v2967, %v2963
        %v3172 = vpack.c.b16 %v2968, %v2964
        %v3173 = vpack.c.b16 %v2969, %v2965
        %v3174 = vpack.c.b16 %v2970, %v2966
        %v3175 = vpack.c.b16 %v2975, %v2971
        %v3176 = vpack.c.b16 %v2976, %v2972
        %v3177 = vpack.c.b16 %v2977, %v2973
        %v3178 = vpack.c.b16 %v2978, %v2974
        %v3179 = vpack.c.b16 %v2983, %v2979
        %v3180 = vpack.c.b16 %v2984, %v2980
        %v3181 = vpack.c.b16 %v2985, %v2981
        %v3182 = vpack.c.b16 %v2986, %v2982
        %v3183 = vpack.c.b16 %v2991, %v2987
        %v3184 = vpack.c.b16 %v2992, %v2988
        %v3185 = vpack.c.b16 %v2993, %v2989
        %v3186 = vpack.c.b16 %v2994, %v2990
        %v3187 = vpack.c.b16 %v2999, %v2995
        %v3188 = vpack.c.b16 %v3000, %v2996
        %v3189 = vpack.c.b16 %v3001, %v2997
        %v3190 = vpack.c.b16 %v3002, %v2998
        %v3191 = vpack.c.b16 %v3007, %v3003
        %v3192 = vpack.c.b16 %v3008, %v3004
        %v3193 = vpack.c.b16 %v3009, %v3005
        %v3194 = vpack.c.b16 %v3010, %v3006
        %v3195 = vpack.c.b16 %v3015, %v3011
        %v3196 = vpack.c.b16 %v3016, %v3012
        %v3197 = vpack.c.b16 %v3017, %v3013
        %v3198 = vpack.c.b16 %v3018, %v3014
        %v3199 = vpack.c.b16 %v3023, %v3019
        %v3200 = vpack.c.b16 %v3024, %v3020
        %v3201 = vpack.c.b16 %v3025, %v3021
        %v3202 = vpack.c.b16 %v3026, %v3022
        %v3203 = vpack.c.b16 %v3031, %v3027
        %v3204 = vpack.c.b16 %v3032, %v3028
        %v3205 = vpack.c.b16 %v3033, %v3029
        %v3206 = vpack.c.b16 %v3034, %v3030
        %v3207 = vpack.c.b16 %v3039, %v3035
        %v3208 = vpack.c.b16 %v3040, %v3036
        %v3209 = vpack.c.b16 %v3041, %v3037
        %v3210 = vpack.c.b16 %v3042, %v3038
        %v3211 = vpack.c.b16 %v3047, %v3043
        %v3212 = vpack.c.b16 %v3048, %v3044
        %v3213 = vpack.c.b16 %v3049, %v3045
        %v3214 = vpack.c.b16 %v3050, %v3046
        %v3215 = vpack.c.b16 %v3055, %v3051
        %v3216 = vpack.c.b16 %v3056, %v3052
        %v3217 = vpack.c.b16 %v3057, %v3053
        %v3218 = vpack.c.b16 %v3058, %v3054
        %v3219 = vpack.c.b16 %v3063, %v3059
        %v3220 = vpack.c.b16 %v3064, %v3060
        %v3221 = vpack.c.b16 %v3065, %v3061
        %v3222 = vpack.c.b16 %v3066, %v3062
        %v3223 = vpack.c.b16 %v3071, %v3067
        %v3224 = vpack.c.b16 %v3072, %v3068
        %v3225 = vpack.c.b16 %v3073, %v3069
        %v3226 = vpack.c.b16 %v3074, %v3070
        %v3227 = vpack.c.b16 %v3079, %v3075
        %v3228 = vpack.c.b16 %v3080, %v3076
        %v3229 = vpack.c.b16 %v3081, %v3077
        %v3230 = vpack.c.b16 %v3082, %v3078
        %v3231 = vpack.c.b16 %v3087, %v3083
        %v3232 = vpack.c.b16 %v3088, %v3084
        %v3233 = vpack.c.b16 %v3089, %v3085
        %v3234 = vpack.c.b16 %v3090, %v3086
        %v3235 = vpack.c.b16 %v3095, %v3091
        %v3236 = vpack.c.b16 %v3096, %v3092
        %v3237 = vpack.c.b16 %v3097, %v3093
        %v3238 = vpack.c.b16 %v3098, %v3094
        %v3239 = vpack.c.b16 %v3103, %v3099
        %v3240 = vpack.c.b16 %v3104, %v3100
        %v3241 = vpack.c.b16 %v3105, %v3101
        %v3242 = vpack.c.b16 %v3106, %v3102
        %v3243 = vpack.c.b16 %v3111, %v3107
        %v3244 = vpack.c.b16 %v3112, %v3108
        %v3245 = vpack.c.b16 %v3113, %v3109
        %v3246 = vpack.c.b16 %v3114, %v3110
        %v3247 = vpack.c.b16 %v3119, %v3115
        %v3248 = vpack.c.b16 %v3120, %v3116
        %v3249 = vpack.c.b16 %v3121, %v3117
        %v3250 = vpack.c.b16 %v3122, %v3118
        %3379 = vmatprep.subr.bf16.mxu0 %v3124
        %3380 = vmatpush1.bf16.msra.mxu0 %v3123
        %3381 = vmatprep.subr.bf16.mxu0 %v3128
        %3382 = vmatpush1.bf16.msra.mxu0 %v3127
        %3383 = vmatprep.subr.bf16.mxu0 %v3132
        %3384 = vmatpush1.bf16.msra.mxu0 %v3131
        %3385 = vmatprep.subr.bf16.mxu0 %v3136
        %3386 = vmatpush1.bf16.msra.mxu0 %v3135
        %3387 = vmatprep.subr.bf16.mxu0 %v3140
        %3388 = vmatpush1.bf16.msra.mxu0 %v3139
        %3389 = vmatprep.subr.bf16.mxu0 %v3144
        %3390 = vmatpush1.bf16.msra.mxu0 %v3143
        %3391 = vmatprep.subr.bf16.mxu0 %v3148
        %3392 = vmatpush1.bf16.msra.mxu0 %v3147
        %3393 = vmatprep.subr.bf16.mxu0 %v3152
        %3394 = vmatpush1.bf16.msra.mxu0 %v3151
        %3395 = vmatprep.subr.bf16.mxu0 %v3156
        %3396 = vmatpush1.bf16.msra.mxu0 %v3155
        %3397 = vmatprep.subr.bf16.mxu0 %v3160
        %3398 = vmatpush1.bf16.msra.mxu0 %v3159
        %3399 = vmatprep.subr.bf16.mxu0 %v3164
        %3400 = vmatpush1.bf16.msra.mxu0 %v3163
        %3401 = vmatprep.subr.bf16.mxu0 %v3168
        %3402 = vmatpush1.bf16.msra.mxu0 %v3167
        %3403 = vmatprep.subr.bf16.mxu0 %v3172
        %3404 = vmatpush1.bf16.msra.mxu0 %v3171
        %3405 = vmatprep.subr.bf16.mxu0 %v3176
        %3406 = vmatpush1.bf16.msra.mxu0 %v3175
        %3407 = vmatprep.subr.bf16.mxu0 %v3180
        %3408 = vmatpush1.bf16.msra.mxu0 %v3179
        %3409 = vmatprep.subr.bf16.mxu0 %v3184
        %3410 = vmatpush1.bf16.msra.mxu0 %v3183
        %3411 = vmatprep.mubr.bf16.mxu0 %v2583
        %3412 = vmatmul.mubr.bf16.gmra.mrb[0].mxu0 %v2580
        %v3413 = vpop.f32.mrb[0].mxu0
        %v3414 = vadd.f32 0.0, %v3413
        %v3415 = vpop.f32.mrb[0].mxu0
        %v3416 = vadd.f32 0.0, %v3415
        %v3417 = vpop.f32.mrb[0].mxu0
        %v3418 = vadd.f32 0.0, %v3417
        %v3419 = vpop.f32.mrb[0].mxu0
        %v3420 = vadd.f32 0.0, %v3419
        %3421 = vmatprep.mubr.bf16.mxu0 %v2595
        %3422 = vmatmul.mubr.bf16.gmra.mrb[0].mxu0 %v2592
        %v3423 = vpop.f32.mrb[0].mxu0
        %v3424 = vadd.f32 0.0, %v3423
        %v3425 = vpop.f32.mrb[0].mxu0
        %v3426 = vadd.f32 0.0, %v3425
        %v3427 = vpop.f32.mrb[0].mxu0
        %v3428 = vadd.f32 0.0, %v3427
        %v3429 = vpop.f32.mrb[0].mxu0
        %v3430 = vadd.f32 0.0, %v3429
        %3431 = vdwg.mxu0
        %3432 = vmatprep.subr.bf16.mxu0 %v3188
        %3433 = vmatpush1.bf16.msra.mxu0 %v3187
        %3434 = vmatprep.subr.bf16.mxu0 %v3192
        %3435 = vmatpush1.bf16.msra.mxu0 %v3191
        %3436 = vmatprep.subr.bf16.mxu0 %v3196
        %3437 = vmatpush1.bf16.msra.mxu0 %v3195
        %3438 = vmatprep.subr.bf16.mxu0 %v3200
        %3439 = vmatpush1.bf16.msra.mxu0 %v3199
        %3440 = vmatprep.subr.bf16.mxu0 %v3204
        %3441 = vmatpush1.bf16.msra.mxu0 %v3203
        %3442 = vmatprep.subr.bf16.mxu0 %v3208
        %3443 = vmatpush1.bf16.msra.mxu0 %v3207
        %3444 = vmatprep.subr.bf16.mxu0 %v3212
        %3445 = vmatpush1.bf16.msra.mxu0 %v3211
        %3446 = vmatprep.subr.bf16.mxu0 %v3216
        %3447 = vmatpush1.bf16.msra.mxu0 %v3215
        %3448 = vmatprep.subr.bf16.mxu0 %v3220
        %3449 = vmatpush1.bf16.msra.mxu0 %v3219
        %3450 = vmatprep.subr.bf16.mxu0 %v3224
        %3451 = vmatpush1.bf16.msra.mxu0 %v3223
        %3452 = vmatprep.subr.bf16.mxu0 %v3228
        %3453 = vmatpush1.bf16.msra.mxu0 %v3227
        %3454 = vmatprep.subr.bf16.mxu0 %v3232
        %3455 = vmatpush1.bf16.msra.mxu0 %v3231
        %3456 = vmatprep.subr.bf16.mxu0 %v3236
        %3457 = vmatpush1.bf16.msra.mxu0 %v3235
        %3458 = vmatprep.subr.bf16.mxu0 %v3240
        %3459 = vmatpush1.bf16.msra.mxu0 %v3239
        %3460 = vmatprep.subr.bf16.mxu0 %v3244
        %3461 = vmatpush1.bf16.msra.mxu0 %v3243
        %3462 = vmatprep.subr.bf16.mxu0 %v3248
        %3463 = vmatpush1.bf16.msra.mxu0 %v3247
        %3464 = vmatprep.mubr.bf16.mxu0 %v2589
        %3465 = vmatmul.mubr.bf16.gmra.mrb[0].mxu0 %v2586
        %v3466 = vpop.f32.mrb[0].mxu0
        %v3467 = vadd.f32 %v3414, %v3466
        %v3468 = vpop.f32.mrb[0].mxu0
        %v3469 = vadd.f32 %v3416, %v3468
        %v3470 = vpop.f32.mrb[0].mxu0
        %v3471 = vadd.f32 %v3418, %v3470
        %v3472 = vpop.f32.mrb[0].mxu0
        %v3473 = vadd.f32 %v3420, %v3472
        %3474 = vmatprep.mubr.bf16.mxu0 %v2601
        %3475 = vmatmul.mubr.bf16.gmra.mrb[0].mxu0 %v2598
        %v3476 = vpop.f32.mrb[0].mxu0
        %v3477 = vadd.f32 %v3424, %v3476
        %v3478 = vpop.f32.mrb[0].mxu0
        %v3479 = vadd.f32 %v3426, %v3478
        %v3480 = vpop.f32.mrb[0].mxu0
        %v3481 = vadd.f32 %v3428, %v3480
        %v3482 = vpop.f32.mrb[0].mxu0
        %v3483 = vadd.f32 %v3430, %v3482
        %3484 = vdwg.mxu0
        %3485 = vmatprep.subr.bf16.mxu0 %v3126
        %3486 = vmatpush1.bf16.msra.mxu0 %v3125
        %3487 = vmatprep.subr.bf16.mxu0 %v3130
        %3488 = vmatpush1.bf16.msra.mxu0 %v3129
        %3489 = vmatprep.subr.bf16.mxu0 %v3134
        %3490 = vmatpush1.bf16.msra.mxu0 %v3133
        %3491 = vmatprep.subr.bf16.mxu0 %v3138
        %3492 = vmatpush1.bf16.msra.mxu0 %v3137
        %3493 = vmatprep.subr.bf16.mxu0 %v3142
        %3494 = vmatpush1.bf16.msra.mxu0 %v3141
        %3495 = vmatprep.subr.bf16.mxu0 %v3146
        %3496 = vmatpush1.bf16.msra.mxu0 %v3145
        %3497 = vmatprep.subr.bf16.mxu0 %v3150
        %3498 = vmatpush1.bf16.msra.mxu0 %v3149
        %3499 = vmatprep.subr.bf16.mxu0 %v3154
        %3500 = vmatpush1.bf16.msra.mxu0 %v3153
        %3501 = vmatprep.subr.bf16.mxu0 %v3158
        %3502 = vmatpush1.bf16.msra.mxu0 %v3157
        %3503 = vmatprep.subr.bf16.mxu0 %v3162
        %3504 = vmatpush1.bf16.msra.mxu0 %v3161
        %3505 = vmatprep.subr.bf16.mxu0 %v3166
        %3506 = vmatpush1.bf16.msra.mxu0 %v3165
        %3507 = vmatprep.subr.bf16.mxu0 %v3170
        %3508 = vmatpush1.bf16.msra.mxu0 %v3169
        %3509 = vmatprep.subr.bf16.mxu0 %v3174
        %3510 = vmatpush1.bf16.msra.mxu0 %v3173
        %3511 = vmatprep.subr.bf16.mxu0 %v3178
        %3512 = vmatpush1.bf16.msra.mxu0 %v3177
        %3513 = vmatprep.subr.bf16.mxu0 %v3182
        %3514 = vmatpush1.bf16.msra.mxu0 %v3181
        %3515 = vmatprep.subr.bf16.mxu0 %v3186
        %3516 = vmatpush1.bf16.msra.mxu0 %v3185
        %3517 = vmatprep.mubr.bf16.mxu0 %v2583
        %3518 = vmatmul.mubr.bf16.gmra.mrb[0].mxu0 %v2580
        %v3519 = vpop.f32.mrb[0].mxu0
        %v3520 = vadd.f32 0.0, %v3519
        %v3521 = vpop.f32.mrb[0].mxu0
        %v3522 = vadd.f32 0.0, %v3521
        %v3523 = vpop.f32.mrb[0].mxu0
        %v3524 = vadd.f32 0.0, %v3523
        %v3525 = vpop.f32.mrb[0].mxu0
        %v3526 = vadd.f32 0.0, %v3525
        %3527 = vmatprep.mubr.bf16.mxu0 %v2595
        %3528 = vmatmul.mubr.bf16.gmra.mrb[0].mxu0 %v2592
        %v3529 = vpop.f32.mrb[0].mxu0
        %v3530 = vadd.f32 0.0, %v3529
        %v3531 = vpop.f32.mrb[0].mxu0
        %v3532 = vadd.f32 0.0, %v3531
        %v3533 = vpop.f32.mrb[0].mxu0
        %v3534 = vadd.f32 0.0, %v3533
        %v3535 = vpop.f32.mrb[0].mxu0
        %v3536 = vadd.f32 0.0, %v3535
        %3537 = vdwg.mxu0
        %3538 = vmatprep.subr.bf16.mxu0 %v3190
        %3539 = vmatpush1.bf16.msra.mxu0 %v3189
        %3540 = vmatprep.subr.bf16.mxu0 %v3194
        %3541 = vmatpush1.bf16.msra.mxu0 %v3193
        %3542 = vmatprep.subr.bf16.mxu0 %v3198
        %3543 = vmatpush1.bf16.msra.mxu0 %v3197
        %3544 = vmatprep.subr.bf16.mxu0 %v3202
        %3545 = vmatpush1.bf16.msra.mxu0 %v3201
        %3546 = vmatprep.subr.bf16.mxu0 %v3206
        %3547 = vmatpush1.bf16.msra.mxu0 %v3205
        %3548 = vmatprep.subr.bf16.mxu0 %v3210
        %3549 = vmatpush1.bf16.msra.mxu0 %v3209
        %3550 = vmatprep.subr.bf16.mxu0 %v3214
        %3551 = vmatpush1.bf16.msra.mxu0 %v3213
        %3552 = vmatprep.subr.bf16.mxu0 %v3218
        %3553 = vmatpush1.bf16.msra.mxu0 %v3217
        %3554 = vmatprep.subr.bf16.mxu0 %v3222
        %3555 = vmatpush1.bf16.msra.mxu0 %v3221
        %3556 = vmatprep.subr.bf16.mxu0 %v3226
        %3557 = vmatpush1.bf16.msra.mxu0 %v3225
        %3558 = vmatprep.subr.bf16.mxu0 %v3230
        %3559 = vmatpush1.bf16.msra.mxu0 %v3229
        %3560 = vmatprep.subr.bf16.mxu0 %v3234
        %3561 = vmatpush1.bf16.msra.mxu0 %v3233
        %3562 = vmatprep.subr.bf16.mxu0 %v3238
        %3563 = vmatpush1.bf16.msra.mxu0 %v3237
        %3564 = vmatprep.subr.bf16.mxu0 %v3242
        %3565 = vmatpush1.bf16.msra.mxu0 %v3241
        %3566 = vmatprep.subr.bf16.mxu0 %v3246
        %3567 = vmatpush1.bf16.msra.mxu0 %v3245
        %3568 = vmatprep.subr.bf16.mxu0 %v3250
        %3569 = vmatpush1.bf16.msra.mxu0 %v3249
        %3570 = vmatprep.mubr.bf16.mxu0 %v2589
        %3571 = vmatmul.mubr.bf16.gmra.mrb[0].mxu0 %v2586
        %v3572 = vpop.f32.mrb[0].mxu0
        %v3573 = vadd.f32 %v3520, %v3572
        %v3574 = vpop.f32.mrb[0].mxu0
        %v3575 = vadd.f32 %v3522, %v3574
        %v3576 = vpop.f32.mrb[0].mxu0
        %v3577 = vadd.f32 %v3524, %v3576
        %v3578 = vpop.f32.mrb[0].mxu0
        %v3579 = vadd.f32 %v3526, %v3578
        %3580 = vmatprep.mubr.bf16.mxu0 %v2601
        %3581 = vmatmul.mubr.bf16.gmra.mrb[0].mxu0 %v2598
        %v3582 = vpop.f32.mrb[0].mxu0
        %v3583 = vadd.f32 %v3530, %v3582
        %v3584 = vpop.f32.mrb[0].mxu0
        %v3585 = vadd.f32 %v3532, %v3584
        %v3586 = vpop.f32.mrb[0].mxu0
        %v3587 = vadd.f32 %v3534, %v3586
        %v3588 = vpop.f32.mrb[0].mxu0
        %v3589 = vadd.f32 %v3536, %v3588
        %3590 = vdwg.mxu0
        %v3591 = vadd.f32 %v2437, %v3467
        %v3592 = vadd.f32 %v2439, %v3469
        %v3593 = vadd.f32 %v2543, %v3573
        %v3594 = vadd.f32 %v2545, %v3575
        %v3595 = vadd.f32 %v2441, %v3471
        %v3596 = vadd.f32 %v2443, %v3473
        %v3597 = vadd.f32 %v2547, %v3577
        %v3598 = vadd.f32 %v2549, %v3579
        %v3599 = vadd.f32 %v2447, %v3477
        %v3600 = vadd.f32 %v2449, %v3479
        %v3601 = vadd.f32 %v2553, %v3583
        %v3602 = vadd.f32 %v2555, %v3585
        %v3603 = vadd.f32 %v2451, %v3481
        %v3604 = vadd.f32 %v2453, %v3483
        %v3605 = vadd.f32 %v2557, %v3587
        %v3606 = vadd.f32 %v2559, %v3589
        %v3607 = vld [vmem:[#allocation7] sm:$0xf]
        %v3609 = vlaneseq
        %v3610 = vshrl.u32 %v3609, 7
        %v3611 = vsub.s32 0, %v3610
        %v3612 = vrot.slane %v3607, %v3611
        %v3613 = vlaneseq
        %v3614 = vshrl.u32 %v3613, 7
        %v3615 = vsub.s32 1, %v3614
        %v3616 = vrot.slane %v3607, %v3615
        %v3617 = vlaneseq
        %v3618 = vshrl.u32 %v3617, 7
        %v3619 = vsub.s32 2, %v3618
        %v3620 = vrot.slane %v3607, %v3619
        %v3621 = vlaneseq
        %v3622 = vshrl.u32 %v3621, 7
        %v3623 = vsub.s32 3, %v3622
        %v3624 = vrot.slane %v3607, %v3623
        %v3629 = vmul.f32 %v3591, %v3612
        %v3630 = vmul.f32 %v3592, %v3616
        %v3631 = vmul.f32 %v3593, %v3620
        %v3632 = vmul.f32 %v3594, %v3624
        %v3633 = vmul.f32 %v3595, %v3612
        %v3634 = vmul.f32 %v3596, %v3616
        %v3635 = vmul.f32 %v3597, %v3620
        %v3636 = vmul.f32 %v3598, %v3624
        %v3637 = vmul.f32 %v3599, %v3612
        %v3638 = vmul.f32 %v3600, %v3616
        %v3639 = vmul.f32 %v3601, %v3620
        %v3640 = vmul.f32 %v3602, %v3624
        %v3641 = vmul.f32 %v3603, %v3612
        %v3642 = vmul.f32 %v3604, %v3616
        %v3643 = vmul.f32 %v3605, %v3620
        %v3644 = vmul.f32 %v3606, %v3624
        %v3645 = vld [vmem:[#allocation8] sm:$0xf]
        %v3647 = vlaneseq
        %v3648 = vshrl.u32 %v3647, 7
        %v3649 = vsub.s32 0, %v3648
        %v3650 = vrot.slane %v3645, %v3649
        %v3651 = vlaneseq
        %v3652 = vshrl.u32 %v3651, 7
        %v3653 = vsub.s32 1, %v3652
        %v3654 = vrot.slane %v3645, %v3653
        %v3655 = vlaneseq
        %v3656 = vshrl.u32 %v3655, 7
        %v3657 = vsub.s32 2, %v3656
        %v3658 = vrot.slane %v3645, %v3657
        %v3659 = vlaneseq
        %v3660 = vshrl.u32 %v3659, 7
        %v3661 = vsub.s32 3, %v3660
        %v3662 = vrot.slane %v3645, %v3661
        %v3667 = vadd.f32 %v3629, %v3650
        %v3668 = vadd.f32 %v3630, %v3654
        %v3669 = vadd.f32 %v3631, %v3658
        %v3670 = vadd.f32 %v3632, %v3662
        %v3671 = vadd.f32 %v3633, %v3650
        %v3672 = vadd.f32 %v3634, %v3654
        %v3673 = vadd.f32 %v3635, %v3658
        %v3674 = vadd.f32 %v3636, %v3662
        %v3675 = vadd.f32 %v3637, %v3650
        %v3676 = vadd.f32 %v3638, %v3654
        %v3677 = vadd.f32 %v3639, %v3658
        %v3678 = vadd.f32 %v3640, %v3662
        %v3679 = vadd.f32 %v3641, %v3650
        %v3680 = vadd.f32 %v3642, %v3654
        %v3681 = vadd.f32 %v3643, %v3658
        %v3682 = vadd.f32 %v3644, %v3662
        %v3683 = vmax.f32 %v3667, 0.0
        %v3684 = vmax.f32 %v3668, 0.0
        %v3685 = vmax.f32 %v3669, 0.0
        %v3686 = vmax.f32 %v3670, 0.0
        %v3687 = vmax.f32 %v3671, 0.0
        %v3688 = vmax.f32 %v3672, 0.0
        %v3689 = vmax.f32 %v3673, 0.0
        %v3690 = vmax.f32 %v3674, 0.0
        %v3691 = vmax.f32 %v3675, 0.0
        %v3692 = vmax.f32 %v3676, 0.0
        %v3693 = vmax.f32 %v3677, 0.0
        %v3694 = vmax.f32 %v3678, 0.0
        %v3695 = vmax.f32 %v3679, 0.0
        %v3696 = vmax.f32 %v3680, 0.0
        %v3697 = vmax.f32 %v3681, 0.0
        %v3698 = vmax.f32 %v3682, 0.0
        %v3699 = vpack.c.bf16 %v3687, %v3683
        %v3700 = vpack.c.bf16 %v3688, %v3684
        %v3701 = vpack.c.bf16 %v3689, %v3685
        %v3702 = vpack.c.bf16 %v3690, %v3686
        %v3703 = vpack.c.bf16 %v3695, %v3691
        %v3704 = vpack.c.bf16 %v3696, %v3692
        %v3705 = vpack.c.bf16 %v3697, %v3693
        %v3706 = vpack.c.bf16 %v3698, %v3694
        %v3708 = vshrl.u32 %v3699, 16
        %v3710 = vrot.slane %v3708, 7
        %v3711 = vshll.u32 %v3699, 16
        %v3713 = vor.u32 %v3710, %v3711
        %v3715 = vshrl.u32 %v3700, 16
        %v3717 = vrot.slane %v3715, 7
        %v3718 = vshll.u32 %v3700, 16
        %v3720 = vor.u32 %v3717, %v3718
        %v3722 = vshrl.u32 %v3701, 16
        %v3724 = vrot.slane %v3722, 7
        %v3725 = vshll.u32 %v3701, 16
        %v3727 = vor.u32 %v3724, %v3725
        %v3729 = vshrl.u32 %v3702, 16
        %v3731 = vrot.slane %v3729, 7
        %v3732 = vshll.u32 %v3702, 16
        %v3734 = vor.u32 %v3731, %v3732
        %v3736 = vshrl.u32 %v3703, 16
        %v3738 = vrot.slane %v3736, 7
        %v3739 = vshll.u32 %v3703, 16
        %v3741 = vor.u32 %v3738, %v3739
        %v3743 = vshrl.u32 %v3704, 16
        %v3745 = vrot.slane %v3743, 7
        %v3746 = vshll.u32 %v3704, 16
        %v3748 = vor.u32 %v3745, %v3746
        %v3750 = vshrl.u32 %v3705, 16
        %v3752 = vrot.slane %v3750, 7
        %v3753 = vshll.u32 %v3705, 16
        %v3755 = vor.u32 %v3752, %v3753
        %v3757 = vshrl.u32 %v3706, 16
        %v3759 = vrot.slane %v3757, 7
        %v3760 = vshll.u32 %v3706, 16
        %v3762 = vor.u32 %v3759, %v3760
        %v3779 = vsel %vm478, 0, %v3713
        %v3780 = vsel %vm478, 0, %v3720
        %v3781 = vsel %vm478, 0, %v3727
        %v3782 = vsel %vm478, 0, %v3734
        %v3783 = vsel %vm478, 0, %v3741
        %v3784 = vsel %vm478, 0, %v3748
        %v3785 = vsel %vm478, 0, %v3755
        %v3786 = vsel %vm478, 0, %v3762
        %v3787 = vsel %vm478, %v3710, 0
        %v3788 = vsel %vm478, %v3717, 0
        %v3789 = vsel %vm478, %v3724, 0
        %v3790 = vsel %vm478, %v3731, 0
        %v3791 = vsel %vm478, %v3738, 0
        %v3792 = vsel %vm478, %v3745, 0
        %v3793 = vsel %vm478, %v3752, 0
        %v3794 = vsel %vm478, %v3759, 0
        %v3795 = vld [vmem:[#allocation10] sm:$0xff]
        %v3796 = vld [vmem:[#allocation10 + $0x8] sm:$0xff]
        %v3797 = vld [vmem:[#allocation10 + $0x10] sm:$0xff]
        %v3798 = vld [vmem:[#allocation10 + $0x18] sm:$0xff]
        %v3799 = vld [vmem:[#allocation10 + $0x20] sm:$0xff]
        %v3800 = vld [vmem:[#allocation10 + $0x28] sm:$0xff]
        %v3801 = vld [vmem:[#allocation10 + $0x30] sm:$0xff]
        %v3802 = vld [vmem:[#allocation10 + $0x38] sm:$0xff]
        %v3803 = vld [vmem:[#allocation10 + $0x40] sm:$0xff]
        %v3804 = vld [vmem:[#allocation10 + $0x48] sm:$0xff]
        %v3805 = vld [vmem:[#allocation10 + $0x50] sm:$0xff]
        %v3806 = vld [vmem:[#allocation10 + $0x58] sm:$0xff]
        %v3807 = vld [vmem:[#allocation10 + $0x60] sm:$0xff]
        %v3808 = vld [vmem:[#allocation10 + $0x68] sm:$0xff]
        %v3809 = vld [vmem:[#allocation10 + $0x70] sm:$0xff]
        %v3810 = vld [vmem:[#allocation10 + $0x78] sm:$0xff]
        %v3811 = vld [vmem:[#allocation10 + $0x80] sm:$0xff]
        %v3812 = vld [vmem:[#allocation10 + $0x88] sm:$0xff]
        %v3813 = vld [vmem:[#allocation10 + $0x90] sm:$0xff]
        %v3814 = vld [vmem:[#allocation10 + $0x98] sm:$0xff]
        %v3815 = vld [vmem:[#allocation10 + $0xa0] sm:$0xff]
        %v3816 = vld [vmem:[#allocation10 + $0xa8] sm:$0xff]
        %v3817 = vld [vmem:[#allocation10 + $0xb0] sm:$0xff]
        %v3818 = vld [vmem:[#allocation10 + $0xb8] sm:$0xff]
        %v3819 = vld [vmem:[#allocation10 + $0xc0] sm:$0xff]
        %v3820 = vld [vmem:[#allocation10 + $0xc8] sm:$0xff]
        %v3821 = vld [vmem:[#allocation10 + $0xd0] sm:$0xff]
        %v3822 = vld [vmem:[#allocation10 + $0xd8] sm:$0xff]
        %v3823 = vld [vmem:[#allocation10 + $0xe0] sm:$0xff]
        %v3824 = vld [vmem:[#allocation10 + $0xe8] sm:$0xff]
        %v3825 = vld [vmem:[#allocation10 + $0xf0] sm:$0xff]
        %v3826 = vld [vmem:[#allocation10 + $0xf8] sm:$0xff]
        %v3827 = vld [vmem:[#allocation10 + $0x100] sm:$0xff]
        %v3828 = vld [vmem:[#allocation10 + $0x108] sm:$0xff]
        %v3829 = vld [vmem:[#allocation10 + $0x110] sm:$0xff]
        %v3830 = vld [vmem:[#allocation10 + $0x118] sm:$0xff]
        %v3831 = vld [vmem:[#allocation10 + $0x120] sm:$0xff]
        %v3832 = vld [vmem:[#allocation10 + $0x128] sm:$0xff]
        %v3833 = vld [vmem:[#allocation10 + $0x130] sm:$0xff]
        %v3834 = vld [vmem:[#allocation10 + $0x138] sm:$0xff]
        %v3835 = vld [vmem:[#allocation10 + $0x140] sm:$0xff]
        %v3836 = vld [vmem:[#allocation10 + $0x148] sm:$0xff]
        %v3837 = vld [vmem:[#allocation10 + $0x150] sm:$0xff]
        %v3838 = vld [vmem:[#allocation10 + $0x158] sm:$0xff]
        %v3839 = vld [vmem:[#allocation10 + $0x160] sm:$0xff]
        %v3840 = vld [vmem:[#allocation10 + $0x168] sm:$0xff]
        %v3841 = vld [vmem:[#allocation10 + $0x170] sm:$0xff]
        %v3842 = vld [vmem:[#allocation10 + $0x178] sm:$0xff]
        %v3843 = vld [vmem:[#allocation10 + $0x180] sm:$0xff]
        %v3844 = vld [vmem:[#allocation10 + $0x188] sm:$0xff]
        %v3845 = vld [vmem:[#allocation10 + $0x190] sm:$0xff]
        %v3846 = vld [vmem:[#allocation10 + $0x198] sm:$0xff]
        %v3847 = vld [vmem:[#allocation10 + $0x1a0] sm:$0xff]
        %v3848 = vld [vmem:[#allocation10 + $0x1a8] sm:$0xff]
        %v3849 = vld [vmem:[#allocation10 + $0x1b0] sm:$0xff]
        %v3850 = vld [vmem:[#allocation10 + $0x1b8] sm:$0xff]
        %v3851 = vld [vmem:[#allocation10 + $0x1c0] sm:$0xff]
        %v3852 = vld [vmem:[#allocation10 + $0x1c8] sm:$0xff]
        %v3853 = vld [vmem:[#allocation10 + $0x1d0] sm:$0xff]
        %v3854 = vld [vmem:[#allocation10 + $0x1d8] sm:$0xff]
        %v3855 = vld [vmem:[#allocation10 + $0x1e0] sm:$0xff]
        %v3856 = vld [vmem:[#allocation10 + $0x1e8] sm:$0xff]
        %v3857 = vld [vmem:[#allocation10 + $0x1f0] sm:$0xff]
        %v3858 = vld [vmem:[#allocation10 + $0x1f8] sm:$0xff]
        %v3859 = vld [vmem:[#allocation10 + $0x200] sm:$0xff]
        %v3860 = vld [vmem:[#allocation10 + $0x208] sm:$0xff]
        %v3861 = vld [vmem:[#allocation10 + $0x210] sm:$0xff]
        %v3862 = vld [vmem:[#allocation10 + $0x218] sm:$0xff]
        %v3863 = vld [vmem:[#allocation10 + $0x220] sm:$0xff]
        %v3864 = vld [vmem:[#allocation10 + $0x228] sm:$0xff]
        %v3865 = vld [vmem:[#allocation10 + $0x230] sm:$0xff]
        %v3866 = vld [vmem:[#allocation10 + $0x238] sm:$0xff]
        %v3867 = vld [vmem:[#allocation10 + $0x240] sm:$0xff]
        %v3868 = vld [vmem:[#allocation10 + $0x248] sm:$0xff]
        %v3869 = vld [vmem:[#allocation10 + $0x250] sm:$0xff]
        %v3870 = vld [vmem:[#allocation10 + $0x258] sm:$0xff]
        %v3871 = vld [vmem:[#allocation10 + $0x260] sm:$0xff]
        %v3872 = vld [vmem:[#allocation10 + $0x268] sm:$0xff]
        %v3873 = vld [vmem:[#allocation10 + $0x270] sm:$0xff]
        %v3874 = vld [vmem:[#allocation10 + $0x278] sm:$0xff]
        %v3875 = vld [vmem:[#allocation10 + $0x280] sm:$0xff]
        %v3876 = vld [vmem:[#allocation10 + $0x288] sm:$0xff]
        %v3877 = vld [vmem:[#allocation10 + $0x290] sm:$0xff]
        %v3878 = vld [vmem:[#allocation10 + $0x298] sm:$0xff]
        %v3879 = vld [vmem:[#allocation10 + $0x2a0] sm:$0xff]
        %v3880 = vld [vmem:[#allocation10 + $0x2a8] sm:$0xff]
        %v3881 = vld [vmem:[#allocation10 + $0x2b0] sm:$0xff]
        %v3882 = vld [vmem:[#allocation10 + $0x2b8] sm:$0xff]
        %v3883 = vld [vmem:[#allocation10 + $0x2c0] sm:$0xff]
        %v3884 = vld [vmem:[#allocation10 + $0x2c8] sm:$0xff]
        %v3885 = vld [vmem:[#allocation10 + $0x2d0] sm:$0xff]
        %v3886 = vld [vmem:[#allocation10 + $0x2d8] sm:$0xff]
        %v3887 = vld [vmem:[#allocation10 + $0x2e0] sm:$0xff]
        %v3888 = vld [vmem:[#allocation10 + $0x2e8] sm:$0xff]
        %v3889 = vld [vmem:[#allocation10 + $0x2f0] sm:$0xff]
        %v3890 = vld [vmem:[#allocation10 + $0x2f8] sm:$0xff]
        %v3891 = vld [vmem:[#allocation10 + $0x300] sm:$0xff]
        %v3892 = vld [vmem:[#allocation10 + $0x308] sm:$0xff]
        %v3893 = vld [vmem:[#allocation10 + $0x310] sm:$0xff]
        %v3894 = vld [vmem:[#allocation10 + $0x318] sm:$0xff]
        %v3895 = vld [vmem:[#allocation10 + $0x320] sm:$0xff]
        %v3896 = vld [vmem:[#allocation10 + $0x328] sm:$0xff]
        %v3897 = vld [vmem:[#allocation10 + $0x330] sm:$0xff]
        %v3898 = vld [vmem:[#allocation10 + $0x338] sm:$0xff]
        %v3899 = vld [vmem:[#allocation10 + $0x340] sm:$0xff]
        %v3900 = vld [vmem:[#allocation10 + $0x348] sm:$0xff]
        %v3901 = vld [vmem:[#allocation10 + $0x350] sm:$0xff]
        %v3902 = vld [vmem:[#allocation10 + $0x358] sm:$0xff]
        %v3903 = vld [vmem:[#allocation10 + $0x360] sm:$0xff]
        %v3904 = vld [vmem:[#allocation10 + $0x368] sm:$0xff]
        %v3905 = vld [vmem:[#allocation10 + $0x370] sm:$0xff]
        %v3906 = vld [vmem:[#allocation10 + $0x378] sm:$0xff]
        %v3907 = vld [vmem:[#allocation10 + $0x380] sm:$0xff]
        %v3908 = vld [vmem:[#allocation10 + $0x388] sm:$0xff]
        %v3909 = vld [vmem:[#allocation10 + $0x390] sm:$0xff]
        %v3910 = vld [vmem:[#allocation10 + $0x398] sm:$0xff]
        %v3911 = vld [vmem:[#allocation10 + $0x3a0] sm:$0xff]
        %v3912 = vld [vmem:[#allocation10 + $0x3a8] sm:$0xff]
        %v3913 = vld [vmem:[#allocation10 + $0x3b0] sm:$0xff]
        %v3914 = vld [vmem:[#allocation10 + $0x3b8] sm:$0xff]
        %v3915 = vld [vmem:[#allocation10 + $0x3c0] sm:$0xff]
        %v3916 = vld [vmem:[#allocation10 + $0x3c8] sm:$0xff]
        %v3917 = vld [vmem:[#allocation10 + $0x3d0] sm:$0xff]
        %v3918 = vld [vmem:[#allocation10 + $0x3d8] sm:$0xff]
        %v3919 = vld [vmem:[#allocation10 + $0x3e0] sm:$0xff]
        %v3920 = vld [vmem:[#allocation10 + $0x3e8] sm:$0xff]
        %v3921 = vld [vmem:[#allocation10 + $0x3f0] sm:$0xff]
        %v3922 = vld [vmem:[#allocation10 + $0x3f8] sm:$0xff]
        %v3924 = vshrl.u32 %v3779, 16
        %v3926 = vshll.u32 %v3779, 16
        %v3928 = vrot.slane %v3926, 1
        %v3929 = vor.u32 %v3924, %v3928
        %v3931 = vshll.u32 %v3787, 16
        %v3933 = vrot.slane %v3931, 1
        %v3934 = vsel %vm623, %v3929, %v3933
        %v3936 = vshrl.u32 %v3780, 16
        %v3938 = vshll.u32 %v3780, 16
        %v3940 = vrot.slane %v3938, 1
        %v3941 = vor.u32 %v3936, %v3940
        %v3943 = vshll.u32 %v3788, 16
        %v3945 = vrot.slane %v3943, 1
        %v3946 = vsel %vm623, %v3941, %v3945
        %v3948 = vshrl.u32 %v3781, 16
        %v3950 = vshll.u32 %v3781, 16
        %v3952 = vrot.slane %v3950, 1
        %v3953 = vor.u32 %v3948, %v3952
        %v3955 = vshll.u32 %v3789, 16
        %v3957 = vrot.slane %v3955, 1
        %v3958 = vsel %vm623, %v3953, %v3957
        %v3960 = vshrl.u32 %v3782, 16
        %v3962 = vshll.u32 %v3782, 16
        %v3964 = vrot.slane %v3962, 1
        %v3965 = vor.u32 %v3960, %v3964
        %v3967 = vshll.u32 %v3790, 16
        %v3969 = vrot.slane %v3967, 1
        %v3970 = vsel %vm623, %v3965, %v3969
        %v3972 = vshrl.u32 %v3783, 16
        %v3974 = vshll.u32 %v3783, 16
        %v3976 = vrot.slane %v3974, 1
        %v3977 = vor.u32 %v3972, %v3976
        %v3979 = vshll.u32 %v3791, 16
        %v3981 = vrot.slane %v3979, 1
        %v3982 = vsel %vm623, %v3977, %v3981
        %v3984 = vshrl.u32 %v3784, 16
        %v3986 = vshll.u32 %v3784, 16
        %v3988 = vrot.slane %v3986, 1
        %v3989 = vor.u32 %v3984, %v3988
        %v3991 = vshll.u32 %v3792, 16
        %v3993 = vrot.slane %v3991, 1
        %v3994 = vsel %vm623, %v3989, %v3993
        %v3996 = vshrl.u32 %v3785, 16
        %v3998 = vshll.u32 %v3785, 16
        %v4000 = vrot.slane %v3998, 1
        %v4001 = vor.u32 %v3996, %v4000
        %v4003 = vshll.u32 %v3793, 16
        %v4005 = vrot.slane %v4003, 1
        %v4006 = vsel %vm623, %v4001, %v4005
        %v4008 = vshrl.u32 %v3786, 16
        %v4010 = vshll.u32 %v3786, 16
        %v4012 = vrot.slane %v4010, 1
        %v4013 = vor.u32 %v4008, %v4012
        %v4015 = vshll.u32 %v3794, 16
        %v4017 = vrot.slane %v4015, 1
        %v4018 = vsel %vm623, %v4013, %v4017
        %s4027 = scalar_lea.vmem [#allocation10], 1024
        %v4028 = vld [vmem:[%s4027] sm:$0xff]
        %v4029 = vld [vmem:[%s4027 + $0x8] sm:$0xff]
        %v4030 = vld [vmem:[%s4027 + $0x10] sm:$0xff]
        %v4031 = vld [vmem:[%s4027 + $0x18] sm:$0xff]
        %v4032 = vld [vmem:[%s4027 + $0x20] sm:$0xff]
        %v4033 = vld [vmem:[%s4027 + $0x28] sm:$0xff]
        %v4034 = vld [vmem:[%s4027 + $0x30] sm:$0xff]
        %v4035 = vld [vmem:[%s4027 + $0x38] sm:$0xff]
        %v4036 = vld [vmem:[%s4027 + $0x40] sm:$0xff]
        %v4037 = vld [vmem:[%s4027 + $0x48] sm:$0xff]
        %v4038 = vld [vmem:[%s4027 + $0x50] sm:$0xff]
        %v4039 = vld [vmem:[%s4027 + $0x58] sm:$0xff]
        %v4040 = vld [vmem:[%s4027 + $0x60] sm:$0xff]
        %v4041 = vld [vmem:[%s4027 + $0x68] sm:$0xff]
        %v4042 = vld [vmem:[%s4027 + $0x70] sm:$0xff]
        %v4043 = vld [vmem:[%s4027 + $0x78] sm:$0xff]
        %v4044 = vld [vmem:[%s4027 + $0x80] sm:$0xff]
        %v4045 = vld [vmem:[%s4027 + $0x88] sm:$0xff]
        %v4046 = vld [vmem:[%s4027 + $0x90] sm:$0xff]
        %v4047 = vld [vmem:[%s4027 + $0x98] sm:$0xff]
        %v4048 = vld [vmem:[%s4027 + $0xa0] sm:$0xff]
        %v4049 = vld [vmem:[%s4027 + $0xa8] sm:$0xff]
        %v4050 = vld [vmem:[%s4027 + $0xb0] sm:$0xff]
        %v4051 = vld [vmem:[%s4027 + $0xb8] sm:$0xff]
        %v4052 = vld [vmem:[%s4027 + $0xc0] sm:$0xff]
        %v4053 = vld [vmem:[%s4027 + $0xc8] sm:$0xff]
        %v4054 = vld [vmem:[%s4027 + $0xd0] sm:$0xff]
        %v4055 = vld [vmem:[%s4027 + $0xd8] sm:$0xff]
        %v4056 = vld [vmem:[%s4027 + $0xe0] sm:$0xff]
        %v4057 = vld [vmem:[%s4027 + $0xe8] sm:$0xff]
        %v4058 = vld [vmem:[%s4027 + $0xf0] sm:$0xff]
        %v4059 = vld [vmem:[%s4027 + $0xf8] sm:$0xff]
        %v4060 = vld [vmem:[%s4027 + $0x100] sm:$0xff]
        %v4061 = vld [vmem:[%s4027 + $0x108] sm:$0xff]
        %v4062 = vld [vmem:[%s4027 + $0x110] sm:$0xff]
        %v4063 = vld [vmem:[%s4027 + $0x118] sm:$0xff]
        %v4064 = vld [vmem:[%s4027 + $0x120] sm:$0xff]
        %v4065 = vld [vmem:[%s4027 + $0x128] sm:$0xff]
        %v4066 = vld [vmem:[%s4027 + $0x130] sm:$0xff]
        %v4067 = vld [vmem:[%s4027 + $0x138] sm:$0xff]
        %v4068 = vld [vmem:[%s4027 + $0x140] sm:$0xff]
        %v4069 = vld [vmem:[%s4027 + $0x148] sm:$0xff]
        %v4070 = vld [vmem:[%s4027 + $0x150] sm:$0xff]
        %v4071 = vld [vmem:[%s4027 + $0x158] sm:$0xff]
        %v4072 = vld [vmem:[%s4027 + $0x160] sm:$0xff]
        %v4073 = vld [vmem:[%s4027 + $0x168] sm:$0xff]
        %v4074 = vld [vmem:[%s4027 + $0x170] sm:$0xff]
        %v4075 = vld [vmem:[%s4027 + $0x178] sm:$0xff]
        %v4076 = vld [vmem:[%s4027 + $0x180] sm:$0xff]
        %v4077 = vld [vmem:[%s4027 + $0x188] sm:$0xff]
        %v4078 = vld [vmem:[%s4027 + $0x190] sm:$0xff]
        %v4079 = vld [vmem:[%s4027 + $0x198] sm:$0xff]
        %v4080 = vld [vmem:[%s4027 + $0x1a0] sm:$0xff]
        %v4081 = vld [vmem:[%s4027 + $0x1a8] sm:$0xff]
        %v4082 = vld [vmem:[%s4027 + $0x1b0] sm:$0xff]
        %v4083 = vld [vmem:[%s4027 + $0x1b8] sm:$0xff]
        %v4084 = vld [vmem:[%s4027 + $0x1c0] sm:$0xff]
        %v4085 = vld [vmem:[%s4027 + $0x1c8] sm:$0xff]
        %v4086 = vld [vmem:[%s4027 + $0x1d0] sm:$0xff]
        %v4087 = vld [vmem:[%s4027 + $0x1d8] sm:$0xff]
        %v4088 = vld [vmem:[%s4027 + $0x1e0] sm:$0xff]
        %v4089 = vld [vmem:[%s4027 + $0x1e8] sm:$0xff]
        %v4090 = vld [vmem:[%s4027 + $0x1f0] sm:$0xff]
        %v4091 = vld [vmem:[%s4027 + $0x1f8] sm:$0xff]
        %v4092 = vld [vmem:[%s4027 + $0x200] sm:$0xff]
        %v4093 = vld [vmem:[%s4027 + $0x208] sm:$0xff]
        %v4094 = vld [vmem:[%s4027 + $0x210] sm:$0xff]
        %v4095 = vld [vmem:[%s4027 + $0x218] sm:$0xff]
        %v4096 = vld [vmem:[%s4027 + $0x220] sm:$0xff]
        %v4097 = vld [vmem:[%s4027 + $0x228] sm:$0xff]
        %v4098 = vld [vmem:[%s4027 + $0x230] sm:$0xff]
        %v4099 = vld [vmem:[%s4027 + $0x238] sm:$0xff]
        %v4100 = vld [vmem:[%s4027 + $0x240] sm:$0xff]
        %v4101 = vld [vmem:[%s4027 + $0x248] sm:$0xff]
        %v4102 = vld [vmem:[%s4027 + $0x250] sm:$0xff]
        %v4103 = vld [vmem:[%s4027 + $0x258] sm:$0xff]
        %v4104 = vld [vmem:[%s4027 + $0x260] sm:$0xff]
        %v4105 = vld [vmem:[%s4027 + $0x268] sm:$0xff]
        %v4106 = vld [vmem:[%s4027 + $0x270] sm:$0xff]
        %v4107 = vld [vmem:[%s4027 + $0x278] sm:$0xff]
        %v4108 = vld [vmem:[%s4027 + $0x280] sm:$0xff]
        %v4109 = vld [vmem:[%s4027 + $0x288] sm:$0xff]
        %v4110 = vld [vmem:[%s4027 + $0x290] sm:$0xff]
        %v4111 = vld [vmem:[%s4027 + $0x298] sm:$0xff]
        %v4112 = vld [vmem:[%s4027 + $0x2a0] sm:$0xff]
        %v4113 = vld [vmem:[%s4027 + $0x2a8] sm:$0xff]
        %v4114 = vld [vmem:[%s4027 + $0x2b0] sm:$0xff]
        %v4115 = vld [vmem:[%s4027 + $0x2b8] sm:$0xff]
        %v4116 = vld [vmem:[%s4027 + $0x2c0] sm:$0xff]
        %v4117 = vld [vmem:[%s4027 + $0x2c8] sm:$0xff]
        %v4118 = vld [vmem:[%s4027 + $0x2d0] sm:$0xff]
        %v4119 = vld [vmem:[%s4027 + $0x2d8] sm:$0xff]
        %v4120 = vld [vmem:[%s4027 + $0x2e0] sm:$0xff]
        %v4121 = vld [vmem:[%s4027 + $0x2e8] sm:$0xff]
        %v4122 = vld [vmem:[%s4027 + $0x2f0] sm:$0xff]
        %v4123 = vld [vmem:[%s4027 + $0x2f8] sm:$0xff]
        %v4124 = vld [vmem:[%s4027 + $0x300] sm:$0xff]
        %v4125 = vld [vmem:[%s4027 + $0x308] sm:$0xff]
        %v4126 = vld [vmem:[%s4027 + $0x310] sm:$0xff]
        %v4127 = vld [vmem:[%s4027 + $0x318] sm:$0xff]
        %v4128 = vld [vmem:[%s4027 + $0x320] sm:$0xff]
        %v4129 = vld [vmem:[%s4027 + $0x328] sm:$0xff]
        %v4130 = vld [vmem:[%s4027 + $0x330] sm:$0xff]
        %v4131 = vld [vmem:[%s4027 + $0x338] sm:$0xff]
        %v4132 = vld [vmem:[%s4027 + $0x340] sm:$0xff]
        %v4133 = vld [vmem:[%s4027 + $0x348] sm:$0xff]
        %v4134 = vld [vmem:[%s4027 + $0x350] sm:$0xff]
        %v4135 = vld [vmem:[%s4027 + $0x358] sm:$0xff]
        %v4136 = vld [vmem:[%s4027 + $0x360] sm:$0xff]
        %v4137 = vld [vmem:[%s4027 + $0x368] sm:$0xff]
        %v4138 = vld [vmem:[%s4027 + $0x370] sm:$0xff]
        %v4139 = vld [vmem:[%s4027 + $0x378] sm:$0xff]
        %v4140 = vld [vmem:[%s4027 + $0x380] sm:$0xff]
        %v4141 = vld [vmem:[%s4027 + $0x388] sm:$0xff]
        %v4142 = vld [vmem:[%s4027 + $0x390] sm:$0xff]
        %v4143 = vld [vmem:[%s4027 + $0x398] sm:$0xff]
        %v4144 = vld [vmem:[%s4027 + $0x3a0] sm:$0xff]
        %v4145 = vld [vmem:[%s4027 + $0x3a8] sm:$0xff]
        %v4146 = vld [vmem:[%s4027 + $0x3b0] sm:$0xff]
        %v4147 = vld [vmem:[%s4027 + $0x3b8] sm:$0xff]
        %v4148 = vld [vmem:[%s4027 + $0x3c0] sm:$0xff]
        %v4149 = vld [vmem:[%s4027 + $0x3c8] sm:$0xff]
        %v4150 = vld [vmem:[%s4027 + $0x3d0] sm:$0xff]
        %v4151 = vld [vmem:[%s4027 + $0x3d8] sm:$0xff]
        %v4152 = vld [vmem:[%s4027 + $0x3e0] sm:$0xff]
        %v4153 = vld [vmem:[%s4027 + $0x3e8] sm:$0xff]
        %v4154 = vld [vmem:[%s4027 + $0x3f0] sm:$0xff]
        %v4155 = vld [vmem:[%s4027 + $0x3f8] sm:$0xff]
        %v4284 = vunpack.c.l.b16 %v4028
        %v4285 = vunpack.c.h.b16 %v4028
        %v4286 = vunpack.c.l.b16 %v4029
        %v4287 = vunpack.c.h.b16 %v4029
        %v4288 = vunpack.c.l.b16 %v4030
        %v4289 = vunpack.c.h.b16 %v4030
        %v4290 = vunpack.c.l.b16 %v4031
        %v4291 = vunpack.c.h.b16 %v4031
        %v4292 = vunpack.c.l.b16 %v4032
        %v4293 = vunpack.c.h.b16 %v4032
        %v4294 = vunpack.c.l.b16 %v4033
        %v4295 = vunpack.c.h.b16 %v4033
        %v4296 = vunpack.c.l.b16 %v4034
        %v4297 = vunpack.c.h.b16 %v4034
        %v4298 = vunpack.c.l.b16 %v4035
        %v4299 = vunpack.c.h.b16 %v4035
        %v4300 = vunpack.c.l.b16 %v4036
        %v4301 = vunpack.c.h.b16 %v4036
        %v4302 = vunpack.c.l.b16 %v4037
        %v4303 = vunpack.c.h.b16 %v4037
        %v4304 = vunpack.c.l.b16 %v4038
        %v4305 = vunpack.c.h.b16 %v4038
        %v4306 = vunpack.c.l.b16 %v4039
        %v4307 = vunpack.c.h.b16 %v4039
        %v4308 = vunpack.c.l.b16 %v4040
        %v4309 = vunpack.c.h.b16 %v4040
        %v4310 = vunpack.c.l.b16 %v4041
        %v4311 = vunpack.c.h.b16 %v4041
        %v4312 = vunpack.c.l.b16 %v4042
        %v4313 = vunpack.c.h.b16 %v4042
        %v4314 = vunpack.c.l.b16 %v4043
        %v4315 = vunpack.c.h.b16 %v4043
        %v4316 = vunpack.c.l.b16 %v4044
        %v4317 = vunpack.c.h.b16 %v4044
        %v4318 = vunpack.c.l.b16 %v4045
        %v4319 = vunpack.c.h.b16 %v4045
        %v4320 = vunpack.c.l.b16 %v4046
        %v4321 = vunpack.c.h.b16 %v4046
        %v4322 = vunpack.c.l.b16 %v4047
        %v4323 = vunpack.c.h.b16 %v4047
        %v4324 = vunpack.c.l.b16 %v4048
        %v4325 = vunpack.c.h.b16 %v4048
        %v4326 = vunpack.c.l.b16 %v4049
        %v4327 = vunpack.c.h.b16 %v4049
        %v4328 = vunpack.c.l.b16 %v4050
        %v4329 = vunpack.c.h.b16 %v4050
        %v4330 = vunpack.c.l.b16 %v4051
        %v4331 = vunpack.c.h.b16 %v4051
        %v4332 = vunpack.c.l.b16 %v4052
        %v4333 = vunpack.c.h.b16 %v4052
        %v4334 = vunpack.c.l.b16 %v4053
        %v4335 = vunpack.c.h.b16 %v4053
        %v4336 = vunpack.c.l.b16 %v4054
        %v4337 = vunpack.c.h.b16 %v4054
        %v4338 = vunpack.c.l.b16 %v4055
        %v4339 = vunpack.c.h.b16 %v4055
        %v4340 = vunpack.c.l.b16 %v4056
        %v4341 = vunpack.c.h.b16 %v4056
        %v4342 = vunpack.c.l.b16 %v4057
        %v4343 = vunpack.c.h.b16 %v4057
        %v4344 = vunpack.c.l.b16 %v4058
        %v4345 = vunpack.c.h.b16 %v4058
        %v4346 = vunpack.c.l.b16 %v4059
        %v4347 = vunpack.c.h.b16 %v4059
        %v4348 = vunpack.c.l.b16 %v4060
        %v4349 = vunpack.c.h.b16 %v4060
        %v4350 = vunpack.c.l.b16 %v4061
        %v4351 = vunpack.c.h.b16 %v4061
        %v4352 = vunpack.c.l.b16 %v4062
        %v4353 = vunpack.c.h.b16 %v4062
        %v4354 = vunpack.c.l.b16 %v4063
        %v4355 = vunpack.c.h.b16 %v4063
        %v4356 = vunpack.c.l.b16 %v4064
        %v4357 = vunpack.c.h.b16 %v4064
        %v4358 = vunpack.c.l.b16 %v4065
        %v4359 = vunpack.c.h.b16 %v4065
        %v4360 = vunpack.c.l.b16 %v4066
        %v4361 = vunpack.c.h.b16 %v4066
        %v4362 = vunpack.c.l.b16 %v4067
        %v4363 = vunpack.c.h.b16 %v4067
        %v4364 = vunpack.c.l.b16 %v4068
        %v4365 = vunpack.c.h.b16 %v4068
        %v4366 = vunpack.c.l.b16 %v4069
        %v4367 = vunpack.c.h.b16 %v4069
        %v4368 = vunpack.c.l.b16 %v4070
        %v4369 = vunpack.c.h.b16 %v4070
        %v4370 = vunpack.c.l.b16 %v4071
        %v4371 = vunpack.c.h.b16 %v4071
        %v4372 = vunpack.c.l.b16 %v4072
        %v4373 = vunpack.c.h.b16 %v4072
        %v4374 = vunpack.c.l.b16 %v4073
        %v4375 = vunpack.c.h.b16 %v4073
        %v4376 = vunpack.c.l.b16 %v4074
        %v4377 = vunpack.c.h.b16 %v4074
        %v4378 = vunpack.c.l.b16 %v4075
        %v4379 = vunpack.c.h.b16 %v4075
        %v4380 = vunpack.c.l.b16 %v4076
        %v4381 = vunpack.c.h.b16 %v4076
        %v4382 = vunpack.c.l.b16 %v4077
        %v4383 = vunpack.c.h.b16 %v4077
        %v4384 = vunpack.c.l.b16 %v4078
        %v4385 = vunpack.c.h.b16 %v4078
        %v4386 = vunpack.c.l.b16 %v4079
        %v4387 = vunpack.c.h.b16 %v4079
        %v4388 = vunpack.c.l.b16 %v4080
        %v4389 = vunpack.c.h.b16 %v4080
        %v4390 = vunpack.c.l.b16 %v4081
        %v4391 = vunpack.c.h.b16 %v4081
        %v4392 = vunpack.c.l.b16 %v4082
        %v4393 = vunpack.c.h.b16 %v4082
        %v4394 = vunpack.c.l.b16 %v4083
        %v4395 = vunpack.c.h.b16 %v4083
        %v4396 = vunpack.c.l.b16 %v4084
        %v4397 = vunpack.c.h.b16 %v4084
        %v4398 = vunpack.c.l.b16 %v4085
        %v4399 = vunpack.c.h.b16 %v4085
        %v4400 = vunpack.c.l.b16 %v4086
        %v4401 = vunpack.c.h.b16 %v4086
        %v4402 = vunpack.c.l.b16 %v4087
        %v4403 = vunpack.c.h.b16 %v4087
        %v4404 = vunpack.c.l.b16 %v4088
        %v4405 = vunpack.c.h.b16 %v4088
        %v4406 = vunpack.c.l.b16 %v4089
        %v4407 = vunpack.c.h.b16 %v4089
        %v4408 = vunpack.c.l.b16 %v4090
        %v4409 = vunpack.c.h.b16 %v4090
        %v4410 = vunpack.c.l.b16 %v4091
        %v4411 = vunpack.c.h.b16 %v4091
        %v4412 = vunpack.c.l.b16 %v4092
        %v4413 = vunpack.c.h.b16 %v4092
        %v4414 = vunpack.c.l.b16 %v4093
        %v4415 = vunpack.c.h.b16 %v4093
        %v4416 = vunpack.c.l.b16 %v4094
        %v4417 = vunpack.c.h.b16 %v4094
        %v4418 = vunpack.c.l.b16 %v4095
        %v4419 = vunpack.c.h.b16 %v4095
        %v4420 = vunpack.c.l.b16 %v4096
        %v4421 = vunpack.c.h.b16 %v4096
        %v4422 = vunpack.c.l.b16 %v4097
        %v4423 = vunpack.c.h.b16 %v4097
        %v4424 = vunpack.c.l.b16 %v4098
        %v4425 = vunpack.c.h.b16 %v4098
        %v4426 = vunpack.c.l.b16 %v4099
        %v4427 = vunpack.c.h.b16 %v4099
        %v4428 = vunpack.c.l.b16 %v4100
        %v4429 = vunpack.c.h.b16 %v4100
        %v4430 = vunpack.c.l.b16 %v4101
        %v4431 = vunpack.c.h.b16 %v4101
        %v4432 = vunpack.c.l.b16 %v4102
        %v4433 = vunpack.c.h.b16 %v4102
        %v4434 = vunpack.c.l.b16 %v4103
        %v4435 = vunpack.c.h.b16 %v4103
        %v4436 = vunpack.c.l.b16 %v4104
        %v4437 = vunpack.c.h.b16 %v4104
        %v4438 = vunpack.c.l.b16 %v4105
        %v4439 = vunpack.c.h.b16 %v4105
        %v4440 = vunpack.c.l.b16 %v4106
        %v4441 = vunpack.c.h.b16 %v4106
        %v4442 = vunpack.c.l.b16 %v4107
        %v4443 = vunpack.c.h.b16 %v4107
        %v4444 = vunpack.c.l.b16 %v4108
        %v4445 = vunpack.c.h.b16 %v4108
        %v4446 = vunpack.c.l.b16 %v4109
        %v4447 = vunpack.c.h.b16 %v4109
        %v4448 = vunpack.c.l.b16 %v4110
        %v4449 = vunpack.c.h.b16 %v4110
        %v4450 = vunpack.c.l.b16 %v4111
        %v4451 = vunpack.c.h.b16 %v4111
        %v4452 = vunpack.c.l.b16 %v4112
        %v4453 = vunpack.c.h.b16 %v4112
        %v4454 = vunpack.c.l.b16 %v4113
        %v4455 = vunpack.c.h.b16 %v4113
        %v4456 = vunpack.c.l.b16 %v4114
        %v4457 = vunpack.c.h.b16 %v4114
        %v4458 = vunpack.c.l.b16 %v4115
        %v4459 = vunpack.c.h.b16 %v4115
        %v4460 = vunpack.c.l.b16 %v4116
        %v4461 = vunpack.c.h.b16 %v4116
        %v4462 = vunpack.c.l.b16 %v4117
        %v4463 = vunpack.c.h.b16 %v4117
        %v4464 = vunpack.c.l.b16 %v4118
        %v4465 = vunpack.c.h.b16 %v4118
        %v4466 = vunpack.c.l.b16 %v4119
        %v4467 = vunpack.c.h.b16 %v4119
        %v4468 = vunpack.c.l.b16 %v4120
        %v4469 = vunpack.c.h.b16 %v4120
        %v4470 = vunpack.c.l.b16 %v4121
        %v4471 = vunpack.c.h.b16 %v4121
        %v4472 = vunpack.c.l.b16 %v4122
        %v4473 = vunpack.c.h.b16 %v4122
        %v4474 = vunpack.c.l.b16 %v4123
        %v4475 = vunpack.c.h.b16 %v4123
        %v4476 = vunpack.c.l.b16 %v4124
        %v4477 = vunpack.c.h.b16 %v4124
        %v4478 = vunpack.c.l.b16 %v4125
        %v4479 = vunpack.c.h.b16 %v4125
        %v4480 = vunpack.c.l.b16 %v4126
        %v4481 = vunpack.c.h.b16 %v4126
        %v4482 = vunpack.c.l.b16 %v4127
        %v4483 = vunpack.c.h.b16 %v4127
        %v4484 = vunpack.c.l.b16 %v4128
        %v4485 = vunpack.c.h.b16 %v4128
        %v4486 = vunpack.c.l.b16 %v4129
        %v4487 = vunpack.c.h.b16 %v4129
        %v4488 = vunpack.c.l.b16 %v4130
        %v4489 = vunpack.c.h.b16 %v4130
        %v4490 = vunpack.c.l.b16 %v4131
        %v4491 = vunpack.c.h.b16 %v4131
        %v4492 = vunpack.c.l.b16 %v4132
        %v4493 = vunpack.c.h.b16 %v4132
        %v4494 = vunpack.c.l.b16 %v4133
        %v4495 = vunpack.c.h.b16 %v4133
        %v4496 = vunpack.c.l.b16 %v4134
        %v4497 = vunpack.c.h.b16 %v4134
        %v4498 = vunpack.c.l.b16 %v4135
        %v4499 = vunpack.c.h.b16 %v4135
        %v4500 = vunpack.c.l.b16 %v4136
        %v4501 = vunpack.c.h.b16 %v4136
        %v4502 = vunpack.c.l.b16 %v4137
        %v4503 = vunpack.c.h.b16 %v4137
        %v4504 = vunpack.c.l.b16 %v4138
        %v4505 = vunpack.c.h.b16 %v4138
        %v4506 = vunpack.c.l.b16 %v4139
        %v4507 = vunpack.c.h.b16 %v4139
        %v4508 = vunpack.c.l.b16 %v4140
        %v4509 = vunpack.c.h.b16 %v4140
        %v4510 = vunpack.c.l.b16 %v4141
        %v4511 = vunpack.c.h.b16 %v4141
        %v4512 = vunpack.c.l.b16 %v4142
        %v4513 = vunpack.c.h.b16 %v4142
        %v4514 = vunpack.c.l.b16 %v4143
        %v4515 = vunpack.c.h.b16 %v4143
        %v4516 = vunpack.c.l.b16 %v4144
        %v4517 = vunpack.c.h.b16 %v4144
        %v4518 = vunpack.c.l.b16 %v4145
        %v4519 = vunpack.c.h.b16 %v4145
        %v4520 = vunpack.c.l.b16 %v4146
        %v4521 = vunpack.c.h.b16 %v4146
        %v4522 = vunpack.c.l.b16 %v4147
        %v4523 = vunpack.c.h.b16 %v4147
        %v4524 = vunpack.c.l.b16 %v4148
        %v4525 = vunpack.c.h.b16 %v4148
        %v4526 = vunpack.c.l.b16 %v4149
        %v4527 = vunpack.c.h.b16 %v4149
        %v4528 = vunpack.c.l.b16 %v4150
        %v4529 = vunpack.c.h.b16 %v4150
        %v4530 = vunpack.c.l.b16 %v4151
        %v4531 = vunpack.c.h.b16 %v4151
        %v4532 = vunpack.c.l.b16 %v4152
        %v4533 = vunpack.c.h.b16 %v4152
        %v4534 = vunpack.c.l.b16 %v4153
        %v4535 = vunpack.c.h.b16 %v4153
        %v4536 = vunpack.c.l.b16 %v4154
        %v4537 = vunpack.c.h.b16 %v4154
        %v4538 = vunpack.c.l.b16 %v4155
        %v4539 = vunpack.c.h.b16 %v4155
        %v4540 = vpack.c.b16 %v4288, %v4284
        %v4541 = vpack.c.b16 %v4289, %v4285
        %v4542 = vpack.c.b16 %v4290, %v4286
        %v4543 = vpack.c.b16 %v4291, %v4287
        %v4544 = vpack.c.b16 %v4296, %v4292
        %v4545 = vpack.c.b16 %v4297, %v4293
        %v4546 = vpack.c.b16 %v4298, %v4294
        %v4547 = vpack.c.b16 %v4299, %v4295
        %v4548 = vpack.c.b16 %v4304, %v4300
        %v4549 = vpack.c.b16 %v4305, %v4301
        %v4550 = vpack.c.b16 %v4306, %v4302
        %v4551 = vpack.c.b16 %v4307, %v4303
        %v4552 = vpack.c.b16 %v4312, %v4308
        %v4553 = vpack.c.b16 %v4313, %v4309
        %v4554 = vpack.c.b16 %v4314, %v4310
        %v4555 = vpack.c.b16 %v4315, %v4311
        %v4556 = vpack.c.b16 %v4320, %v4316
        %v4557 = vpack.c.b16 %v4321, %v4317
        %v4558 = vpack.c.b16 %v4322, %v4318
        %v4559 = vpack.c.b16 %v4323, %v4319
        %v4560 = vpack.c.b16 %v4328, %v4324
        %v4561 = vpack.c.b16 %v4329, %v4325
        %v4562 = vpack.c.b16 %v4330, %v4326
        %v4563 = vpack.c.b16 %v4331, %v4327
        %v4564 = vpack.c.b16 %v4336, %v4332
        %v4565 = vpack.c.b16 %v4337, %v4333
        %v4566 = vpack.c.b16 %v4338, %v4334
        %v4567 = vpack.c.b16 %v4339, %v4335
        %v4568 = vpack.c.b16 %v4344, %v4340
        %v4569 = vpack.c.b16 %v4345, %v4341
        %v4570 = vpack.c.b16 %v4346, %v4342
        %v4571 = vpack.c.b16 %v4347, %v4343
        %v4572 = vpack.c.b16 %v4352, %v4348
        %v4573 = vpack.c.b16 %v4353, %v4349
        %v4574 = vpack.c.b16 %v4354, %v4350
        %v4575 = vpack.c.b16 %v4355, %v4351
        %v4576 = vpack.c.b16 %v4360, %v4356
        %v4577 = vpack.c.b16 %v4361, %v4357
        %v4578 = vpack.c.b16 %v4362, %v4358
        %v4579 = vpack.c.b16 %v4363, %v4359
        %v4580 = vpack.c.b16 %v4368, %v4364
        %v4581 = vpack.c.b16 %v4369, %v4365
        %v4582 = vpack.c.b16 %v4370, %v4366
        %v4583 = vpack.c.b16 %v4371, %v4367
        %v4584 = vpack.c.b16 %v4376, %v4372
        %v4585 = vpack.c.b16 %v4377, %v4373
        %v4586 = vpack.c.b16 %v4378, %v4374
        %v4587 = vpack.c.b16 %v4379, %v4375
        %v4588 = vpack.c.b16 %v4384, %v4380
        %v4589 = vpack.c.b16 %v4385, %v4381
        %v4590 = vpack.c.b16 %v4386, %v4382
        %v4591 = vpack.c.b16 %v4387, %v4383
        %v4592 = vpack.c.b16 %v4392, %v4388
        %v4593 = vpack.c.b16 %v4393, %v4389
        %v4594 = vpack.c.b16 %v4394, %v4390
        %v4595 = vpack.c.b16 %v4395, %v4391
        %v4596 = vpack.c.b16 %v4400, %v4396
        %v4597 = vpack.c.b16 %v4401, %v4397
        %v4598 = vpack.c.b16 %v4402, %v4398
        %v4599 = vpack.c.b16 %v4403, %v4399
        %v4600 = vpack.c.b16 %v4408, %v4404
        %v4601 = vpack.c.b16 %v4409, %v4405
        %v4602 = vpack.c.b16 %v4410, %v4406
        %v4603 = vpack.c.b16 %v4411, %v4407
        %v4604 = vpack.c.b16 %v4416, %v4412
        %v4605 = vpack.c.b16 %v4417, %v4413
        %v4606 = vpack.c.b16 %v4418, %v4414
        %v4607 = vpack.c.b16 %v4419, %v4415
        %v4608 = vpack.c.b16 %v4424, %v4420
        %v4609 = vpack.c.b16 %v4425, %v4421
        %v4610 = vpack.c.b16 %v4426, %v4422
        %v4611 = vpack.c.b16 %v4427, %v4423
        %v4612 = vpack.c.b16 %v4432, %v4428
        %v4613 = vpack.c.b16 %v4433, %v4429
        %v4614 = vpack.c.b16 %v4434, %v4430
        %v4615 = vpack.c.b16 %v4435, %v4431
        %v4616 = vpack.c.b16 %v4440, %v4436
        %v4617 = vpack.c.b16 %v4441, %v4437
        %v4618 = vpack.c.b16 %v4442, %v4438
        %v4619 = vpack.c.b16 %v4443, %v4439
        %v4620 = vpack.c.b16 %v4448, %v4444
        %v4621 = vpack.c.b16 %v4449, %v4445
        %v4622 = vpack.c.b16 %v4450, %v4446
        %v4623 = vpack.c.b16 %v4451, %v4447
        %v4624 = vpack.c.b16 %v4456, %v4452
        %v4625 = vpack.c.b16 %v4457, %v4453
        %v4626 = vpack.c.b16 %v4458, %v4454
        %v4627 = vpack.c.b16 %v4459, %v4455
        %v4628 = vpack.c.b16 %v4464, %v4460
        %v4629 = vpack.c.b16 %v4465, %v4461
        %v4630 = vpack.c.b16 %v4466, %v4462
        %v4631 = vpack.c.b16 %v4467, %v4463
        %v4632 = vpack.c.b16 %v4472, %v4468
        %v4633 = vpack.c.b16 %v4473, %v4469
        %v4634 = vpack.c.b16 %v4474, %v4470
        %v4635 = vpack.c.b16 %v4475, %v4471
        %v4636 = vpack.c.b16 %v4480, %v4476
        %v4637 = vpack.c.b16 %v4481, %v4477
        %v4638 = vpack.c.b16 %v4482, %v4478
        %v4639 = vpack.c.b16 %v4483, %v4479
        %v4640 = vpack.c.b16 %v4488, %v4484
        %v4641 = vpack.c.b16 %v4489, %v4485
        %v4642 = vpack.c.b16 %v4490, %v4486
        %v4643 = vpack.c.b16 %v4491, %v4487
        %v4644 = vpack.c.b16 %v4496, %v4492
        %v4645 = vpack.c.b16 %v4497, %v4493
        %v4646 = vpack.c.b16 %v4498, %v4494
        %v4647 = vpack.c.b16 %v4499, %v4495
        %v4648 = vpack.c.b16 %v4504, %v4500
        %v4649 = vpack.c.b16 %v4505, %v4501
        %v4650 = vpack.c.b16 %v4506, %v4502
        %v4651 = vpack.c.b16 %v4507, %v4503
        %v4652 = vpack.c.b16 %v4512, %v4508
        %v4653 = vpack.c.b16 %v4513, %v4509
        %v4654 = vpack.c.b16 %v4514, %v4510
        %v4655 = vpack.c.b16 %v4515, %v4511
        %v4656 = vpack.c.b16 %v4520, %v4516
        %v4657 = vpack.c.b16 %v4521, %v4517
        %v4658 = vpack.c.b16 %v4522, %v4518
        %v4659 = vpack.c.b16 %v4523, %v4519
        %v4660 = vpack.c.b16 %v4528, %v4524
        %v4661 = vpack.c.b16 %v4529, %v4525
        %v4662 = vpack.c.b16 %v4530, %v4526
        %v4663 = vpack.c.b16 %v4531, %v4527
        %v4664 = vpack.c.b16 %v4536, %v4532
        %v4665 = vpack.c.b16 %v4537, %v4533
        %v4666 = vpack.c.b16 %v4538, %v4534
        %v4667 = vpack.c.b16 %v4539, %v4535
        %4796 = vmatprep.subr.bf16.mxu0 %v4541
        %4797 = vmatpush1.bf16.msra.mxu0 %v4540
        %4798 = vmatprep.subr.bf16.mxu0 %v4545
        %4799 = vmatpush1.bf16.msra.mxu0 %v4544
        %4800 = vmatprep.subr.bf16.mxu0 %v4549
        %4801 = vmatpush1.bf16.msra.mxu0 %v4548
        %4802 = vmatprep.subr.bf16.mxu0 %v4553
        %4803 = vmatpush1.bf16.msra.mxu0 %v4552
        %4804 = vmatprep.subr.bf16.mxu0 %v4557
        %4805 = vmatpush1.bf16.msra.mxu0 %v4556
        %4806 = vmatprep.subr.bf16.mxu0 %v4561
        %4807 = vmatpush1.bf16.msra.mxu0 %v4560
        %4808 = vmatprep.subr.bf16.mxu0 %v4565
        %4809 = vmatpush1.bf16.msra.mxu0 %v4564
        %4810 = vmatprep.subr.bf16.mxu0 %v4569
        %4811 = vmatpush1.bf16.msra.mxu0 %v4568
        %4812 = vmatprep.subr.bf16.mxu0 %v4573
        %4813 = vmatpush1.bf16.msra.mxu0 %v4572
        %4814 = vmatprep.subr.bf16.mxu0 %v4577
        %4815 = vmatpush1.bf16.msra.mxu0 %v4576
        %4816 = vmatprep.subr.bf16.mxu0 %v4581
        %4817 = vmatpush1.bf16.msra.mxu0 %v4580
        %4818 = vmatprep.subr.bf16.mxu0 %v4585
        %4819 = vmatpush1.bf16.msra.mxu0 %v4584
        %4820 = vmatprep.subr.bf16.mxu0 %v4589
        %4821 = vmatpush1.bf16.msra.mxu0 %v4588
        %4822 = vmatprep.subr.bf16.mxu0 %v4593
        %4823 = vmatpush1.bf16.msra.mxu0 %v4592
        %4824 = vmatprep.subr.bf16.mxu0 %v4597
        %4825 = vmatpush1.bf16.msra.mxu0 %v4596
        %4826 = vmatprep.subr.bf16.mxu0 %v4601
        %4827 = vmatpush1.bf16.msra.mxu0 %v4600
        %4828 = vmatprep.mubr.bf16.mxu0 %v3946
        %4829 = vmatmul.mubr.bf16.gmra.mrb[0].mxu0 %v3934
        %v4830 = vpop.f32.mrb[0].mxu0
        %v4831 = vadd.f32 0.0, %v4830
        %v4832 = vpop.f32.mrb[0].mxu0
        %v4833 = vadd.f32 0.0, %v4832
        %v4834 = vpop.f32.mrb[0].mxu0
        %v4835 = vadd.f32 0.0, %v4834
        %v4836 = vpop.f32.mrb[0].mxu0
        %v4837 = vadd.f32 0.0, %v4836
        %4838 = vmatprep.mubr.bf16.mxu0 %v3994
        %4839 = vmatmul.mubr.bf16.gmra.mrb[0].mxu0 %v3982
        %v4840 = vpop.f32.mrb[0].mxu0
        %v4841 = vadd.f32 0.0, %v4840
        %v4842 = vpop.f32.mrb[0].mxu0
        %v4843 = vadd.f32 0.0, %v4842
        %v4844 = vpop.f32.mrb[0].mxu0
        %v4845 = vadd.f32 0.0, %v4844
        %v4846 = vpop.f32.mrb[0].mxu0
        %v4847 = vadd.f32 0.0, %v4846
        %4848 = vdwg.mxu0
        %4849 = vmatprep.subr.bf16.mxu0 %v4605
        %4850 = vmatpush1.bf16.msra.mxu0 %v4604
        %4851 = vmatprep.subr.bf16.mxu0 %v4609
        %4852 = vmatpush1.bf16.msra.mxu0 %v4608
        %4853 = vmatprep.subr.bf16.mxu0 %v4613
        %4854 = vmatpush1.bf16.msra.mxu0 %v4612
        %4855 = vmatprep.subr.bf16.mxu0 %v4617
        %4856 = vmatpush1.bf16.msra.mxu0 %v4616
        %4857 = vmatprep.subr.bf16.mxu0 %v4621
        %4858 = vmatpush1.bf16.msra.mxu0 %v4620
        %4859 = vmatprep.subr.bf16.mxu0 %v4625
        %4860 = vmatpush1.bf16.msra.mxu0 %v4624
        %4861 = vmatprep.subr.bf16.mxu0 %v4629
        %4862 = vmatpush1.bf16.msra.mxu0 %v4628
        %4863 = vmatprep.subr.bf16.mxu0 %v4633
        %4864 = vmatpush1.bf16.msra.mxu0 %v4632
        %4865 = vmatprep.subr.bf16.mxu0 %v4637
        %4866 = vmatpush1.bf16.msra.mxu0 %v4636
        %4867 = vmatprep.subr.bf16.mxu0 %v4641
        %4868 = vmatpush1.bf16.msra.mxu0 %v4640
        %4869 = vmatprep.subr.bf16.mxu0 %v4645
        %4870 = vmatpush1.bf16.msra.mxu0 %v4644
        %4871 = vmatprep.subr.bf16.mxu0 %v4649
        %4872 = vmatpush1.bf16.msra.mxu0 %v4648
        %4873 = vmatprep.subr.bf16.mxu0 %v4653
        %4874 = vmatpush1.bf16.msra.mxu0 %v4652
        %4875 = vmatprep.subr.bf16.mxu0 %v4657
        %4876 = vmatpush1.bf16.msra.mxu0 %v4656
        %4877 = vmatprep.subr.bf16.mxu0 %v4661
        %4878 = vmatpush1.bf16.msra.mxu0 %v4660
        %4879 = vmatprep.subr.bf16.mxu0 %v4665
        %4880 = vmatpush1.bf16.msra.mxu0 %v4664
        %4881 = vmatprep.mubr.bf16.mxu0 %v3970
        %4882 = vmatmul.mubr.bf16.gmra.mrb[0].mxu0 %v3958
        %v4883 = vpop.f32.mrb[0].mxu0
        %v4884 = vadd.f32 %v4831, %v4883
        %v4885 = vpop.f32.mrb[0].mxu0
        %v4886 = vadd.f32 %v4833, %v4885
        %v4887 = vpop.f32.mrb[0].mxu0
        %v4888 = vadd.f32 %v4835, %v4887
        %v4889 = vpop.f32.mrb[0].mxu0
        %v4890 = vadd.f32 %v4837, %v4889
        %4891 = vmatprep.mubr.bf16.mxu0 %v4018
        %4892 = vmatmul.mubr.bf16.gmra.mrb[0].mxu0 %v4006
        %v4893 = vpop.f32.mrb[0].mxu0
        %v4894 = vadd.f32 %v4841, %v4893
        %v4895 = vpop.f32.mrb[0].mxu0
        %v4896 = vadd.f32 %v4843, %v4895
        %v4897 = vpop.f32.mrb[0].mxu0
        %v4898 = vadd.f32 %v4845, %v4897
        %v4899 = vpop.f32.mrb[0].mxu0
        %v4900 = vadd.f32 %v4847, %v4899
        %4901 = vdwg.mxu0
        %4902 = vmatprep.subr.bf16.mxu0 %v4543
        %4903 = vmatpush1.bf16.msra.mxu0 %v4542
        %4904 = vmatprep.subr.bf16.mxu0 %v4547
        %4905 = vmatpush1.bf16.msra.mxu0 %v4546
        %4906 = vmatprep.subr.bf16.mxu0 %v4551
        %4907 = vmatpush1.bf16.msra.mxu0 %v4550
        %4908 = vmatprep.subr.bf16.mxu0 %v4555
        %4909 = vmatpush1.bf16.msra.mxu0 %v4554
        %4910 = vmatprep.subr.bf16.mxu0 %v4559
        %4911 = vmatpush1.bf16.msra.mxu0 %v4558
        %4912 = vmatprep.subr.bf16.mxu0 %v4563
        %4913 = vmatpush1.bf16.msra.mxu0 %v4562
        %4914 = vmatprep.subr.bf16.mxu0 %v4567
        %4915 = vmatpush1.bf16.msra.mxu0 %v4566
        %4916 = vmatprep.subr.bf16.mxu0 %v4571
        %4917 = vmatpush1.bf16.msra.mxu0 %v4570
        %4918 = vmatprep.subr.bf16.mxu0 %v4575
        %4919 = vmatpush1.bf16.msra.mxu0 %v4574
        %4920 = vmatprep.subr.bf16.mxu0 %v4579
        %4921 = vmatpush1.bf16.msra.mxu0 %v4578
        %4922 = vmatprep.subr.bf16.mxu0 %v4583
        %4923 = vmatpush1.bf16.msra.mxu0 %v4582
        %4924 = vmatprep.subr.bf16.mxu0 %v4587
        %4925 = vmatpush1.bf16.msra.mxu0 %v4586
        %4926 = vmatprep.subr.bf16.mxu0 %v4591
        %4927 = vmatpush1.bf16.msra.mxu0 %v4590
        %4928 = vmatprep.subr.bf16.mxu0 %v4595
        %4929 = vmatpush1.bf16.msra.mxu0 %v4594
        %4930 = vmatprep.subr.bf16.mxu0 %v4599
        %4931 = vmatpush1.bf16.msra.mxu0 %v4598
        %4932 = vmatprep.subr.bf16.mxu0 %v4603
        %4933 = vmatpush1.bf16.msra.mxu0 %v4602
        %4934 = vmatprep.mubr.bf16.mxu0 %v3946
        %4935 = vmatmul.mubr.bf16.gmra.mrb[0].mxu0 %v3934
        %v4936 = vpop.f32.mrb[0].mxu0
        %v4937 = vadd.f32 0.0, %v4936
        %v4938 = vpop.f32.mrb[0].mxu0
        %v4939 = vadd.f32 0.0, %v4938
        %v4940 = vpop.f32.mrb[0].mxu0
        %v4941 = vadd.f32 0.0, %v4940
        %v4942 = vpop.f32.mrb[0].mxu0
        %v4943 = vadd.f32 0.0, %v4942
        %4944 = vmatprep.mubr.bf16.mxu0 %v3994
        %4945 = vmatmul.mubr.bf16.gmra.mrb[0].mxu0 %v3982
        %v4946 = vpop.f32.mrb[0].mxu0
        %v4947 = vadd.f32 0.0, %v4946
        %v4948 = vpop.f32.mrb[0].mxu0
        %v4949 = vadd.f32 0.0, %v4948
        %v4950 = vpop.f32.mrb[0].mxu0
        %v4951 = vadd.f32 0.0, %v4950
        %v4952 = vpop.f32.mrb[0].mxu0
        %v4953 = vadd.f32 0.0, %v4952
        %4954 = vdwg.mxu0
        %4955 = vmatprep.subr.bf16.mxu0 %v4607
        %4956 = vmatpush1.bf16.msra.mxu0 %v4606
        %4957 = vmatprep.subr.bf16.mxu0 %v4611
        %4958 = vmatpush1.bf16.msra.mxu0 %v4610
        %4959 = vmatprep.subr.bf16.mxu0 %v4615
        %4960 = vmatpush1.bf16.msra.mxu0 %v4614
        %4961 = vmatprep.subr.bf16.mxu0 %v4619
        %4962 = vmatpush1.bf16.msra.mxu0 %v4618
        %4963 = vmatprep.subr.bf16.mxu0 %v4623
        %4964 = vmatpush1.bf16.msra.mxu0 %v4622
        %4965 = vmatprep.subr.bf16.mxu0 %v4627
        %4966 = vmatpush1.bf16.msra.mxu0 %v4626
        %4967 = vmatprep.subr.bf16.mxu0 %v4631
        %4968 = vmatpush1.bf16.msra.mxu0 %v4630
        %4969 = vmatprep.subr.bf16.mxu0 %v4635
        %4970 = vmatpush1.bf16.msra.mxu0 %v4634
        %4971 = vmatprep.subr.bf16.mxu0 %v4639
        %4972 = vmatpush1.bf16.msra.mxu0 %v4638
        %4973 = vmatprep.subr.bf16.mxu0 %v4643
        %4974 = vmatpush1.bf16.msra.mxu0 %v4642
        %4975 = vmatprep.subr.bf16.mxu0 %v4647
        %4976 = vmatpush1.bf16.msra.mxu0 %v4646
        %4977 = vmatprep.subr.bf16.mxu0 %v4651
        %4978 = vmatpush1.bf16.msra.mxu0 %v4650
        %4979 = vmatprep.subr.bf16.mxu0 %v4655
        %4980 = vmatpush1.bf16.msra.mxu0 %v4654
        %4981 = vmatprep.subr.bf16.mxu0 %v4659
        %4982 = vmatpush1.bf16.msra.mxu0 %v4658
        %4983 = vmatprep.subr.bf16.mxu0 %v4663
        %4984 = vmatpush1.bf16.msra.mxu0 %v4662
        %4985 = vmatprep.subr.bf16.mxu0 %v4667
        %4986 = vmatpush1.bf16.msra.mxu0 %v4666
        %4987 = vmatprep.mubr.bf16.mxu0 %v3970
        %4988 = vmatmul.mubr.bf16.gmra.mrb[0].mxu0 %v3958
        %v4989 = vpop.f32.mrb[0].mxu0
        %v4990 = vadd.f32 %v4937, %v4989
        %v4991 = vpop.f32.mrb[0].mxu0
        %v4992 = vadd.f32 %v4939, %v4991
        %v4993 = vpop.f32.mrb[0].mxu0
        %v4994 = vadd.f32 %v4941, %v4993
        %v4995 = vpop.f32.mrb[0].mxu0
        %v4996 = vadd.f32 %v4943, %v4995
        %4997 = vmatprep.mubr.bf16.mxu0 %v4018
        %4998 = vmatmul.mubr.bf16.gmra.mrb[0].mxu0 %v4006
        %v4999 = vpop.f32.mrb[0].mxu0
        %v5000 = vadd.f32 %v4947, %v4999
        %v5001 = vpop.f32.mrb[0].mxu0
        %v5002 = vadd.f32 %v4949, %v5001
        %v5003 = vpop.f32.mrb[0].mxu0
        %v5004 = vadd.f32 %v4951, %v5003
        %v5005 = vpop.f32.mrb[0].mxu0
        %v5006 = vadd.f32 %v4953, %v5005
        %5007 = vdwg.mxu0
        %v5136 = vunpack.c.l.b16 %v3795
        %v5137 = vunpack.c.h.b16 %v3795
        %v5138 = vunpack.c.l.b16 %v3796
        %v5139 = vunpack.c.h.b16 %v3796
        %v5140 = vunpack.c.l.b16 %v3797
        %v5141 = vunpack.c.h.b16 %v3797
        %v5142 = vunpack.c.l.b16 %v3798
        %v5143 = vunpack.c.h.b16 %v3798
        %v5144 = vunpack.c.l.b16 %v3799
        %v5145 = vunpack.c.h.b16 %v3799
        %v5146 = vunpack.c.l.b16 %v3800
        %v5147 = vunpack.c.h.b16 %v3800
        %v5148 = vunpack.c.l.b16 %v3801
        %v5149 = vunpack.c.h.b16 %v3801
        %v5150 = vunpack.c.l.b16 %v3802
        %v5151 = vunpack.c.h.b16 %v3802
        %v5152 = vunpack.c.l.b16 %v3803
        %v5153 = vunpack.c.h.b16 %v3803
        %v5154 = vunpack.c.l.b16 %v3804
        %v5155 = vunpack.c.h.b16 %v3804
        %v5156 = vunpack.c.l.b16 %v3805
        %v5157 = vunpack.c.h.b16 %v3805
        %v5158 = vunpack.c.l.b16 %v3806
        %v5159 = vunpack.c.h.b16 %v3806
        %v5160 = vunpack.c.l.b16 %v3807
        %v5161 = vunpack.c.h.b16 %v3807
        %v5162 = vunpack.c.l.b16 %v3808
        %v5163 = vunpack.c.h.b16 %v3808
        %v5164 = vunpack.c.l.b16 %v3809
        %v5165 = vunpack.c.h.b16 %v3809
        %v5166 = vunpack.c.l.b16 %v3810
        %v5167 = vunpack.c.h.b16 %v3810
        %v5168 = vunpack.c.l.b16 %v3811
        %v5169 = vunpack.c.h.b16 %v3811
        %v5170 = vunpack.c.l.b16 %v3812
        %v5171 = vunpack.c.h.b16 %v3812
        %v5172 = vunpack.c.l.b16 %v3813
        %v5173 = vunpack.c.h.b16 %v3813
        %v5174 = vunpack.c.l.b16 %v3814
        %v5175 = vunpack.c.h.b16 %v3814
        %v5176 = vunpack.c.l.b16 %v3815
        %v5177 = vunpack.c.h.b16 %v3815
        %v5178 = vunpack.c.l.b16 %v3816
        %v5179 = vunpack.c.h.b16 %v3816
        %v5180 = vunpack.c.l.b16 %v3817
        %v5181 = vunpack.c.h.b16 %v3817
        %v5182 = vunpack.c.l.b16 %v3818
        %v5183 = vunpack.c.h.b16 %v3818
        %v5184 = vunpack.c.l.b16 %v3819
        %v5185 = vunpack.c.h.b16 %v3819
        %v5186 = vunpack.c.l.b16 %v3820
        %v5187 = vunpack.c.h.b16 %v3820
        %v5188 = vunpack.c.l.b16 %v3821
        %v5189 = vunpack.c.h.b16 %v3821
        %v5190 = vunpack.c.l.b16 %v3822
        %v5191 = vunpack.c.h.b16 %v3822
        %v5192 = vunpack.c.l.b16 %v3823
        %v5193 = vunpack.c.h.b16 %v3823
        %v5194 = vunpack.c.l.b16 %v3824
        %v5195 = vunpack.c.h.b16 %v3824
        %v5196 = vunpack.c.l.b16 %v3825
        %v5197 = vunpack.c.h.b16 %v3825
        %v5198 = vunpack.c.l.b16 %v3826
        %v5199 = vunpack.c.h.b16 %v3826
        %v5200 = vunpack.c.l.b16 %v3827
        %v5201 = vunpack.c.h.b16 %v3827
        %v5202 = vunpack.c.l.b16 %v3828
        %v5203 = vunpack.c.h.b16 %v3828
        %v5204 = vunpack.c.l.b16 %v3829
        %v5205 = vunpack.c.h.b16 %v3829
        %v5206 = vunpack.c.l.b16 %v3830
        %v5207 = vunpack.c.h.b16 %v3830
        %v5208 = vunpack.c.l.b16 %v3831
        %v5209 = vunpack.c.h.b16 %v3831
        %v5210 = vunpack.c.l.b16 %v3832
        %v5211 = vunpack.c.h.b16 %v3832
        %v5212 = vunpack.c.l.b16 %v3833
        %v5213 = vunpack.c.h.b16 %v3833
        %v5214 = vunpack.c.l.b16 %v3834
        %v5215 = vunpack.c.h.b16 %v3834
        %v5216 = vunpack.c.l.b16 %v3835
        %v5217 = vunpack.c.h.b16 %v3835
        %v5218 = vunpack.c.l.b16 %v3836
        %v5219 = vunpack.c.h.b16 %v3836
        %v5220 = vunpack.c.l.b16 %v3837
        %v5221 = vunpack.c.h.b16 %v3837
        %v5222 = vunpack.c.l.b16 %v3838
        %v5223 = vunpack.c.h.b16 %v3838
        %v5224 = vunpack.c.l.b16 %v3839
        %v5225 = vunpack.c.h.b16 %v3839
        %v5226 = vunpack.c.l.b16 %v3840
        %v5227 = vunpack.c.h.b16 %v3840
        %v5228 = vunpack.c.l.b16 %v3841
        %v5229 = vunpack.c.h.b16 %v3841
        %v5230 = vunpack.c.l.b16 %v3842
        %v5231 = vunpack.c.h.b16 %v3842
        %v5232 = vunpack.c.l.b16 %v3843
        %v5233 = vunpack.c.h.b16 %v3843
        %v5234 = vunpack.c.l.b16 %v3844
        %v5235 = vunpack.c.h.b16 %v3844
        %v5236 = vunpack.c.l.b16 %v3845
        %v5237 = vunpack.c.h.b16 %v3845
        %v5238 = vunpack.c.l.b16 %v3846
        %v5239 = vunpack.c.h.b16 %v3846
        %v5240 = vunpack.c.l.b16 %v3847
        %v5241 = vunpack.c.h.b16 %v3847
        %v5242 = vunpack.c.l.b16 %v3848
        %v5243 = vunpack.c.h.b16 %v3848
        %v5244 = vunpack.c.l.b16 %v3849
        %v5245 = vunpack.c.h.b16 %v3849
        %v5246 = vunpack.c.l.b16 %v3850
        %v5247 = vunpack.c.h.b16 %v3850
        %v5248 = vunpack.c.l.b16 %v3851
        %v5249 = vunpack.c.h.b16 %v3851
        %v5250 = vunpack.c.l.b16 %v3852
        %v5251 = vunpack.c.h.b16 %v3852
        %v5252 = vunpack.c.l.b16 %v3853
        %v5253 = vunpack.c.h.b16 %v3853
        %v5254 = vunpack.c.l.b16 %v3854
        %v5255 = vunpack.c.h.b16 %v3854
        %v5256 = vunpack.c.l.b16 %v3855
        %v5257 = vunpack.c.h.b16 %v3855
        %v5258 = vunpack.c.l.b16 %v3856
        %v5259 = vunpack.c.h.b16 %v3856
        %v5260 = vunpack.c.l.b16 %v3857
        %v5261 = vunpack.c.h.b16 %v3857
        %v5262 = vunpack.c.l.b16 %v3858
        %v5263 = vunpack.c.h.b16 %v3858
        %v5264 = vunpack.c.l.b16 %v3859
        %v5265 = vunpack.c.h.b16 %v3859
        %v5266 = vunpack.c.l.b16 %v3860
        %v5267 = vunpack.c.h.b16 %v3860
        %v5268 = vunpack.c.l.b16 %v3861
        %v5269 = vunpack.c.h.b16 %v3861
        %v5270 = vunpack.c.l.b16 %v3862
        %v5271 = vunpack.c.h.b16 %v3862
        %v5272 = vunpack.c.l.b16 %v3863
        %v5273 = vunpack.c.h.b16 %v3863
        %v5274 = vunpack.c.l.b16 %v3864
        %v5275 = vunpack.c.h.b16 %v3864
        %v5276 = vunpack.c.l.b16 %v3865
        %v5277 = vunpack.c.h.b16 %v3865
        %v5278 = vunpack.c.l.b16 %v3866
        %v5279 = vunpack.c.h.b16 %v3866
        %v5280 = vunpack.c.l.b16 %v3867
        %v5281 = vunpack.c.h.b16 %v3867
        %v5282 = vunpack.c.l.b16 %v3868
        %v5283 = vunpack.c.h.b16 %v3868
        %v5284 = vunpack.c.l.b16 %v3869
        %v5285 = vunpack.c.h.b16 %v3869
        %v5286 = vunpack.c.l.b16 %v3870
        %v5287 = vunpack.c.h.b16 %v3870
        %v5288 = vunpack.c.l.b16 %v3871
        %v5289 = vunpack.c.h.b16 %v3871
        %v5290 = vunpack.c.l.b16 %v3872
        %v5291 = vunpack.c.h.b16 %v3872
        %v5292 = vunpack.c.l.b16 %v3873
        %v5293 = vunpack.c.h.b16 %v3873
        %v5294 = vunpack.c.l.b16 %v3874
        %v5295 = vunpack.c.h.b16 %v3874
        %v5296 = vunpack.c.l.b16 %v3875
        %v5297 = vunpack.c.h.b16 %v3875
        %v5298 = vunpack.c.l.b16 %v3876
        %v5299 = vunpack.c.h.b16 %v3876
        %v5300 = vunpack.c.l.b16 %v3877
        %v5301 = vunpack.c.h.b16 %v3877
        %v5302 = vunpack.c.l.b16 %v3878
        %v5303 = vunpack.c.h.b16 %v3878
        %v5304 = vunpack.c.l.b16 %v3879
        %v5305 = vunpack.c.h.b16 %v3879
        %v5306 = vunpack.c.l.b16 %v3880
        %v5307 = vunpack.c.h.b16 %v3880
        %v5308 = vunpack.c.l.b16 %v3881
        %v5309 = vunpack.c.h.b16 %v3881
        %v5310 = vunpack.c.l.b16 %v3882
        %v5311 = vunpack.c.h.b16 %v3882
        %v5312 = vunpack.c.l.b16 %v3883
        %v5313 = vunpack.c.h.b16 %v3883
        %v5314 = vunpack.c.l.b16 %v3884
        %v5315 = vunpack.c.h.b16 %v3884
        %v5316 = vunpack.c.l.b16 %v3885
        %v5317 = vunpack.c.h.b16 %v3885
        %v5318 = vunpack.c.l.b16 %v3886
        %v5319 = vunpack.c.h.b16 %v3886
        %v5320 = vunpack.c.l.b16 %v3887
        %v5321 = vunpack.c.h.b16 %v3887
        %v5322 = vunpack.c.l.b16 %v3888
        %v5323 = vunpack.c.h.b16 %v3888
        %v5324 = vunpack.c.l.b16 %v3889
        %v5325 = vunpack.c.h.b16 %v3889
        %v5326 = vunpack.c.l.b16 %v3890
        %v5327 = vunpack.c.h.b16 %v3890
        %v5328 = vunpack.c.l.b16 %v3891
        %v5329 = vunpack.c.h.b16 %v3891
        %v5330 = vunpack.c.l.b16 %v3892
        %v5331 = vunpack.c.h.b16 %v3892
        %v5332 = vunpack.c.l.b16 %v3893
        %v5333 = vunpack.c.h.b16 %v3893
        %v5334 = vunpack.c.l.b16 %v3894
        %v5335 = vunpack.c.h.b16 %v3894
        %v5336 = vunpack.c.l.b16 %v3895
        %v5337 = vunpack.c.h.b16 %v3895
        %v5338 = vunpack.c.l.b16 %v3896
        %v5339 = vunpack.c.h.b16 %v3896
        %v5340 = vunpack.c.l.b16 %v3897
        %v5341 = vunpack.c.h.b16 %v3897
        %v5342 = vunpack.c.l.b16 %v3898
        %v5343 = vunpack.c.h.b16 %v3898
        %v5344 = vunpack.c.l.b16 %v3899
        %v5345 = vunpack.c.h.b16 %v3899
        %v5346 = vunpack.c.l.b16 %v3900
        %v5347 = vunpack.c.h.b16 %v3900
        %v5348 = vunpack.c.l.b16 %v3901
        %v5349 = vunpack.c.h.b16 %v3901
        %v5350 = vunpack.c.l.b16 %v3902
        %v5351 = vunpack.c.h.b16 %v3902
        %v5352 = vunpack.c.l.b16 %v3903
        %v5353 = vunpack.c.h.b16 %v3903
        %v5354 = vunpack.c.l.b16 %v3904
        %v5355 = vunpack.c.h.b16 %v3904
        %v5356 = vunpack.c.l.b16 %v3905
        %v5357 = vunpack.c.h.b16 %v3905
        %v5358 = vunpack.c.l.b16 %v3906
        %v5359 = vunpack.c.h.b16 %v3906
        %v5360 = vunpack.c.l.b16 %v3907
        %v5361 = vunpack.c.h.b16 %v3907
        %v5362 = vunpack.c.l.b16 %v3908
        %v5363 = vunpack.c.h.b16 %v3908
        %v5364 = vunpack.c.l.b16 %v3909
        %v5365 = vunpack.c.h.b16 %v3909
        %v5366 = vunpack.c.l.b16 %v3910
        %v5367 = vunpack.c.h.b16 %v3910
        %v5368 = vunpack.c.l.b16 %v3911
        %v5369 = vunpack.c.h.b16 %v3911
        %v5370 = vunpack.c.l.b16 %v3912
        %v5371 = vunpack.c.h.b16 %v3912
        %v5372 = vunpack.c.l.b16 %v3913
        %v5373 = vunpack.c.h.b16 %v3913
        %v5374 = vunpack.c.l.b16 %v3914
        %v5375 = vunpack.c.h.b16 %v3914
        %v5376 = vunpack.c.l.b16 %v3915
        %v5377 = vunpack.c.h.b16 %v3915
        %v5378 = vunpack.c.l.b16 %v3916
        %v5379 = vunpack.c.h.b16 %v3916
        %v5380 = vunpack.c.l.b16 %v3917
        %v5381 = vunpack.c.h.b16 %v3917
        %v5382 = vunpack.c.l.b16 %v3918
        %v5383 = vunpack.c.h.b16 %v3918
        %v5384 = vunpack.c.l.b16 %v3919
        %v5385 = vunpack.c.h.b16 %v3919
        %v5386 = vunpack.c.l.b16 %v3920
        %v5387 = vunpack.c.h.b16 %v3920
        %v5388 = vunpack.c.l.b16 %v3921
        %v5389 = vunpack.c.h.b16 %v3921
        %v5390 = vunpack.c.l.b16 %v3922
        %v5391 = vunpack.c.h.b16 %v3922
        %v5392 = vpack.c.b16 %v5140, %v5136
        %v5393 = vpack.c.b16 %v5141, %v5137
        %v5394 = vpack.c.b16 %v5142, %v5138
        %v5395 = vpack.c.b16 %v5143, %v5139
        %v5396 = vpack.c.b16 %v5148, %v5144
        %v5397 = vpack.c.b16 %v5149, %v5145
        %v5398 = vpack.c.b16 %v5150, %v5146
        %v5399 = vpack.c.b16 %v5151, %v5147
        %v5400 = vpack.c.b16 %v5156, %v5152
        %v5401 = vpack.c.b16 %v5157, %v5153
        %v5402 = vpack.c.b16 %v5158, %v5154
        %v5403 = vpack.c.b16 %v5159, %v5155
        %v5404 = vpack.c.b16 %v5164, %v5160
        %v5405 = vpack.c.b16 %v5165, %v5161
        %v5406 = vpack.c.b16 %v5166, %v5162
        %v5407 = vpack.c.b16 %v5167, %v5163
        %v5408 = vpack.c.b16 %v5172, %v5168
        %v5409 = vpack.c.b16 %v5173, %v5169
        %v5410 = vpack.c.b16 %v5174, %v5170
        %v5411 = vpack.c.b16 %v5175, %v5171
        %v5412 = vpack.c.b16 %v5180, %v5176
        %v5413 = vpack.c.b16 %v5181, %v5177
        %v5414 = vpack.c.b16 %v5182, %v5178
        %v5415 = vpack.c.b16 %v5183, %v5179
        %v5416 = vpack.c.b16 %v5188, %v5184
        %v5417 = vpack.c.b16 %v5189, %v5185
        %v5418 = vpack.c.b16 %v5190, %v5186
        %v5419 = vpack.c.b16 %v5191, %v5187
        %v5420 = vpack.c.b16 %v5196, %v5192
        %v5421 = vpack.c.b16 %v5197, %v5193
        %v5422 = vpack.c.b16 %v5198, %v5194
        %v5423 = vpack.c.b16 %v5199, %v5195
        %v5424 = vpack.c.b16 %v5204, %v5200
        %v5425 = vpack.c.b16 %v5205, %v5201
        %v5426 = vpack.c.b16 %v5206, %v5202
        %v5427 = vpack.c.b16 %v5207, %v5203
        %v5428 = vpack.c.b16 %v5212, %v5208
        %v5429 = vpack.c.b16 %v5213, %v5209
        %v5430 = vpack.c.b16 %v5214, %v5210
        %v5431 = vpack.c.b16 %v5215, %v5211
        %v5432 = vpack.c.b16 %v5220, %v5216
        %v5433 = vpack.c.b16 %v5221, %v5217
        %v5434 = vpack.c.b16 %v5222, %v5218
        %v5435 = vpack.c.b16 %v5223, %v5219
        %v5436 = vpack.c.b16 %v5228, %v5224
        %v5437 = vpack.c.b16 %v5229, %v5225
        %v5438 = vpack.c.b16 %v5230, %v5226
        %v5439 = vpack.c.b16 %v5231, %v5227
        %v5440 = vpack.c.b16 %v5236, %v5232
        %v5441 = vpack.c.b16 %v5237, %v5233
        %v5442 = vpack.c.b16 %v5238, %v5234
        %v5443 = vpack.c.b16 %v5239, %v5235
        %v5444 = vpack.c.b16 %v5244, %v5240
        %v5445 = vpack.c.b16 %v5245, %v5241
        %v5446 = vpack.c.b16 %v5246, %v5242
        %v5447 = vpack.c.b16 %v5247, %v5243
        %v5448 = vpack.c.b16 %v5252, %v5248
        %v5449 = vpack.c.b16 %v5253, %v5249
        %v5450 = vpack.c.b16 %v5254, %v5250
        %v5451 = vpack.c.b16 %v5255, %v5251
        %v5452 = vpack.c.b16 %v5260, %v5256
        %v5453 = vpack.c.b16 %v5261, %v5257
        %v5454 = vpack.c.b16 %v5262, %v5258
        %v5455 = vpack.c.b16 %v5263, %v5259
        %v5456 = vpack.c.b16 %v5268, %v5264
        %v5457 = vpack.c.b16 %v5269, %v5265
        %v5458 = vpack.c.b16 %v5270, %v5266
        %v5459 = vpack.c.b16 %v5271, %v5267
        %v5460 = vpack.c.b16 %v5276, %v5272
        %v5461 = vpack.c.b16 %v5277, %v5273
        %v5462 = vpack.c.b16 %v5278, %v5274
        %v5463 = vpack.c.b16 %v5279, %v5275
        %v5464 = vpack.c.b16 %v5284, %v5280
        %v5465 = vpack.c.b16 %v5285, %v5281
        %v5466 = vpack.c.b16 %v5286, %v5282
        %v5467 = vpack.c.b16 %v5287, %v5283
        %v5468 = vpack.c.b16 %v5292, %v5288
        %v5469 = vpack.c.b16 %v5293, %v5289
        %v5470 = vpack.c.b16 %v5294, %v5290
        %v5471 = vpack.c.b16 %v5295, %v5291
        %v5472 = vpack.c.b16 %v5300, %v5296
        %v5473 = vpack.c.b16 %v5301, %v5297
        %v5474 = vpack.c.b16 %v5302, %v5298
        %v5475 = vpack.c.b16 %v5303, %v5299
        %v5476 = vpack.c.b16 %v5308, %v5304
        %v5477 = vpack.c.b16 %v5309, %v5305
        %v5478 = vpack.c.b16 %v5310, %v5306
        %v5479 = vpack.c.b16 %v5311, %v5307
        %v5480 = vpack.c.b16 %v5316, %v5312
        %v5481 = vpack.c.b16 %v5317, %v5313
        %v5482 = vpack.c.b16 %v5318, %v5314
        %v5483 = vpack.c.b16 %v5319, %v5315
        %v5484 = vpack.c.b16 %v5324, %v5320
        %v5485 = vpack.c.b16 %v5325, %v5321
        %v5486 = vpack.c.b16 %v5326, %v5322
        %v5487 = vpack.c.b16 %v5327, %v5323
        %v5488 = vpack.c.b16 %v5332, %v5328
        %v5489 = vpack.c.b16 %v5333, %v5329
        %v5490 = vpack.c.b16 %v5334, %v5330
        %v5491 = vpack.c.b16 %v5335, %v5331
        %v5492 = vpack.c.b16 %v5340, %v5336
        %v5493 = vpack.c.b16 %v5341, %v5337
        %v5494 = vpack.c.b16 %v5342, %v5338
        %v5495 = vpack.c.b16 %v5343, %v5339
        %v5496 = vpack.c.b16 %v5348, %v5344
        %v5497 = vpack.c.b16 %v5349, %v5345
        %v5498 = vpack.c.b16 %v5350, %v5346
        %v5499 = vpack.c.b16 %v5351, %v5347
        %v5500 = vpack.c.b16 %v5356, %v5352
        %v5501 = vpack.c.b16 %v5357, %v5353
        %v5502 = vpack.c.b16 %v5358, %v5354
        %v5503 = vpack.c.b16 %v5359, %v5355
        %v5504 = vpack.c.b16 %v5364, %v5360
        %v5505 = vpack.c.b16 %v5365, %v5361
        %v5506 = vpack.c.b16 %v5366, %v5362
        %v5507 = vpack.c.b16 %v5367, %v5363
        %v5508 = vpack.c.b16 %v5372, %v5368
        %v5509 = vpack.c.b16 %v5373, %v5369
        %v5510 = vpack.c.b16 %v5374, %v5370
        %v5511 = vpack.c.b16 %v5375, %v5371
        %v5512 = vpack.c.b16 %v5380, %v5376
        %v5513 = vpack.c.b16 %v5381, %v5377
        %v5514 = vpack.c.b16 %v5382, %v5378
        %v5515 = vpack.c.b16 %v5383, %v5379
        %v5516 = vpack.c.b16 %v5388, %v5384
        %v5517 = vpack.c.b16 %v5389, %v5385
        %v5518 = vpack.c.b16 %v5390, %v5386
        %v5519 = vpack.c.b16 %v5391, %v5387
        %5648 = vmatprep.subr.bf16.mxu0 %v5393
        %5649 = vmatpush1.bf16.msra.mxu0 %v5392
        %5650 = vmatprep.subr.bf16.mxu0 %v5397
        %5651 = vmatpush1.bf16.msra.mxu0 %v5396
        %5652 = vmatprep.subr.bf16.mxu0 %v5401
        %5653 = vmatpush1.bf16.msra.mxu0 %v5400
        %5654 = vmatprep.subr.bf16.mxu0 %v5405
        %5655 = vmatpush1.bf16.msra.mxu0 %v5404
        %5656 = vmatprep.subr.bf16.mxu0 %v5409
        %5657 = vmatpush1.bf16.msra.mxu0 %v5408
        %5658 = vmatprep.subr.bf16.mxu0 %v5413
        %5659 = vmatpush1.bf16.msra.mxu0 %v5412
        %5660 = vmatprep.subr.bf16.mxu0 %v5417
        %5661 = vmatpush1.bf16.msra.mxu0 %v5416
        %5662 = vmatprep.subr.bf16.mxu0 %v5421
        %5663 = vmatpush1.bf16.msra.mxu0 %v5420
        %5664 = vmatprep.subr.bf16.mxu0 %v5425
        %5665 = vmatpush1.bf16.msra.mxu0 %v5424
        %5666 = vmatprep.subr.bf16.mxu0 %v5429
        %5667 = vmatpush1.bf16.msra.mxu0 %v5428
        %5668 = vmatprep.subr.bf16.mxu0 %v5433
        %5669 = vmatpush1.bf16.msra.mxu0 %v5432
        %5670 = vmatprep.subr.bf16.mxu0 %v5437
        %5671 = vmatpush1.bf16.msra.mxu0 %v5436
        %5672 = vmatprep.subr.bf16.mxu0 %v5441
        %5673 = vmatpush1.bf16.msra.mxu0 %v5440
        %5674 = vmatprep.subr.bf16.mxu0 %v5445
        %5675 = vmatpush1.bf16.msra.mxu0 %v5444
        %5676 = vmatprep.subr.bf16.mxu0 %v5449
        %5677 = vmatpush1.bf16.msra.mxu0 %v5448
        %5678 = vmatprep.subr.bf16.mxu0 %v5453
        %5679 = vmatpush1.bf16.msra.mxu0 %v5452
        %5680 = vmatprep.mubr.bf16.mxu0 %v3780
        %5681 = vmatmul.mubr.bf16.gmra.mrb[0].mxu0 %v3779
        %v5682 = vpop.f32.mrb[0].mxu0
        %v5683 = vadd.f32 %v4884, %v5682
        %v5684 = vpop.f32.mrb[0].mxu0
        %v5685 = vadd.f32 %v4886, %v5684
        %v5686 = vpop.f32.mrb[0].mxu0
        %v5687 = vadd.f32 %v4888, %v5686
        %v5688 = vpop.f32.mrb[0].mxu0
        %v5689 = vadd.f32 %v4890, %v5688
        %5690 = vmatprep.mubr.bf16.mxu0 %v3784
        %5691 = vmatmul.mubr.bf16.gmra.mrb[0].mxu0 %v3783
        %v5692 = vpop.f32.mrb[0].mxu0
        %v5693 = vadd.f32 %v4894, %v5692
        %v5694 = vpop.f32.mrb[0].mxu0
        %v5695 = vadd.f32 %v4896, %v5694
        %v5696 = vpop.f32.mrb[0].mxu0
        %v5697 = vadd.f32 %v4898, %v5696
        %v5698 = vpop.f32.mrb[0].mxu0
        %v5699 = vadd.f32 %v4900, %v5698
        %5700 = vdwg.mxu0
        %5701 = vmatprep.subr.bf16.mxu0 %v5457
        %5702 = vmatpush1.bf16.msra.mxu0 %v5456
        %5703 = vmatprep.subr.bf16.mxu0 %v5461
        %5704 = vmatpush1.bf16.msra.mxu0 %v5460
        %5705 = vmatprep.subr.bf16.mxu0 %v5465
        %5706 = vmatpush1.bf16.msra.mxu0 %v5464
        %5707 = vmatprep.subr.bf16.mxu0 %v5469
        %5708 = vmatpush1.bf16.msra.mxu0 %v5468
        %5709 = vmatprep.subr.bf16.mxu0 %v5473
        %5710 = vmatpush1.bf16.msra.mxu0 %v5472
        %5711 = vmatprep.subr.bf16.mxu0 %v5477
        %5712 = vmatpush1.bf16.msra.mxu0 %v5476
        %5713 = vmatprep.subr.bf16.mxu0 %v5481
        %5714 = vmatpush1.bf16.msra.mxu0 %v5480
        %5715 = vmatprep.subr.bf16.mxu0 %v5485
        %5716 = vmatpush1.bf16.msra.mxu0 %v5484
        %5717 = vmatprep.subr.bf16.mxu0 %v5489
        %5718 = vmatpush1.bf16.msra.mxu0 %v5488
        %5719 = vmatprep.subr.bf16.mxu0 %v5493
        %5720 = vmatpush1.bf16.msra.mxu0 %v5492
        %5721 = vmatprep.subr.bf16.mxu0 %v5497
        %5722 = vmatpush1.bf16.msra.mxu0 %v5496
        %5723 = vmatprep.subr.bf16.mxu0 %v5501
        %5724 = vmatpush1.bf16.msra.mxu0 %v5500
        %5725 = vmatprep.subr.bf16.mxu0 %v5505
        %5726 = vmatpush1.bf16.msra.mxu0 %v5504
        %5727 = vmatprep.subr.bf16.mxu0 %v5509
        %5728 = vmatpush1.bf16.msra.mxu0 %v5508
        %5729 = vmatprep.subr.bf16.mxu0 %v5513
        %5730 = vmatpush1.bf16.msra.mxu0 %v5512
        %5731 = vmatprep.subr.bf16.mxu0 %v5517
        %5732 = vmatpush1.bf16.msra.mxu0 %v5516
        %5733 = vmatprep.mubr.bf16.mxu0 %v3782
        %5734 = vmatmul.mubr.bf16.gmra.mrb[0].mxu0 %v3781
        %v5735 = vpop.f32.mrb[0].mxu0
        %v5736 = vadd.f32 %v5683, %v5735
        %v5737 = vpop.f32.mrb[0].mxu0
        %v5738 = vadd.f32 %v5685, %v5737
        %v5739 = vpop.f32.mrb[0].mxu0
        %v5740 = vadd.f32 %v5687, %v5739
        %v5741 = vpop.f32.mrb[0].mxu0
        %v5742 = vadd.f32 %v5689, %v5741
        %5743 = vmatprep.mubr.bf16.mxu0 %v3786
        %5744 = vmatmul.mubr.bf16.gmra.mrb[0].mxu0 %v3785
        %v5745 = vpop.f32.mrb[0].mxu0
        %v5746 = vadd.f32 %v5693, %v5745
        %v5747 = vpop.f32.mrb[0].mxu0
        %v5748 = vadd.f32 %v5695, %v5747
        %v5749 = vpop.f32.mrb[0].mxu0
        %v5750 = vadd.f32 %v5697, %v5749
        %v5751 = vpop.f32.mrb[0].mxu0
        %v5752 = vadd.f32 %v5699, %v5751
        %5753 = vdwg.mxu0
        %5754 = vmatprep.subr.bf16.mxu0 %v5395
        %5755 = vmatpush1.bf16.msra.mxu0 %v5394
        %5756 = vmatprep.subr.bf16.mxu0 %v5399
        %5757 = vmatpush1.bf16.msra.mxu0 %v5398
        %5758 = vmatprep.subr.bf16.mxu0 %v5403
        %5759 = vmatpush1.bf16.msra.mxu0 %v5402
        %5760 = vmatprep.subr.bf16.mxu0 %v5407
        %5761 = vmatpush1.bf16.msra.mxu0 %v5406
        %5762 = vmatprep.subr.bf16.mxu0 %v5411
        %5763 = vmatpush1.bf16.msra.mxu0 %v5410
        %5764 = vmatprep.subr.bf16.mxu0 %v5415
        %5765 = vmatpush1.bf16.msra.mxu0 %v5414
        %5766 = vmatprep.subr.bf16.mxu0 %v5419
        %5767 = vmatpush1.bf16.msra.mxu0 %v5418
        %5768 = vmatprep.subr.bf16.mxu0 %v5423
        %5769 = vmatpush1.bf16.msra.mxu0 %v5422
        %5770 = vmatprep.subr.bf16.mxu0 %v5427
        %5771 = vmatpush1.bf16.msra.mxu0 %v5426
        %5772 = vmatprep.subr.bf16.mxu0 %v5431
        %5773 = vmatpush1.bf16.msra.mxu0 %v5430
        %5774 = vmatprep.subr.bf16.mxu0 %v5435
        %5775 = vmatpush1.bf16.msra.mxu0 %v5434
        %5776 = vmatprep.subr.bf16.mxu0 %v5439
        %5777 = vmatpush1.bf16.msra.mxu0 %v5438
        %5778 = vmatprep.subr.bf16.mxu0 %v5443
        %5779 = vmatpush1.bf16.msra.mxu0 %v5442
        %5780 = vmatprep.subr.bf16.mxu0 %v5447
        %5781 = vmatpush1.bf16.msra.mxu0 %v5446
        %5782 = vmatprep.subr.bf16.mxu0 %v5451
        %5783 = vmatpush1.bf16.msra.mxu0 %v5450
        %5784 = vmatprep.subr.bf16.mxu0 %v5455
        %5785 = vmatpush1.bf16.msra.mxu0 %v5454
        %5786 = vmatprep.mubr.bf16.mxu0 %v3780
        %5787 = vmatmul.mubr.bf16.gmra.mrb[0].mxu0 %v3779
        %v5788 = vpop.f32.mrb[0].mxu0
        %v5789 = vadd.f32 %v4990, %v5788
        %v5790 = vpop.f32.mrb[0].mxu0
        %v5791 = vadd.f32 %v4992, %v5790
        %v5792 = vpop.f32.mrb[0].mxu0
        %v5793 = vadd.f32 %v4994, %v5792
        %v5794 = vpop.f32.mrb[0].mxu0
        %v5795 = vadd.f32 %v4996, %v5794
        %5796 = vmatprep.mubr.bf16.mxu0 %v3784
        %5797 = vmatmul.mubr.bf16.gmra.mrb[0].mxu0 %v3783
        %v5798 = vpop.f32.mrb[0].mxu0
        %v5799 = vadd.f32 %v5000, %v5798
        %v5800 = vpop.f32.mrb[0].mxu0
        %v5801 = vadd.f32 %v5002, %v5800
        %v5802 = vpop.f32.mrb[0].mxu0
        %v5803 = vadd.f32 %v5004, %v5802
        %v5804 = vpop.f32.mrb[0].mxu0
        %v5805 = vadd.f32 %v5006, %v5804
        %5806 = vdwg.mxu0
        %5807 = vmatprep.subr.bf16.mxu0 %v5459
        %5808 = vmatpush1.bf16.msra.mxu0 %v5458
        %5809 = vmatprep.subr.bf16.mxu0 %v5463
        %5810 = vmatpush1.bf16.msra.mxu0 %v5462
        %5811 = vmatprep.subr.bf16.mxu0 %v5467
        %5812 = vmatpush1.bf16.msra.mxu0 %v5466
        %5813 = vmatprep.subr.bf16.mxu0 %v5471
        %5814 = vmatpush1.bf16.msra.mxu0 %v5470
        %5815 = vmatprep.subr.bf16.mxu0 %v5475
        %5816 = vmatpush1.bf16.msra.mxu0 %v5474
        %5817 = vmatprep.subr.bf16.mxu0 %v5479
        %5818 = vmatpush1.bf16.msra.mxu0 %v5478
        %5819 = vmatprep.subr.bf16.mxu0 %v5483
        %5820 = vmatpush1.bf16.msra.mxu0 %v5482
        %5821 = vmatprep.subr.bf16.mxu0 %v5487
        %5822 = vmatpush1.bf16.msra.mxu0 %v5486
        %5823 = vmatprep.subr.bf16.mxu0 %v5491
        %5824 = vmatpush1.bf16.msra.mxu0 %v5490
        %5825 = vmatprep.subr.bf16.mxu0 %v5495
        %5826 = vmatpush1.bf16.msra.mxu0 %v5494
        %5827 = vmatprep.subr.bf16.mxu0 %v5499
        %5828 = vmatpush1.bf16.msra.mxu0 %v5498
        %5829 = vmatprep.subr.bf16.mxu0 %v5503
        %5830 = vmatpush1.bf16.msra.mxu0 %v5502
        %5831 = vmatprep.subr.bf16.mxu0 %v5507
        %5832 = vmatpush1.bf16.msra.mxu0 %v5506
        %5833 = vmatprep.subr.bf16.mxu0 %v5511
        %5834 = vmatpush1.bf16.msra.mxu0 %v5510
        %5835 = vmatprep.subr.bf16.mxu0 %v5515
        %5836 = vmatpush1.bf16.msra.mxu0 %v5514
        %5837 = vmatprep.subr.bf16.mxu0 %v5519
        %5838 = vmatpush1.bf16.msra.mxu0 %v5518
        %5839 = vmatprep.mubr.bf16.mxu0 %v3782
        %5840 = vmatmul.mubr.bf16.gmra.mrb[0].mxu0 %v3781
        %v5841 = vpop.f32.mrb[0].mxu0
        %v5842 = vadd.f32 %v5789, %v5841
        %v5843 = vpop.f32.mrb[0].mxu0
        %v5844 = vadd.f32 %v5791, %v5843
        %v5845 = vpop.f32.mrb[0].mxu0
        %v5846 = vadd.f32 %v5793, %v5845
        %v5847 = vpop.f32.mrb[0].mxu0
        %v5848 = vadd.f32 %v5795, %v5847
        %5849 = vmatprep.mubr.bf16.mxu0 %v3786
        %5850 = vmatmul.mubr.bf16.gmra.mrb[0].mxu0 %v3785
        %v5851 = vpop.f32.mrb[0].mxu0
        %v5852 = vadd.f32 %v5799, %v5851
        %v5853 = vpop.f32.mrb[0].mxu0
        %v5854 = vadd.f32 %v5801, %v5853
        %v5855 = vpop.f32.mrb[0].mxu0
        %v5856 = vadd.f32 %v5803, %v5855
        %v5857 = vpop.f32.mrb[0].mxu0
        %v5858 = vadd.f32 %v5805, %v5857
        %5859 = vdwg.mxu0
        %v5876 = vrot.slane %v3779, 1
        %v5877 = vrot.slane %v3787, 1
        %v5878 = vsel %vm2577, %v5876, %v5877
        %v5879 = vrot.slane %v3780, 1
        %v5880 = vrot.slane %v3788, 1
        %v5881 = vsel %vm2577, %v5879, %v5880
        %v5882 = vrot.slane %v3781, 1
        %v5883 = vrot.slane %v3789, 1
        %v5884 = vsel %vm2577, %v5882, %v5883
        %v5885 = vrot.slane %v3782, 1
        %v5886 = vrot.slane %v3790, 1
        %v5887 = vsel %vm2577, %v5885, %v5886
        %v5888 = vrot.slane %v3783, 1
        %v5889 = vrot.slane %v3791, 1
        %v5890 = vsel %vm2577, %v5888, %v5889
        %v5891 = vrot.slane %v3784, 1
        %v5892 = vrot.slane %v3792, 1
        %v5893 = vsel %vm2577, %v5891, %v5892
        %v5894 = vrot.slane %v3785, 1
        %v5895 = vrot.slane %v3793, 1
        %v5896 = vsel %vm2577, %v5894, %v5895
        %v5897 = vrot.slane %v3786, 1
        %v5898 = vrot.slane %v3794, 1
        %v5899 = vsel %vm2577, %v5897, %v5898
        %s5908 = scalar_lea.vmem [#allocation10], 2048
        %v5909 = vld [vmem:[%s5908] sm:$0xff]
        %v5910 = vld [vmem:[%s5908 + $0x8] sm:$0xff]
        %v5911 = vld [vmem:[%s5908 + $0x10] sm:$0xff]
        %v5912 = vld [vmem:[%s5908 + $0x18] sm:$0xff]
        %v5913 = vld [vmem:[%s5908 + $0x20] sm:$0xff]
        %v5914 = vld [vmem:[%s5908 + $0x28] sm:$0xff]
        %v5915 = vld [vmem:[%s5908 + $0x30] sm:$0xff]
        %v5916 = vld [vmem:[%s5908 + $0x38] sm:$0xff]
        %v5917 = vld [vmem:[%s5908 + $0x40] sm:$0xff]
        %v5918 = vld [vmem:[%s5908 + $0x48] sm:$0xff]
        %v5919 = vld [vmem:[%s5908 + $0x50] sm:$0xff]
        %v5920 = vld [vmem:[%s5908 + $0x58] sm:$0xff]
        %v5921 = vld [vmem:[%s5908 + $0x60] sm:$0xff]
        %v5922 = vld [vmem:[%s5908 + $0x68] sm:$0xff]
        %v5923 = vld [vmem:[%s5908 + $0x70] sm:$0xff]
        %v5924 = vld [vmem:[%s5908 + $0x78] sm:$0xff]
        %v5925 = vld [vmem:[%s5908 + $0x80] sm:$0xff]
        %v5926 = vld [vmem:[%s5908 + $0x88] sm:$0xff]
        %v5927 = vld [vmem:[%s5908 + $0x90] sm:$0xff]
        %v5928 = vld [vmem:[%s5908 + $0x98] sm:$0xff]
        %v5929 = vld [vmem:[%s5908 + $0xa0] sm:$0xff]
        %v5930 = vld [vmem:[%s5908 + $0xa8] sm:$0xff]
        %v5931 = vld [vmem:[%s5908 + $0xb0] sm:$0xff]
        %v5932 = vld [vmem:[%s5908 + $0xb8] sm:$0xff]
        %v5933 = vld [vmem:[%s5908 + $0xc0] sm:$0xff]
        %v5934 = vld [vmem:[%s5908 + $0xc8] sm:$0xff]
        %v5935 = vld [vmem:[%s5908 + $0xd0] sm:$0xff]
        %v5936 = vld [vmem:[%s5908 + $0xd8] sm:$0xff]
        %v5937 = vld [vmem:[%s5908 + $0xe0] sm:$0xff]
        %v5938 = vld [vmem:[%s5908 + $0xe8] sm:$0xff]
        %v5939 = vld [vmem:[%s5908 + $0xf0] sm:$0xff]
        %v5940 = vld [vmem:[%s5908 + $0xf8] sm:$0xff]
        %v5941 = vld [vmem:[%s5908 + $0x100] sm:$0xff]
        %v5942 = vld [vmem:[%s5908 + $0x108] sm:$0xff]
        %v5943 = vld [vmem:[%s5908 + $0x110] sm:$0xff]
        %v5944 = vld [vmem:[%s5908 + $0x118] sm:$0xff]
        %v5945 = vld [vmem:[%s5908 + $0x120] sm:$0xff]
        %v5946 = vld [vmem:[%s5908 + $0x128] sm:$0xff]
        %v5947 = vld [vmem:[%s5908 + $0x130] sm:$0xff]
        %v5948 = vld [vmem:[%s5908 + $0x138] sm:$0xff]
        %v5949 = vld [vmem:[%s5908 + $0x140] sm:$0xff]
        %v5950 = vld [vmem:[%s5908 + $0x148] sm:$0xff]
        %v5951 = vld [vmem:[%s5908 + $0x150] sm:$0xff]
        %v5952 = vld [vmem:[%s5908 + $0x158] sm:$0xff]
        %v5953 = vld [vmem:[%s5908 + $0x160] sm:$0xff]
        %v5954 = vld [vmem:[%s5908 + $0x168] sm:$0xff]
        %v5955 = vld [vmem:[%s5908 + $0x170] sm:$0xff]
        %v5956 = vld [vmem:[%s5908 + $0x178] sm:$0xff]
        %v5957 = vld [vmem:[%s5908 + $0x180] sm:$0xff]
        %v5958 = vld [vmem:[%s5908 + $0x188] sm:$0xff]
        %v5959 = vld [vmem:[%s5908 + $0x190] sm:$0xff]
        %v5960 = vld [vmem:[%s5908 + $0x198] sm:$0xff]
        %v5961 = vld [vmem:[%s5908 + $0x1a0] sm:$0xff]
        %v5962 = vld [vmem:[%s5908 + $0x1a8] sm:$0xff]
        %v5963 = vld [vmem:[%s5908 + $0x1b0] sm:$0xff]
        %v5964 = vld [vmem:[%s5908 + $0x1b8] sm:$0xff]
        %v5965 = vld [vmem:[%s5908 + $0x1c0] sm:$0xff]
        %v5966 = vld [vmem:[%s5908 + $0x1c8] sm:$0xff]
        %v5967 = vld [vmem:[%s5908 + $0x1d0] sm:$0xff]
        %v5968 = vld [vmem:[%s5908 + $0x1d8] sm:$0xff]
        %v5969 = vld [vmem:[%s5908 + $0x1e0] sm:$0xff]
        %v5970 = vld [vmem:[%s5908 + $0x1e8] sm:$0xff]
        %v5971 = vld [vmem:[%s5908 + $0x1f0] sm:$0xff]
        %v5972 = vld [vmem:[%s5908 + $0x1f8] sm:$0xff]
        %v5973 = vld [vmem:[%s5908 + $0x200] sm:$0xff]
        %v5974 = vld [vmem:[%s5908 + $0x208] sm:$0xff]
        %v5975 = vld [vmem:[%s5908 + $0x210] sm:$0xff]
        %v5976 = vld [vmem:[%s5908 + $0x218] sm:$0xff]
        %v5977 = vld [vmem:[%s5908 + $0x220] sm:$0xff]
        %v5978 = vld [vmem:[%s5908 + $0x228] sm:$0xff]
        %v5979 = vld [vmem:[%s5908 + $0x230] sm:$0xff]
        %v5980 = vld [vmem:[%s5908 + $0x238] sm:$0xff]
        %v5981 = vld [vmem:[%s5908 + $0x240] sm:$0xff]
        %v5982 = vld [vmem:[%s5908 + $0x248] sm:$0xff]
        %v5983 = vld [vmem:[%s5908 + $0x250] sm:$0xff]
        %v5984 = vld [vmem:[%s5908 + $0x258] sm:$0xff]
        %v5985 = vld [vmem:[%s5908 + $0x260] sm:$0xff]
        %v5986 = vld [vmem:[%s5908 + $0x268] sm:$0xff]
        %v5987 = vld [vmem:[%s5908 + $0x270] sm:$0xff]
        %v5988 = vld [vmem:[%s5908 + $0x278] sm:$0xff]
        %v5989 = vld [vmem:[%s5908 + $0x280] sm:$0xff]
        %v5990 = vld [vmem:[%s5908 + $0x288] sm:$0xff]
        %v5991 = vld [vmem:[%s5908 + $0x290] sm:$0xff]
        %v5992 = vld [vmem:[%s5908 + $0x298] sm:$0xff]
        %v5993 = vld [vmem:[%s5908 + $0x2a0] sm:$0xff]
        %v5994 = vld [vmem:[%s5908 + $0x2a8] sm:$0xff]
        %v5995 = vld [vmem:[%s5908 + $0x2b0] sm:$0xff]
        %v5996 = vld [vmem:[%s5908 + $0x2b8] sm:$0xff]
        %v5997 = vld [vmem:[%s5908 + $0x2c0] sm:$0xff]
        %v5998 = vld [vmem:[%s5908 + $0x2c8] sm:$0xff]
        %v5999 = vld [vmem:[%s5908 + $0x2d0] sm:$0xff]
        %v6000 = vld [vmem:[%s5908 + $0x2d8] sm:$0xff]
        %v6001 = vld [vmem:[%s5908 + $0x2e0] sm:$0xff]
        %v6002 = vld [vmem:[%s5908 + $0x2e8] sm:$0xff]
        %v6003 = vld [vmem:[%s5908 + $0x2f0] sm:$0xff]
        %v6004 = vld [vmem:[%s5908 + $0x2f8] sm:$0xff]
        %v6005 = vld [vmem:[%s5908 + $0x300] sm:$0xff]
        %v6006 = vld [vmem:[%s5908 + $0x308] sm:$0xff]
        %v6007 = vld [vmem:[%s5908 + $0x310] sm:$0xff]
        %v6008 = vld [vmem:[%s5908 + $0x318] sm:$0xff]
        %v6009 = vld [vmem:[%s5908 + $0x320] sm:$0xff]
        %v6010 = vld [vmem:[%s5908 + $0x328] sm:$0xff]
        %v6011 = vld [vmem:[%s5908 + $0x330] sm:$0xff]
        %v6012 = vld [vmem:[%s5908 + $0x338] sm:$0xff]
        %v6013 = vld [vmem:[%s5908 + $0x340] sm:$0xff]
        %v6014 = vld [vmem:[%s5908 + $0x348] sm:$0xff]
        %v6015 = vld [vmem:[%s5908 + $0x350] sm:$0xff]
        %v6016 = vld [vmem:[%s5908 + $0x358] sm:$0xff]
        %v6017 = vld [vmem:[%s5908 + $0x360] sm:$0xff]
        %v6018 = vld [vmem:[%s5908 + $0x368] sm:$0xff]
        %v6019 = vld [vmem:[%s5908 + $0x370] sm:$0xff]
        %v6020 = vld [vmem:[%s5908 + $0x378] sm:$0xff]
        %v6021 = vld [vmem:[%s5908 + $0x380] sm:$0xff]
        %v6022 = vld [vmem:[%s5908 + $0x388] sm:$0xff]
        %v6023 = vld [vmem:[%s5908 + $0x390] sm:$0xff]
        %v6024 = vld [vmem:[%s5908 + $0x398] sm:$0xff]
        %v6025 = vld [vmem:[%s5908 + $0x3a0] sm:$0xff]
        %v6026 = vld [vmem:[%s5908 + $0x3a8] sm:$0xff]
        %v6027 = vld [vmem:[%s5908 + $0x3b0] sm:$0xff]
        %v6028 = vld [vmem:[%s5908 + $0x3b8] sm:$0xff]
        %v6029 = vld [vmem:[%s5908 + $0x3c0] sm:$0xff]
        %v6030 = vld [vmem:[%s5908 + $0x3c8] sm:$0xff]
        %v6031 = vld [vmem:[%s5908 + $0x3d0] sm:$0xff]
        %v6032 = vld [vmem:[%s5908 + $0x3d8] sm:$0xff]
        %v6033 = vld [vmem:[%s5908 + $0x3e0] sm:$0xff]
        %v6034 = vld [vmem:[%s5908 + $0x3e8] sm:$0xff]
        %v6035 = vld [vmem:[%s5908 + $0x3f0] sm:$0xff]
        %v6036 = vld [vmem:[%s5908 + $0x3f8] sm:$0xff]
        %v6165 = vunpack.c.l.b16 %v5909
        %v6166 = vunpack.c.h.b16 %v5909
        %v6167 = vunpack.c.l.b16 %v5910
        %v6168 = vunpack.c.h.b16 %v5910
        %v6169 = vunpack.c.l.b16 %v5911
        %v6170 = vunpack.c.h.b16 %v5911
        %v6171 = vunpack.c.l.b16 %v5912
        %v6172 = vunpack.c.h.b16 %v5912
        %v6173 = vunpack.c.l.b16 %v5913
        %v6174 = vunpack.c.h.b16 %v5913
        %v6175 = vunpack.c.l.b16 %v5914
        %v6176 = vunpack.c.h.b16 %v5914
        %v6177 = vunpack.c.l.b16 %v5915
        %v6178 = vunpack.c.h.b16 %v5915
        %v6179 = vunpack.c.l.b16 %v5916
        %v6180 = vunpack.c.h.b16 %v5916
        %v6181 = vunpack.c.l.b16 %v5917
        %v6182 = vunpack.c.h.b16 %v5917
        %v6183 = vunpack.c.l.b16 %v5918
        %v6184 = vunpack.c.h.b16 %v5918
        %v6185 = vunpack.c.l.b16 %v5919
        %v6186 = vunpack.c.h.b16 %v5919
        %v6187 = vunpack.c.l.b16 %v5920
        %v6188 = vunpack.c.h.b16 %v5920
        %v6189 = vunpack.c.l.b16 %v5921
        %v6190 = vunpack.c.h.b16 %v5921
        %v6191 = vunpack.c.l.b16 %v5922
        %v6192 = vunpack.c.h.b16 %v5922
        %v6193 = vunpack.c.l.b16 %v5923
        %v6194 = vunpack.c.h.b16 %v5923
        %v6195 = vunpack.c.l.b16 %v5924
        %v6196 = vunpack.c.h.b16 %v5924
        %v6197 = vunpack.c.l.b16 %v5925
        %v6198 = vunpack.c.h.b16 %v5925
        %v6199 = vunpack.c.l.b16 %v5926
        %v6200 = vunpack.c.h.b16 %v5926
        %v6201 = vunpack.c.l.b16 %v5927
        %v6202 = vunpack.c.h.b16 %v5927
        %v6203 = vunpack.c.l.b16 %v5928
        %v6204 = vunpack.c.h.b16 %v5928
        %v6205 = vunpack.c.l.b16 %v5929
        %v6206 = vunpack.c.h.b16 %v5929
        %v6207 = vunpack.c.l.b16 %v5930
        %v6208 = vunpack.c.h.b16 %v5930
        %v6209 = vunpack.c.l.b16 %v5931
        %v6210 = vunpack.c.h.b16 %v5931
        %v6211 = vunpack.c.l.b16 %v5932
        %v6212 = vunpack.c.h.b16 %v5932
        %v6213 = vunpack.c.l.b16 %v5933
        %v6214 = vunpack.c.h.b16 %v5933
        %v6215 = vunpack.c.l.b16 %v5934
        %v6216 = vunpack.c.h.b16 %v5934
        %v6217 = vunpack.c.l.b16 %v5935
        %v6218 = vunpack.c.h.b16 %v5935
        %v6219 = vunpack.c.l.b16 %v5936
        %v6220 = vunpack.c.h.b16 %v5936
        %v6221 = vunpack.c.l.b16 %v5937
        %v6222 = vunpack.c.h.b16 %v5937
        %v6223 = vunpack.c.l.b16 %v5938
        %v6224 = vunpack.c.h.b16 %v5938
        %v6225 = vunpack.c.l.b16 %v5939
        %v6226 = vunpack.c.h.b16 %v5939
        %v6227 = vunpack.c.l.b16 %v5940
        %v6228 = vunpack.c.h.b16 %v5940
        %v6229 = vunpack.c.l.b16 %v5941
        %v6230 = vunpack.c.h.b16 %v5941
        %v6231 = vunpack.c.l.b16 %v5942
        %v6232 = vunpack.c.h.b16 %v5942
        %v6233 = vunpack.c.l.b16 %v5943
        %v6234 = vunpack.c.h.b16 %v5943
        %v6235 = vunpack.c.l.b16 %v5944
        %v6236 = vunpack.c.h.b16 %v5944
        %v6237 = vunpack.c.l.b16 %v5945
        %v6238 = vunpack.c.h.b16 %v5945
        %v6239 = vunpack.c.l.b16 %v5946
        %v6240 = vunpack.c.h.b16 %v5946
        %v6241 = vunpack.c.l.b16 %v5947
        %v6242 = vunpack.c.h.b16 %v5947
        %v6243 = vunpack.c.l.b16 %v5948
        %v6244 = vunpack.c.h.b16 %v5948
        %v6245 = vunpack.c.l.b16 %v5949
        %v6246 = vunpack.c.h.b16 %v5949
        %v6247 = vunpack.c.l.b16 %v5950
        %v6248 = vunpack.c.h.b16 %v5950
        %v6249 = vunpack.c.l.b16 %v5951
        %v6250 = vunpack.c.h.b16 %v5951
        %v6251 = vunpack.c.l.b16 %v5952
        %v6252 = vunpack.c.h.b16 %v5952
        %v6253 = vunpack.c.l.b16 %v5953
        %v6254 = vunpack.c.h.b16 %v5953
        %v6255 = vunpack.c.l.b16 %v5954
        %v6256 = vunpack.c.h.b16 %v5954
        %v6257 = vunpack.c.l.b16 %v5955
        %v6258 = vunpack.c.h.b16 %v5955
        %v6259 = vunpack.c.l.b16 %v5956
        %v6260 = vunpack.c.h.b16 %v5956
        %v6261 = vunpack.c.l.b16 %v5957
        %v6262 = vunpack.c.h.b16 %v5957
        %v6263 = vunpack.c.l.b16 %v5958
        %v6264 = vunpack.c.h.b16 %v5958
        %v6265 = vunpack.c.l.b16 %v5959
        %v6266 = vunpack.c.h.b16 %v5959
        %v6267 = vunpack.c.l.b16 %v5960
        %v6268 = vunpack.c.h.b16 %v5960
        %v6269 = vunpack.c.l.b16 %v5961
        %v6270 = vunpack.c.h.b16 %v5961
        %v6271 = vunpack.c.l.b16 %v5962
        %v6272 = vunpack.c.h.b16 %v5962
        %v6273 = vunpack.c.l.b16 %v5963
        %v6274 = vunpack.c.h.b16 %v5963
        %v6275 = vunpack.c.l.b16 %v5964
        %v6276 = vunpack.c.h.b16 %v5964
        %v6277 = vunpack.c.l.b16 %v5965
        %v6278 = vunpack.c.h.b16 %v5965
        %v6279 = vunpack.c.l.b16 %v5966
        %v6280 = vunpack.c.h.b16 %v5966
        %v6281 = vunpack.c.l.b16 %v5967
        %v6282 = vunpack.c.h.b16 %v5967
        %v6283 = vunpack.c.l.b16 %v5968
        %v6284 = vunpack.c.h.b16 %v5968
        %v6285 = vunpack.c.l.b16 %v5969
        %v6286 = vunpack.c.h.b16 %v5969
        %v6287 = vunpack.c.l.b16 %v5970
        %v6288 = vunpack.c.h.b16 %v5970
        %v6289 = vunpack.c.l.b16 %v5971
        %v6290 = vunpack.c.h.b16 %v5971
        %v6291 = vunpack.c.l.b16 %v5972
        %v6292 = vunpack.c.h.b16 %v5972
        %v6293 = vunpack.c.l.b16 %v5973
        %v6294 = vunpack.c.h.b16 %v5973
        %v6295 = vunpack.c.l.b16 %v5974
        %v6296 = vunpack.c.h.b16 %v5974
        %v6297 = vunpack.c.l.b16 %v5975
        %v6298 = vunpack.c.h.b16 %v5975
        %v6299 = vunpack.c.l.b16 %v5976
        %v6300 = vunpack.c.h.b16 %v5976
        %v6301 = vunpack.c.l.b16 %v5977
        %v6302 = vunpack.c.h.b16 %v5977
        %v6303 = vunpack.c.l.b16 %v5978
        %v6304 = vunpack.c.h.b16 %v5978
        %v6305 = vunpack.c.l.b16 %v5979
        %v6306 = vunpack.c.h.b16 %v5979
        %v6307 = vunpack.c.l.b16 %v5980
        %v6308 = vunpack.c.h.b16 %v5980
        %v6309 = vunpack.c.l.b16 %v5981
        %v6310 = vunpack.c.h.b16 %v5981
        %v6311 = vunpack.c.l.b16 %v5982
        %v6312 = vunpack.c.h.b16 %v5982
        %v6313 = vunpack.c.l.b16 %v5983
        %v6314 = vunpack.c.h.b16 %v5983
        %v6315 = vunpack.c.l.b16 %v5984
        %v6316 = vunpack.c.h.b16 %v5984
        %v6317 = vunpack.c.l.b16 %v5985
        %v6318 = vunpack.c.h.b16 %v5985
        %v6319 = vunpack.c.l.b16 %v5986
        %v6320 = vunpack.c.h.b16 %v5986
        %v6321 = vunpack.c.l.b16 %v5987
        %v6322 = vunpack.c.h.b16 %v5987
        %v6323 = vunpack.c.l.b16 %v5988
        %v6324 = vunpack.c.h.b16 %v5988
        %v6325 = vunpack.c.l.b16 %v5989
        %v6326 = vunpack.c.h.b16 %v5989
        %v6327 = vunpack.c.l.b16 %v5990
        %v6328 = vunpack.c.h.b16 %v5990
        %v6329 = vunpack.c.l.b16 %v5991
        %v6330 = vunpack.c.h.b16 %v5991
        %v6331 = vunpack.c.l.b16 %v5992
        %v6332 = vunpack.c.h.b16 %v5992
        %v6333 = vunpack.c.l.b16 %v5993
        %v6334 = vunpack.c.h.b16 %v5993
        %v6335 = vunpack.c.l.b16 %v5994
        %v6336 = vunpack.c.h.b16 %v5994
        %v6337 = vunpack.c.l.b16 %v5995
        %v6338 = vunpack.c.h.b16 %v5995
        %v6339 = vunpack.c.l.b16 %v5996
        %v6340 = vunpack.c.h.b16 %v5996
        %v6341 = vunpack.c.l.b16 %v5997
        %v6342 = vunpack.c.h.b16 %v5997
        %v6343 = vunpack.c.l.b16 %v5998
        %v6344 = vunpack.c.h.b16 %v5998
        %v6345 = vunpack.c.l.b16 %v5999
        %v6346 = vunpack.c.h.b16 %v5999
        %v6347 = vunpack.c.l.b16 %v6000
        %v6348 = vunpack.c.h.b16 %v6000
        %v6349 = vunpack.c.l.b16 %v6001
        %v6350 = vunpack.c.h.b16 %v6001
        %v6351 = vunpack.c.l.b16 %v6002
        %v6352 = vunpack.c.h.b16 %v6002
        %v6353 = vunpack.c.l.b16 %v6003
        %v6354 = vunpack.c.h.b16 %v6003
        %v6355 = vunpack.c.l.b16 %v6004
        %v6356 = vunpack.c.h.b16 %v6004
        %v6357 = vunpack.c.l.b16 %v6005
        %v6358 = vunpack.c.h.b16 %v6005
        %v6359 = vunpack.c.l.b16 %v6006
        %v6360 = vunpack.c.h.b16 %v6006
        %v6361 = vunpack.c.l.b16 %v6007
        %v6362 = vunpack.c.h.b16 %v6007
        %v6363 = vunpack.c.l.b16 %v6008
        %v6364 = vunpack.c.h.b16 %v6008
        %v6365 = vunpack.c.l.b16 %v6009
        %v6366 = vunpack.c.h.b16 %v6009
        %v6367 = vunpack.c.l.b16 %v6010
        %v6368 = vunpack.c.h.b16 %v6010
        %v6369 = vunpack.c.l.b16 %v6011
        %v6370 = vunpack.c.h.b16 %v6011
        %v6371 = vunpack.c.l.b16 %v6012
        %v6372 = vunpack.c.h.b16 %v6012
        %v6373 = vunpack.c.l.b16 %v6013
        %v6374 = vunpack.c.h.b16 %v6013
        %v6375 = vunpack.c.l.b16 %v6014
        %v6376 = vunpack.c.h.b16 %v6014
        %v6377 = vunpack.c.l.b16 %v6015
        %v6378 = vunpack.c.h.b16 %v6015
        %v6379 = vunpack.c.l.b16 %v6016
        %v6380 = vunpack.c.h.b16 %v6016
        %v6381 = vunpack.c.l.b16 %v6017
        %v6382 = vunpack.c.h.b16 %v6017
        %v6383 = vunpack.c.l.b16 %v6018
        %v6384 = vunpack.c.h.b16 %v6018
        %v6385 = vunpack.c.l.b16 %v6019
        %v6386 = vunpack.c.h.b16 %v6019
        %v6387 = vunpack.c.l.b16 %v6020
        %v6388 = vunpack.c.h.b16 %v6020
        %v6389 = vunpack.c.l.b16 %v6021
        %v6390 = vunpack.c.h.b16 %v6021
        %v6391 = vunpack.c.l.b16 %v6022
        %v6392 = vunpack.c.h.b16 %v6022
        %v6393 = vunpack.c.l.b16 %v6023
        %v6394 = vunpack.c.h.b16 %v6023
        %v6395 = vunpack.c.l.b16 %v6024
        %v6396 = vunpack.c.h.b16 %v6024
        %v6397 = vunpack.c.l.b16 %v6025
        %v6398 = vunpack.c.h.b16 %v6025
        %v6399 = vunpack.c.l.b16 %v6026
        %v6400 = vunpack.c.h.b16 %v6026
        %v6401 = vunpack.c.l.b16 %v6027
        %v6402 = vunpack.c.h.b16 %v6027
        %v6403 = vunpack.c.l.b16 %v6028
        %v6404 = vunpack.c.h.b16 %v6028
        %v6405 = vunpack.c.l.b16 %v6029
        %v6406 = vunpack.c.h.b16 %v6029
        %v6407 = vunpack.c.l.b16 %v6030
        %v6408 = vunpack.c.h.b16 %v6030
        %v6409 = vunpack.c.l.b16 %v6031
        %v6410 = vunpack.c.h.b16 %v6031
        %v6411 = vunpack.c.l.b16 %v6032
        %v6412 = vunpack.c.h.b16 %v6032
        %v6413 = vunpack.c.l.b16 %v6033
        %v6414 = vunpack.c.h.b16 %v6033
        %v6415 = vunpack.c.l.b16 %v6034
        %v6416 = vunpack.c.h.b16 %v6034
        %v6417 = vunpack.c.l.b16 %v6035
        %v6418 = vunpack.c.h.b16 %v6035
        %v6419 = vunpack.c.l.b16 %v6036
        %v6420 = vunpack.c.h.b16 %v6036
        %v6421 = vpack.c.b16 %v6169, %v6165
        %v6422 = vpack.c.b16 %v6170, %v6166
        %v6423 = vpack.c.b16 %v6171, %v6167
        %v6424 = vpack.c.b16 %v6172, %v6168
        %v6425 = vpack.c.b16 %v6177, %v6173
        %v6426 = vpack.c.b16 %v6178, %v6174
        %v6427 = vpack.c.b16 %v6179, %v6175
        %v6428 = vpack.c.b16 %v6180, %v6176
        %v6429 = vpack.c.b16 %v6185, %v6181
        %v6430 = vpack.c.b16 %v6186, %v6182
        %v6431 = vpack.c.b16 %v6187, %v6183
        %v6432 = vpack.c.b16 %v6188, %v6184
        %v6433 = vpack.c.b16 %v6193, %v6189
        %v6434 = vpack.c.b16 %v6194, %v6190
        %v6435 = vpack.c.b16 %v6195, %v6191
        %v6436 = vpack.c.b16 %v6196, %v6192
        %v6437 = vpack.c.b16 %v6201, %v6197
        %v6438 = vpack.c.b16 %v6202, %v6198
        %v6439 = vpack.c.b16 %v6203, %v6199
        %v6440 = vpack.c.b16 %v6204, %v6200
        %v6441 = vpack.c.b16 %v6209, %v6205
        %v6442 = vpack.c.b16 %v6210, %v6206
        %v6443 = vpack.c.b16 %v6211, %v6207
        %v6444 = vpack.c.b16 %v6212, %v6208
        %v6445 = vpack.c.b16 %v6217, %v6213
        %v6446 = vpack.c.b16 %v6218, %v6214
        %v6447 = vpack.c.b16 %v6219, %v6215
        %v6448 = vpack.c.b16 %v6220, %v6216
        %v6449 = vpack.c.b16 %v6225, %v6221
        %v6450 = vpack.c.b16 %v6226, %v6222
        %v6451 = vpack.c.b16 %v6227, %v6223
        %v6452 = vpack.c.b16 %v6228, %v6224
        %v6453 = vpack.c.b16 %v6233, %v6229
        %v6454 = vpack.c.b16 %v6234, %v6230
        %v6455 = vpack.c.b16 %v6235, %v6231
        %v6456 = vpack.c.b16 %v6236, %v6232
        %v6457 = vpack.c.b16 %v6241, %v6237
        %v6458 = vpack.c.b16 %v6242, %v6238
        %v6459 = vpack.c.b16 %v6243, %v6239
        %v6460 = vpack.c.b16 %v6244, %v6240
        %v6461 = vpack.c.b16 %v6249, %v6245
        %v6462 = vpack.c.b16 %v6250, %v6246
        %v6463 = vpack.c.b16 %v6251, %v6247
        %v6464 = vpack.c.b16 %v6252, %v6248
        %v6465 = vpack.c.b16 %v6257, %v6253
        %v6466 = vpack.c.b16 %v6258, %v6254
        %v6467 = vpack.c.b16 %v6259, %v6255
        %v6468 = vpack.c.b16 %v6260, %v6256
        %v6469 = vpack.c.b16 %v6265, %v6261
        %v6470 = vpack.c.b16 %v6266, %v6262
        %v6471 = vpack.c.b16 %v6267, %v6263
        %v6472 = vpack.c.b16 %v6268, %v6264
        %v6473 = vpack.c.b16 %v6273, %v6269
        %v6474 = vpack.c.b16 %v6274, %v6270
        %v6475 = vpack.c.b16 %v6275, %v6271
        %v6476 = vpack.c.b16 %v6276, %v6272
        %v6477 = vpack.c.b16 %v6281, %v6277
        %v6478 = vpack.c.b16 %v6282, %v6278
        %v6479 = vpack.c.b16 %v6283, %v6279
        %v6480 = vpack.c.b16 %v6284, %v6280
        %v6481 = vpack.c.b16 %v6289, %v6285
        %v6482 = vpack.c.b16 %v6290, %v6286
        %v6483 = vpack.c.b16 %v6291, %v6287
        %v6484 = vpack.c.b16 %v6292, %v6288
        %v6485 = vpack.c.b16 %v6297, %v6293
        %v6486 = vpack.c.b16 %v6298, %v6294
        %v6487 = vpack.c.b16 %v6299, %v6295
        %v6488 = vpack.c.b16 %v6300, %v6296
        %v6489 = vpack.c.b16 %v6305, %v6301
        %v6490 = vpack.c.b16 %v6306, %v6302
        %v6491 = vpack.c.b16 %v6307, %v6303
        %v6492 = vpack.c.b16 %v6308, %v6304
        %v6493 = vpack.c.b16 %v6313, %v6309
        %v6494 = vpack.c.b16 %v6314, %v6310
        %v6495 = vpack.c.b16 %v6315, %v6311
        %v6496 = vpack.c.b16 %v6316, %v6312
        %v6497 = vpack.c.b16 %v6321, %v6317
        %v6498 = vpack.c.b16 %v6322, %v6318
        %v6499 = vpack.c.b16 %v6323, %v6319
        %v6500 = vpack.c.b16 %v6324, %v6320
        %v6501 = vpack.c.b16 %v6329, %v6325
        %v6502 = vpack.c.b16 %v6330, %v6326
        %v6503 = vpack.c.b16 %v6331, %v6327
        %v6504 = vpack.c.b16 %v6332, %v6328
        %v6505 = vpack.c.b16 %v6337, %v6333
        %v6506 = vpack.c.b16 %v6338, %v6334
        %v6507 = vpack.c.b16 %v6339, %v6335
        %v6508 = vpack.c.b16 %v6340, %v6336
        %v6509 = vpack.c.b16 %v6345, %v6341
        %v6510 = vpack.c.b16 %v6346, %v6342
        %v6511 = vpack.c.b16 %v6347, %v6343
        %v6512 = vpack.c.b16 %v6348, %v6344
        %v6513 = vpack.c.b16 %v6353, %v6349
        %v6514 = vpack.c.b16 %v6354, %v6350
        %v6515 = vpack.c.b16 %v6355, %v6351
        %v6516 = vpack.c.b16 %v6356, %v6352
        %v6517 = vpack.c.b16 %v6361, %v6357
        %v6518 = vpack.c.b16 %v6362, %v6358
        %v6519 = vpack.c.b16 %v6363, %v6359
        %v6520 = vpack.c.b16 %v6364, %v6360
        %v6521 = vpack.c.b16 %v6369, %v6365
        %v6522 = vpack.c.b16 %v6370, %v6366
        %v6523 = vpack.c.b16 %v6371, %v6367
        %v6524 = vpack.c.b16 %v6372, %v6368
        %v6525 = vpack.c.b16 %v6377, %v6373
        %v6526 = vpack.c.b16 %v6378, %v6374
        %v6527 = vpack.c.b16 %v6379, %v6375
        %v6528 = vpack.c.b16 %v6380, %v6376
        %v6529 = vpack.c.b16 %v6385, %v6381
        %v6530 = vpack.c.b16 %v6386, %v6382
        %v6531 = vpack.c.b16 %v6387, %v6383
        %v6532 = vpack.c.b16 %v6388, %v6384
        %v6533 = vpack.c.b16 %v6393, %v6389
        %v6534 = vpack.c.b16 %v6394, %v6390
        %v6535 = vpack.c.b16 %v6395, %v6391
        %v6536 = vpack.c.b16 %v6396, %v6392
        %v6537 = vpack.c.b16 %v6401, %v6397
        %v6538 = vpack.c.b16 %v6402, %v6398
        %v6539 = vpack.c.b16 %v6403, %v6399
        %v6540 = vpack.c.b16 %v6404, %v6400
        %v6541 = vpack.c.b16 %v6409, %v6405
        %v6542 = vpack.c.b16 %v6410, %v6406
        %v6543 = vpack.c.b16 %v6411, %v6407
        %v6544 = vpack.c.b16 %v6412, %v6408
        %v6545 = vpack.c.b16 %v6417, %v6413
        %v6546 = vpack.c.b16 %v6418, %v6414
        %v6547 = vpack.c.b16 %v6419, %v6415
        %v6548 = vpack.c.b16 %v6420, %v6416
        %6677 = vmatprep.subr.bf16.mxu0 %v6422
        %6678 = vmatpush1.bf16.msra.mxu0 %v6421
        %6679 = vmatprep.subr.bf16.mxu0 %v6426
        %6680 = vmatpush1.bf16.msra.mxu0 %v6425
        %6681 = vmatprep.subr.bf16.mxu0 %v6430
        %6682 = vmatpush1.bf16.msra.mxu0 %v6429
        %6683 = vmatprep.subr.bf16.mxu0 %v6434
        %6684 = vmatpush1.bf16.msra.mxu0 %v6433
        %6685 = vmatprep.subr.bf16.mxu0 %v6438
        %6686 = vmatpush1.bf16.msra.mxu0 %v6437
        %6687 = vmatprep.subr.bf16.mxu0 %v6442
        %6688 = vmatpush1.bf16.msra.mxu0 %v6441
        %6689 = vmatprep.subr.bf16.mxu0 %v6446
        %6690 = vmatpush1.bf16.msra.mxu0 %v6445
        %6691 = vmatprep.subr.bf16.mxu0 %v6450
        %6692 = vmatpush1.bf16.msra.mxu0 %v6449
        %6693 = vmatprep.subr.bf16.mxu0 %v6454
        %6694 = vmatpush1.bf16.msra.mxu0 %v6453
        %6695 = vmatprep.subr.bf16.mxu0 %v6458
        %6696 = vmatpush1.bf16.msra.mxu0 %v6457
        %6697 = vmatprep.subr.bf16.mxu0 %v6462
        %6698 = vmatpush1.bf16.msra.mxu0 %v6461
        %6699 = vmatprep.subr.bf16.mxu0 %v6466
        %6700 = vmatpush1.bf16.msra.mxu0 %v6465
        %6701 = vmatprep.subr.bf16.mxu0 %v6470
        %6702 = vmatpush1.bf16.msra.mxu0 %v6469
        %6703 = vmatprep.subr.bf16.mxu0 %v6474
        %6704 = vmatpush1.bf16.msra.mxu0 %v6473
        %6705 = vmatprep.subr.bf16.mxu0 %v6478
        %6706 = vmatpush1.bf16.msra.mxu0 %v6477
        %6707 = vmatprep.subr.bf16.mxu0 %v6482
        %6708 = vmatpush1.bf16.msra.mxu0 %v6481
        %6709 = vmatprep.mubr.bf16.mxu0 %v5881
        %6710 = vmatmul.mubr.bf16.gmra.mrb[0].mxu0 %v5878
        %v6711 = vpop.f32.mrb[0].mxu0
        %v6712 = vadd.f32 0.0, %v6711
        %v6713 = vpop.f32.mrb[0].mxu0
        %v6714 = vadd.f32 0.0, %v6713
        %v6715 = vpop.f32.mrb[0].mxu0
        %v6716 = vadd.f32 0.0, %v6715
        %v6717 = vpop.f32.mrb[0].mxu0
        %v6718 = vadd.f32 0.0, %v6717
        %6719 = vmatprep.mubr.bf16.mxu0 %v5893
        %6720 = vmatmul.mubr.bf16.gmra.mrb[0].mxu0 %v5890
        %v6721 = vpop.f32.mrb[0].mxu0
        %v6722 = vadd.f32 0.0, %v6721
        %v6723 = vpop.f32.mrb[0].mxu0
        %v6724 = vadd.f32 0.0, %v6723
        %v6725 = vpop.f32.mrb[0].mxu0
        %v6726 = vadd.f32 0.0, %v6725
        %v6727 = vpop.f32.mrb[0].mxu0
        %v6728 = vadd.f32 0.0, %v6727
        %6729 = vdwg.mxu0
        %6730 = vmatprep.subr.bf16.mxu0 %v6486
        %6731 = vmatpush1.bf16.msra.mxu0 %v6485
        %6732 = vmatprep.subr.bf16.mxu0 %v6490
        %6733 = vmatpush1.bf16.msra.mxu0 %v6489
        %6734 = vmatprep.subr.bf16.mxu0 %v6494
        %6735 = vmatpush1.bf16.msra.mxu0 %v6493
        %6736 = vmatprep.subr.bf16.mxu0 %v6498
        %6737 = vmatpush1.bf16.msra.mxu0 %v6497
        %6738 = vmatprep.subr.bf16.mxu0 %v6502
        %6739 = vmatpush1.bf16.msra.mxu0 %v6501
        %6740 = vmatprep.subr.bf16.mxu0 %v6506
        %6741 = vmatpush1.bf16.msra.mxu0 %v6505
        %6742 = vmatprep.subr.bf16.mxu0 %v6510
        %6743 = vmatpush1.bf16.msra.mxu0 %v6509
        %6744 = vmatprep.subr.bf16.mxu0 %v6514
        %6745 = vmatpush1.bf16.msra.mxu0 %v6513
        %6746 = vmatprep.subr.bf16.mxu0 %v6518
        %6747 = vmatpush1.bf16.msra.mxu0 %v6517
        %6748 = vmatprep.subr.bf16.mxu0 %v6522
        %6749 = vmatpush1.bf16.msra.mxu0 %v6521
        %6750 = vmatprep.subr.bf16.mxu0 %v6526
        %6751 = vmatpush1.bf16.msra.mxu0 %v6525
        %6752 = vmatprep.subr.bf16.mxu0 %v6530
        %6753 = vmatpush1.bf16.msra.mxu0 %v6529
        %6754 = vmatprep.subr.bf16.mxu0 %v6534
        %6755 = vmatpush1.bf16.msra.mxu0 %v6533
        %6756 = vmatprep.subr.bf16.mxu0 %v6538
        %6757 = vmatpush1.bf16.msra.mxu0 %v6537
        %6758 = vmatprep.subr.bf16.mxu0 %v6542
        %6759 = vmatpush1.bf16.msra.mxu0 %v6541
        %6760 = vmatprep.subr.bf16.mxu0 %v6546
        %6761 = vmatpush1.bf16.msra.mxu0 %v6545
        %6762 = vmatprep.mubr.bf16.mxu0 %v5887
        %6763 = vmatmul.mubr.bf16.gmra.mrb[0].mxu0 %v5884
        %v6764 = vpop.f32.mrb[0].mxu0
        %v6765 = vadd.f32 %v6712, %v6764
        %v6766 = vpop.f32.mrb[0].mxu0
        %v6767 = vadd.f32 %v6714, %v6766
        %v6768 = vpop.f32.mrb[0].mxu0
        %v6769 = vadd.f32 %v6716, %v6768
        %v6770 = vpop.f32.mrb[0].mxu0
        %v6771 = vadd.f32 %v6718, %v6770
        %6772 = vmatprep.mubr.bf16.mxu0 %v5899
        %6773 = vmatmul.mubr.bf16.gmra.mrb[0].mxu0 %v5896
        %v6774 = vpop.f32.mrb[0].mxu0
        %v6775 = vadd.f32 %v6722, %v6774
        %v6776 = vpop.f32.mrb[0].mxu0
        %v6777 = vadd.f32 %v6724, %v6776
        %v6778 = vpop.f32.mrb[0].mxu0
        %v6779 = vadd.f32 %v6726, %v6778
        %v6780 = vpop.f32.mrb[0].mxu0
        %v6781 = vadd.f32 %v6728, %v6780
        %6782 = vdwg.mxu0
        %6783 = vmatprep.subr.bf16.mxu0 %v6424
        %6784 = vmatpush1.bf16.msra.mxu0 %v6423
        %6785 = vmatprep.subr.bf16.mxu0 %v6428
        %6786 = vmatpush1.bf16.msra.mxu0 %v6427
        %6787 = vmatprep.subr.bf16.mxu0 %v6432
        %6788 = vmatpush1.bf16.msra.mxu0 %v6431
        %6789 = vmatprep.subr.bf16.mxu0 %v6436
        %6790 = vmatpush1.bf16.msra.mxu0 %v6435
        %6791 = vmatprep.subr.bf16.mxu0 %v6440
        %6792 = vmatpush1.bf16.msra.mxu0 %v6439
        %6793 = vmatprep.subr.bf16.mxu0 %v6444
        %6794 = vmatpush1.bf16.msra.mxu0 %v6443
        %6795 = vmatprep.subr.bf16.mxu0 %v6448
        %6796 = vmatpush1.bf16.msra.mxu0 %v6447
        %6797 = vmatprep.subr.bf16.mxu0 %v6452
        %6798 = vmatpush1.bf16.msra.mxu0 %v6451
        %6799 = vmatprep.subr.bf16.mxu0 %v6456
        %6800 = vmatpush1.bf16.msra.mxu0 %v6455
        %6801 = vmatprep.subr.bf16.mxu0 %v6460
        %6802 = vmatpush1.bf16.msra.mxu0 %v6459
        %6803 = vmatprep.subr.bf16.mxu0 %v6464
        %6804 = vmatpush1.bf16.msra.mxu0 %v6463
        %6805 = vmatprep.subr.bf16.mxu0 %v6468
        %6806 = vmatpush1.bf16.msra.mxu0 %v6467
        %6807 = vmatprep.subr.bf16.mxu0 %v6472
        %6808 = vmatpush1.bf16.msra.mxu0 %v6471
        %6809 = vmatprep.subr.bf16.mxu0 %v6476
        %6810 = vmatpush1.bf16.msra.mxu0 %v6475
        %6811 = vmatprep.subr.bf16.mxu0 %v6480
        %6812 = vmatpush1.bf16.msra.mxu0 %v6479
        %6813 = vmatprep.subr.bf16.mxu0 %v6484
        %6814 = vmatpush1.bf16.msra.mxu0 %v6483
        %6815 = vmatprep.mubr.bf16.mxu0 %v5881
        %6816 = vmatmul.mubr.bf16.gmra.mrb[0].mxu0 %v5878
        %v6817 = vpop.f32.mrb[0].mxu0
        %v6818 = vadd.f32 0.0, %v6817
        %v6819 = vpop.f32.mrb[0].mxu0
        %v6820 = vadd.f32 0.0, %v6819
        %v6821 = vpop.f32.mrb[0].mxu0
        %v6822 = vadd.f32 0.0, %v6821
        %v6823 = vpop.f32.mrb[0].mxu0
        %v6824 = vadd.f32 0.0, %v6823
        %6825 = vmatprep.mubr.bf16.mxu0 %v5893
        %6826 = vmatmul.mubr.bf16.gmra.mrb[0].mxu0 %v5890
        %v6827 = vpop.f32.mrb[0].mxu0
        %v6828 = vadd.f32 0.0, %v6827
        %v6829 = vpop.f32.mrb[0].mxu0
        %v6830 = vadd.f32 0.0, %v6829
        %v6831 = vpop.f32.mrb[0].mxu0
        %v6832 = vadd.f32 0.0, %v6831
        %v6833 = vpop.f32.mrb[0].mxu0
        %v6834 = vadd.f32 0.0, %v6833
        %6835 = vdwg.mxu0
        %6836 = vmatprep.subr.bf16.mxu0 %v6488
        %6837 = vmatpush1.bf16.msra.mxu0 %v6487
        %6838 = vmatprep.subr.bf16.mxu0 %v6492
        %6839 = vmatpush1.bf16.msra.mxu0 %v6491
        %6840 = vmatprep.subr.bf16.mxu0 %v6496
        %6841 = vmatpush1.bf16.msra.mxu0 %v6495
        %6842 = vmatprep.subr.bf16.mxu0 %v6500
        %6843 = vmatpush1.bf16.msra.mxu0 %v6499
        %6844 = vmatprep.subr.bf16.mxu0 %v6504
        %6845 = vmatpush1.bf16.msra.mxu0 %v6503
        %6846 = vmatprep.subr.bf16.mxu0 %v6508
        %6847 = vmatpush1.bf16.msra.mxu0 %v6507
        %6848 = vmatprep.subr.bf16.mxu0 %v6512
        %6849 = vmatpush1.bf16.msra.mxu0 %v6511
        %6850 = vmatprep.subr.bf16.mxu0 %v6516
        %6851 = vmatpush1.bf16.msra.mxu0 %v6515
        %6852 = vmatprep.subr.bf16.mxu0 %v6520
        %6853 = vmatpush1.bf16.msra.mxu0 %v6519
        %6854 = vmatprep.subr.bf16.mxu0 %v6524
        %6855 = vmatpush1.bf16.msra.mxu0 %v6523
        %6856 = vmatprep.subr.bf16.mxu0 %v6528
        %6857 = vmatpush1.bf16.msra.mxu0 %v6527
        %6858 = vmatprep.subr.bf16.mxu0 %v6532
        %6859 = vmatpush1.bf16.msra.mxu0 %v6531
        %6860 = vmatprep.subr.bf16.mxu0 %v6536
        %6861 = vmatpush1.bf16.msra.mxu0 %v6535
        %6862 = vmatprep.subr.bf16.mxu0 %v6540
        %6863 = vmatpush1.bf16.msra.mxu0 %v6539
        %6864 = vmatprep.subr.bf16.mxu0 %v6544
        %6865 = vmatpush1.bf16.msra.mxu0 %v6543
        %6866 = vmatprep.subr.bf16.mxu0 %v6548
        %6867 = vmatpush1.bf16.msra.mxu0 %v6547
        %6868 = vmatprep.mubr.bf16.mxu0 %v5887
        %6869 = vmatmul.mubr.bf16.gmra.mrb[0].mxu0 %v5884
        %v6870 = vpop.f32.mrb[0].mxu0
        %v6871 = vadd.f32 %v6818, %v6870
        %v6872 = vpop.f32.mrb[0].mxu0
        %v6873 = vadd.f32 %v6820, %v6872
        %v6874 = vpop.f32.mrb[0].mxu0
        %v6875 = vadd.f32 %v6822, %v6874
        %v6876 = vpop.f32.mrb[0].mxu0
        %v6877 = vadd.f32 %v6824, %v6876
        %6878 = vmatprep.mubr.bf16.mxu0 %v5899
        %6879 = vmatmul.mubr.bf16.gmra.mrb[0].mxu0 %v5896
        %v6880 = vpop.f32.mrb[0].mxu0
        %v6881 = vadd.f32 %v6828, %v6880
        %v6882 = vpop.f32.mrb[0].mxu0
        %v6883 = vadd.f32 %v6830, %v6882
        %v6884 = vpop.f32.mrb[0].mxu0
        %v6885 = vadd.f32 %v6832, %v6884
        %v6886 = vpop.f32.mrb[0].mxu0
        %v6887 = vadd.f32 %v6834, %v6886
        %6888 = vdwg.mxu0
        %v6889 = vadd.f32 %v5736, %v6765
        %v6890 = vadd.f32 %v5738, %v6767
        %v6891 = vadd.f32 %v5842, %v6871
        %v6892 = vadd.f32 %v5844, %v6873
        %v6893 = vadd.f32 %v5740, %v6769
        %v6894 = vadd.f32 %v5742, %v6771
        %v6895 = vadd.f32 %v5846, %v6875
        %v6896 = vadd.f32 %v5848, %v6877
        %v6897 = vadd.f32 %v5746, %v6775
        %v6898 = vadd.f32 %v5748, %v6777
        %v6899 = vadd.f32 %v5852, %v6881
        %v6900 = vadd.f32 %v5854, %v6883
        %v6901 = vadd.f32 %v5750, %v6779
        %v6902 = vadd.f32 %v5752, %v6781
        %v6903 = vadd.f32 %v5856, %v6885
        %v6904 = vadd.f32 %v5858, %v6887
        %v6905 = vld [vmem:[#allocation11] sm:$0xf]
        %v6907 = vlaneseq
        %v6908 = vshrl.u32 %v6907, 7
        %v6909 = vsub.s32 0, %v6908
        %v6910 = vrot.slane %v6905, %v6909
        %v6911 = vlaneseq
        %v6912 = vshrl.u32 %v6911, 7
        %v6913 = vsub.s32 1, %v6912
        %v6914 = vrot.slane %v6905, %v6913
        %v6915 = vlaneseq
        %v6916 = vshrl.u32 %v6915, 7
        %v6917 = vsub.s32 2, %v6916
        %v6918 = vrot.slane %v6905, %v6917
        %v6919 = vlaneseq
        %v6920 = vshrl.u32 %v6919, 7
        %v6921 = vsub.s32 3, %v6920
        %v6922 = vrot.slane %v6905, %v6921
        %v6927 = vmul.f32 %v6889, %v6910
        %v6928 = vmul.f32 %v6890, %v6914
        %v6929 = vmul.f32 %v6891, %v6918
        %v6930 = vmul.f32 %v6892, %v6922
        %v6931 = vmul.f32 %v6893, %v6910
        %v6932 = vmul.f32 %v6894, %v6914
        %v6933 = vmul.f32 %v6895, %v6918
        %v6934 = vmul.f32 %v6896, %v6922
        %v6935 = vmul.f32 %v6897, %v6910
        %v6936 = vmul.f32 %v6898, %v6914
        %v6937 = vmul.f32 %v6899, %v6918
        %v6938 = vmul.f32 %v6900, %v6922
        %v6939 = vmul.f32 %v6901, %v6910
        %v6940 = vmul.f32 %v6902, %v6914
        %v6941 = vmul.f32 %v6903, %v6918
        %v6942 = vmul.f32 %v6904, %v6922
        %v6943 = vld [vmem:[#allocation13] sm:$0xf]
        %v6945 = vlaneseq
        %v6946 = vshrl.u32 %v6945, 7
        %v6947 = vsub.s32 0, %v6946
        %v6948 = vrot.slane %v6943, %v6947
        %v6949 = vlaneseq
        %v6950 = vshrl.u32 %v6949, 7
        %v6951 = vsub.s32 1, %v6950
        %v6952 = vrot.slane %v6943, %v6951
        %v6953 = vlaneseq
        %v6954 = vshrl.u32 %v6953, 7
        %v6955 = vsub.s32 2, %v6954
        %v6956 = vrot.slane %v6943, %v6955
        %v6957 = vlaneseq
        %v6958 = vshrl.u32 %v6957, 7
        %v6959 = vsub.s32 3, %v6958
        %v6960 = vrot.slane %v6943, %v6959
        %v6965 = vadd.f32 %v6927, %v6948
        %v6966 = vadd.f32 %v6928, %v6952
        %v6967 = vadd.f32 %v6929, %v6956
        %v6968 = vadd.f32 %v6930, %v6960
        %v6969 = vadd.f32 %v6931, %v6948
        %v6970 = vadd.f32 %v6932, %v6952
        %v6971 = vadd.f32 %v6933, %v6956
        %v6972 = vadd.f32 %v6934, %v6960
        %v6973 = vadd.f32 %v6935, %v6948
        %v6974 = vadd.f32 %v6936, %v6952
        %v6975 = vadd.f32 %v6937, %v6956
        %v6976 = vadd.f32 %v6938, %v6960
        %v6977 = vadd.f32 %v6939, %v6948
        %v6978 = vadd.f32 %v6940, %v6952
        %v6979 = vadd.f32 %v6941, %v6956
        %v6980 = vadd.f32 %v6942, %v6960
        %v6981 = vadd.f32 %v6965, %v380
        %v6982 = vadd.f32 %v6966, %v381
        %v6983 = vadd.f32 %v6967, %v382
        %v6984 = vadd.f32 %v6968, %v383
        %v6985 = vadd.f32 %v6969, %v384
        %v6986 = vadd.f32 %v6970, %v385
        %v6987 = vadd.f32 %v6971, %v386
        %v6988 = vadd.f32 %v6972, %v387
        %v6989 = vadd.f32 %v6973, %v388
        %v6990 = vadd.f32 %v6974, %v389
        %v6991 = vadd.f32 %v6975, %v390
        %v6992 = vadd.f32 %v6976, %v391
        %v6993 = vadd.f32 %v6977, %v392
        %v6994 = vadd.f32 %v6978, %v393
        %v6995 = vadd.f32 %v6979, %v394
        %v6996 = vadd.f32 %v6980, %v395
        %v6997 = vmax.f32 %v6981, 0.0
        %v6998 = vmax.f32 %v6982, 0.0
        %v6999 = vmax.f32 %v6983, 0.0
        %v7000 = vmax.f32 %v6984, 0.0
        %v7001 = vmax.f32 %v6985, 0.0
        %v7002 = vmax.f32 %v6986, 0.0
        %v7003 = vmax.f32 %v6987, 0.0
        %v7004 = vmax.f32 %v6988, 0.0
        %v7005 = vmax.f32 %v6989, 0.0
        %v7006 = vmax.f32 %v6990, 0.0
        %v7007 = vmax.f32 %v6991, 0.0
        %v7008 = vmax.f32 %v6992, 0.0
        %v7009 = vmax.f32 %v6993, 0.0
        %v7010 = vmax.f32 %v6994, 0.0
        %v7011 = vmax.f32 %v6995, 0.0
        %v7012 = vmax.f32 %v6996, 0.0
        %7013 = vst [vmem:[%s376] sm:$0xff] %v6997
        %7014 = vst [vmem:[%s376 + $0x8] sm:$0xff] %v6998
        %7015 = vst [vmem:[%s376 + $0x10] sm:$0xff] %v6999
        %7016 = vst [vmem:[%s376 + $0x18] sm:$0xff] %v7000
        %7017 = vst [vmem:[%s376 + $0x20] sm:$0xff] %v7001
        %7018 = vst [vmem:[%s376 + $0x28] sm:$0xff] %v7002
        %7019 = vst [vmem:[%s376 + $0x30] sm:$0xff] %v7003
        %7020 = vst [vmem:[%s376 + $0x38] sm:$0xff] %v7004
        %7021 = vst [vmem:[%s376 + $0x40] sm:$0xff] %v7005
        %7022 = vst [vmem:[%s376 + $0x48] sm:$0xff] %v7006
        %7023 = vst [vmem:[%s376 + $0x50] sm:$0xff] %v7007
        %7024 = vst [vmem:[%s376 + $0x58] sm:$0xff] %v7008
        %7025 = vst [vmem:[%s376 + $0x60] sm:$0xff] %v7009
        %7026 = vst [vmem:[%s376 + $0x68] sm:$0xff] %v7010
        %7027 = vst [vmem:[%s376 + $0x70] sm:$0xff] %v7011
        %7028 = vst [vmem:[%s376 + $0x78] sm:$0xff] %v7012
        %s7029 = sand.u32 %s187, 1
        %s7030 = scalar_lea.sflag [#allocation4], %s7029
        %s7031 = sand.u32 %s187, 1
        %s7032 = smul.addr %s7031, 128
        %s7033 = scalar_lea.vmem [#allocation14], %s7032
        // Predicated region
        $region77: #{tpu_custom_call.1} parent=47 // pred_check
          %p7034 = pneg %p197
        $region78: #{tpu_custom_call.1} parent=47 // pred_check_branch
          %7036 = sbr.rel (%p7034) target = $region80
        $region79: #{tpu_custom_call.1} parent=47 // pred_region
          %s7037 = smul.u32 2, %s27
          %s7039 = ssub.s32 2048, 2048
          %7040 = vsyncadd %s7030, %s7039
          %s7041 = smul.addr %s7037, 8
          %s7042 = smul.addr %s7041, 128
          %s7043 = scalar_lea.hbm %s7, %s7042
          %s7044 = sshll.u32 %s7033, 4
          %s7045 = int_to_ptr.vmem [resolvable:$true] %s7044
          %7050 = dma.vmem_to_hbm [thread:$0]  %s7045, 2048, %s7043, %s7030, 512, 512, 32
        $region80: #{tpu_custom_call.1} parent=47 // pred_fallthru
          _
      $region48: #{tpu_custom_call.1} parent=5 // pred_fallthru
        _
      %p7051 = scmp.le.s32.totalorder 2, %s22
      // Predicated region
      $region81: #{tpu_custom_call.1} parent=5 // pred_check
        %p7052 = pneg %p7051
      $region82: #{tpu_custom_call.1} parent=5 // pred_check_branch
        %7054 = sbr.rel (%p7052) target = $region84
      $region83: #{tpu_custom_call.1} parent=5 // pred_region
        %s7055 = ssub.s32 %s22, 2
        // Predicated region
        $region85: #{tpu_custom_call.1} parent=83 // pred_check
          %p7056 = pneg %p203
        $region86: #{tpu_custom_call.1} parent=83 // pred_check_branch
          %7058 = sbr.rel (%p7056) target = $region88
        $region87: #{tpu_custom_call.1} parent=83 // pred_region
          %s7059 = sand.u32 %s188, 1
          %s7060 = scalar_lea.sflag [#allocation4], %s7059
          %s7061 = sand.u32 %s188, 1
          %s7062 = smul.addr %s7061, 128
          %s7063 = scalar_lea.vmem [#allocation14], %s7062
          %7064 = dma.done %s7060, 2048
        $region88: #{tpu_custom_call.1} parent=83 // pred_fallthru
          _
      $region84: #{tpu_custom_call.1} parent=5 // pred_fallthru
        _
    $region6: #{tpu_custom_call.1} parent=1 // loop_footer
      %s26 = sadd.s32 1, %s22
    $region7: #{tpu_custom_call.1} parent=1 // loop_footer_branch
      %21 = sbr.rel target = $region3
    $region8: #{tpu_custom_call.1} parent=1 // loop_exit
      _
    %7065 = vsyncpa [#allocation3], 1
    %s7066 = scalar_lea.sflag [#allocation3], 1
    %7067 = vsyncpa %s7066, 1
    %7068 = vsyncpa [#allocation6], 1
    %7069 = vsyncpa [#allocation9], 1
    %7070 = vsyncpa [#allocation12], 1
    %7071 = vsyncpa [#allocation4], 1
    %s7072 = scalar_lea.sflag [#allocation4], 1
    %7073 = vsyncpa %s7072, 1

</llo_original>
